<compile_context>
chip_gen: v7x
topology: tpu7x:2x2x1
jax: 0.10.0
libtpu: 0.0.40
codegen_flags: <defaults>
</compile_context>

<pallas_src>
import functools

import jax
import jax.numpy as jnp
import numpy as np
from jax.experimental import pallas as pl
from jax.experimental.pallas import tpu as pltpu


# ----------------------------- math helpers -----------------------------
def _mish_ref(x):
    # mish(x) = x * tanh(softplus(x)); numerically-stable softplus (pure JAX).
    sp = jnp.maximum(x, 0.0) + jnp.log1p(jnp.exp(-jnp.abs(x)))
    return x * jnp.tanh(sp)


def _mish_kernel(x):
    # In-kernel mish: with t = exp(x), tanh(softplus(x)) = t(t+2)/(t(t+2)+2).
    # One EUP exp + one approx EUP reciprocal instead of exp + log1p + tanh.
    t = jnp.exp(jnp.minimum(x, 20.0))
    u = t * (t + 2.0)
    y = x * (u * pl.reciprocal(u + 2.0, approx=True))
    return jnp.where(x > 20.0, x, y)   # mish(x) -> x for large x


# ----------------------------- Pallas kernel -----------------------------
def _edgeconv_kernel(diff_ref, ctr_ref, w1d_ref, w1c_ref, b1_ref, w2_ref, b2_ref,
                     max_ref, sum_ref, *, k, n_valid, needs_mask):
    # diff_ref block: (1, k, C, tile_n) bf16 — (neighbor - center) features.
    # ctr_ref  block: (1, C, tile_n)    bf16 — center features.
    tile_n = diff_ref.shape[-1]
    w1d = w1d_ref[...]                                  # (mid, C) bf16
    w1c = w1c_ref[...]                                  # (mid, C) bf16
    w2 = w2_ref[...]                                    # (out, mid) bf16
    out_c = w2.shape[0]

    # Center contribution of conv1 (+ folded-BN bias) — once per tile, not per j.
    h_ctr = jnp.dot(w1c, ctr_ref[0],
                    preferred_element_type=jnp.float32) + b1_ref[...]   # (mid, tile_n)
    # Hoist the conv2 bias broadcast out of the neighbor loop (no CSE in-loop).
    b2 = jnp.broadcast_to(b2_ref[...], (out_c, tile_n))                 # (out, tile_n)

    acc_max = None
    acc_sum = None
    for j in range(k):                                  # static unroll over neighbors
        d_j = diff_ref[0, j]                            # (C, tile_n) bf16, contiguous slab
        # conv1 (1x1 == matmul, BN pre-folded) -> Mish   (bf16 MXU, f32 acc)
        h1 = jnp.dot(w1d, d_j, preferred_element_type=jnp.float32) + h_ctr
        h1 = _mish_kernel(h1)                           # f32 VPU/EUP math
        # conv2 -> Mish
        h2 = jnp.dot(w2, h1.astype(jnp.bfloat16),
                     preferred_element_type=jnp.float32) + b2
        h2 = _mish_kernel(h2)                           # (out, tile_n) f32
        acc_max = h2 if acc_max is None else jnp.maximum(acc_max, h2)
        acc_sum = h2 if acc_sum is None else acc_sum + h2

    # max over k, already in (C_out, N-tile) layout -> lane-dense store.
    max_ref[0] = acc_max.astype(max_ref.dtype)

    # Per-batch channel sum for the SE squeeze, accumulated across point tiles
    # (sum_ref block is resident across the "arbitrary" tile axis).  Mask out
    # padded point columns so the SE mean stays exact for arbitrary N.
    if needs_mask:
        col = (pl.program_id(1) * tile_n
               + jax.lax.broadcasted_iota(jnp.int32, (1, tile_n), 1))
        acc_sum = jnp.where(col < n_valid, acc_sum, 0.0)

    @pl.when(pl.program_id(1) == 0)
    def _init():
        sum_ref[...] = jnp.zeros_like(sum_ref)
    sum_ref[...] += jnp.sum(acc_sum, axis=1, keepdims=True)[None]


def edgeconv_fused(diff, ctr, w1d, w1c, b1c, w2t, b2c, *, k, n_valid, tile_n):
    """diff: (B, k, C, Npad) bf16, ctr: (B, C, Npad) bf16.
    Returns max (B, C_out, Npad) f32, sum (B, C_out, 1) f32."""
    B, _, C, n_pad = diff.shape
    mid, out = w1d.shape[0], w2t.shape[0]
    assert n_pad % tile_n == 0
    n_tiles = n_pad // tile_n

    kernel = functools.partial(_edgeconv_kernel, k=k, n_valid=n_valid,
                               needs_mask=(n_pad != n_valid))
    return pl.pallas_call(
        kernel,
        out_shape=(jax.ShapeDtypeStruct((B, out, n_pad), jnp.float32),
                   jax.ShapeDtypeStruct((B, out, 1), jnp.float32)),
        grid=(B, n_tiles),
        in_specs=[
            pl.BlockSpec((1, k, C, tile_n), lambda b, t: (b, 0, 0, t)),
            pl.BlockSpec((1, C, tile_n), lambda b, t: (b, 0, t)),
            pl.BlockSpec((mid, C), lambda b, t: (0, 0)),
            pl.BlockSpec((mid, C), lambda b, t: (0, 0)),
            pl.BlockSpec((mid, 1), lambda b, t: (0, 0)),
            pl.BlockSpec((out, mid), lambda b, t: (0, 0)),
            pl.BlockSpec((out, 1), lambda b, t: (0, 0)),
        ],
        out_specs=(
            pl.BlockSpec((1, out, tile_n), lambda b, t: (b, 0, t)),
            pl.BlockSpec((1, out, 1), lambda b, t: (b, 0, 0)),
        ),
        compiler_params=pltpu.CompilerParams(
            dimension_semantics=("parallel", "arbitrary")),
    )(diff, ctr, w1d, w1c, b1c, w2t, b2c)


# ------------------------- graph feature (JAX glue) -------------------------
def get_graph_feature_parts(x, pos, k):
    """x: (B, C, N), pos: (B, 3, N).
    Returns diff = (nbr - ctr) as (B, k, C, N) f32 and dist_sum (B, N) f32.
    The full edge feature is edge = concat([diff, ctr], channel-axis)."""
    B, C, N = x.shape
    p = jnp.transpose(pos, (0, 2, 1))                                  # (B, N, 3)
    sq = jnp.sum(p * p, axis=-1)                                       # (B, N)
    d2 = sq[:, :, None] - 2.0 * jnp.einsum("bnd,bmd->bnm", p, p) + sq[:, None, :]
    d2 = jnp.maximum(d2, 0.0)                                          # (B, N, N)
    _, idx = jax.lax.top_k(-d2, k)                                     # (B, N, k)

    # Gather neighbor features directly into (B, k, C, N) — no big transpose.
    idx_t = jnp.transpose(idx, (0, 2, 1))                              # (B, k, N)
    nbr = jnp.take_along_axis(x[:, None, :, :], idx_t[:, :, None, :], axis=3)
    diff = nbr - x[:, None, :, :]                                      # (B, k, C, N)

    d_sel = jnp.take_along_axis(d2, idx, axis=-1)                      # (B, N, k)
    dist_sum = jnp.sum(d_sel, axis=-1)                                 # (B, N)
    return diff.astype(jnp.float32), dist_sum.astype(jnp.float32)


# ------------------------------- full module -------------------------------
def _fold_bn(w, b, s, t):
    # (x @ w + b) * s + t  ==  x @ (w * s) + (b * s + t)   [eval-mode BN affine]
    return w * s, b * s + t


def _choose_tiling(n):
    # Whole point set in one tile when small; otherwise 128-aligned chunks so
    # each grid step's working set stays small (v7x 64 MiB VMEM friendly) and
    # the grid pipelines neighbor-feature DMA against MXU compute.
    tile = 512
    if n <= tile:
        return n, n
    n_pad = -(-n // tile) * tile
    return n_pad, tile


def edgeconv_forward(x, pos, params, *, k, tile_n=None):
    B, C, N = x.shape
    diff, dist_sum = get_graph_feature_parts(x, pos, k)                # (B, k, C, N)

    # Fold eval-mode BN into the 1x1-conv weights; transpose to (C_out, C_in)
    # for the channels-on-sublanes kernel layout; split conv1's weight into the
    # (nbr - ctr) half and the ctr half.  bf16 weights, f32 biases.
    w1f, b1f = _fold_bn(params["w1"], params["b1"], params["s1"], params["t1"])
    w2f, b2f = _fold_bn(params["w2"], params["b2"], params["s2"], params["t2"])
    w1t = w1f.T                                                        # (mid, 2C)
    w1d = w1t[:, :C].astype(jnp.bfloat16)                              # acts on nbr-ctr
    w1c = w1t[:, C:].astype(jnp.bfloat16)                              # acts on ctr
    b1c = b1f.T.astype(jnp.float32)                                    # (mid, 1)
    w2t = w2f.T.astype(jnp.bfloat16)                                   # (out, mid)
    b2c = b2f.T.astype(jnp.float32)                                    # (out, 1)

    if tile_n is None:
        n_pad, tn = _choose_tiling(N)
    else:
        tn = tile_n
        n_pad = -(-N // tn) * tn
    pad = n_pad - N

    diff_b = diff.astype(jnp.bfloat16)
    ctr_b = x.astype(jnp.bfloat16)
    if pad:
        diff_b = jnp.pad(diff_b, ((0, 0), (0, 0), (0, 0), (0, pad)))
        ctr_b = jnp.pad(ctr_b, ((0, 0), (0, 0), (0, pad)))

    out_max, out_sum = edgeconv_fused(diff_b, ctr_b, w1d, w1c, b1c, w2t, b2c,
                                      k=k, n_valid=N, tile_n=tn)
    if pad:
        out_max = out_max[:, :, :N]
    # out_max: (B, C_out, N)   out_sum: (B, C_out, 1)

    # SE block (tiny per-batch per-channel scalars). Sigmoid gate > 0 commutes
    # with the max over k, so scaling after the in-kernel max is exact.
    se_mean = out_sum[:, :, 0] / float(k * N)                          # (B, C_out)
    z = jax.nn.relu(se_mean @ params["wse1"] + params["bse1"])
    gate = jax.nn.sigmoid(z @ params["wse2"] + params["bse2"])         # (B, C_out)
    residual = out_max * gate[:, :, None]                              # (B, C_out, N)
    return residual, dist_sum


def edgeconv_reference(x, pos, params, *, k):
    """Pure-JAX f32 reference of the same forward pass."""
    B, C, N = x.shape
    diff, dist_sum = get_graph_feature_parts(x, pos, k)                # (B, k, C, N)
    ctr = jnp.broadcast_to(x[:, None, :, :], diff.shape)
    edge = jnp.concatenate([diff, ctr], axis=2)                        # (B, k, 2C, N)
    e_rows = jnp.transpose(edge, (0, 1, 3, 2)).reshape(B, k * N, 2 * C)
    hp = jax.lax.Precision.HIGHEST
    h1 = _mish_ref((jnp.einsum("bpc,cm->bpm", e_rows, params["w1"], precision=hp)
                    + params["b1"]) * params["s1"] + params["t1"])
    h2 = _mish_ref((jnp.einsum("bpm,mo->bpo", h1, params["w2"], precision=hp)
                    + params["b2"]) * params["s2"] + params["t2"])     # (B, k*N, out)
    se_mean = jnp.mean(h2, axis=1)
    z = jax.nn.relu(se_mean @ params["wse1"] + params["bse1"])
    gate = jax.nn.sigmoid(z @ params["wse2"] + params["bse2"])
    h2 = h2 * gate[:, None, :]
    res = jnp.max(h2.reshape(B, k, N, -1), axis=1)                     # (B, N, out)
    return jnp.transpose(res, (0, 2, 1)), dist_sum


# --------------------------------- driver ---------------------------------
def make_params(key, cin, mid, out, se_r=16):
    ks = jax.random.split(key, 12)
    eps = 1e-5

    def bn(kg, kb, dim):
        gamma = jax.random.uniform(kg, (dim,), minval=0.8, maxval=1.2)
        beta = 0.1 * jax.random.normal(kb, (dim,))
        # fresh running stats: mean=0, var=1 (eval-mode affine)
        scale = gamma / jnp.sqrt(1.0 + eps)
        shift = beta
        return scale.reshape(1, dim), shift.reshape(1, dim)

    s1, t1 = bn(ks[2], ks[3], mid)
    s2, t2 = bn(ks[6], ks[7], out)
    hidden = max(out // se_r, 1)
    return dict(
        w1=(jax.random.normal(ks[0], (cin, mid)) / np.sqrt(cin)).astype(jnp.float32),
        b1=(0.1 * jax.random.normal(ks[1], (1, mid))).astype(jnp.float32),
        s1=s1.astype(jnp.float32), t1=t1.astype(jnp.float32),
        w2=(jax.random.normal(ks[4], (mid, out)) / np.sqrt(mid)).astype(jnp.float32),
        b2=(0.1 * jax.random.normal(ks[5], (1, out))).astype(jnp.float32),
        s2=s2.astype(jnp.float32), t2=t2.astype(jnp.float32),
        wse1=(jax.random.normal(ks[8], (out, hidden)) / np.sqrt(out)).astype(jnp.float32),
        bse1=jnp.zeros((hidden,), jnp.float32),
        wse2=(jax.random.normal(ks[9], (hidden, out)) / np.sqrt(hidden)).astype(jnp.float32),
        bse2=jnp.zeros((out,), jnp.float32),
    )


if __name__ == "__main__":
    B, C_FEAT, N, K = 2, 4, 16, 8           # batch, feature channels, points, neighbors
    CIN, MID, OUT = 2 * C_FEAT, 64, 64      # EdgeConv(in_dims=2*C, mid_dims=64)

    key = jax.random.PRNGKey(0)
    kx, kp, kparams = jax.random.split(key, 3)
    x = jax.random.normal(kx, (B, C_FEAT, N), dtype=jnp.float32)   # NCW point features
    pos = jax.random.normal(kp, (B, 3, N), dtype=jnp.float32)      # NCW point coords
    params = make_params(kparams, CIN, MID, OUT)

    fwd = jax.jit(functools.partial(edgeconv_forward, k=K))
    residual, dist_sum = fwd(x, pos, params)
    residual = jax.block_until_ready(residual)
    dist_sum = jax.block_until_ready(dist_sum)

    ref_res, ref_dist = edgeconv_reference(x, pos, params, k=K)
    assert residual.shape == (B, OUT, N) and dist_sum.shape == (B, N)
    np.testing.assert_allclose(np.asarray(residual), np.asarray(ref_res),
                               rtol=2e-2, atol=2e-2)
    np.testing.assert_allclose(np.asarray(dist_sum), np.asarray(ref_dist),
                               rtol=2e-2, atol=2e-2)
    print("KERNEL_OK")
</pallas_src>

<mosaic_0001>
module attributes {stable_mosaic.version = 11 : i64} {
  func.func @_edgeconv_kernel(%arg0: i32, %arg1: i32, %arg2: memref<1x8x4x16xbf16, #tpu.memory_space<vmem>>, %arg3: memref<1x4x16xbf16, #tpu.memory_space<vmem>>, %arg4: memref<64x4xbf16, #tpu.memory_space<vmem>>, %arg5: memref<64x4xbf16, #tpu.memory_space<vmem>>, %arg6: memref<64x1xf32, #tpu.memory_space<vmem>>, %arg7: memref<64x64xbf16, #tpu.memory_space<vmem>>, %arg8: memref<64x1xf32, #tpu.memory_space<vmem>>, %arg9: memref<1x64x16xf32, #tpu.memory_space<vmem>>, %arg10: memref<1x64x1xf32, #tpu.memory_space<vmem>>) attributes {dimension_semantics = [#tpu.dimension_semantics<parallel>, #tpu.dimension_semantics<arbitrary>], iteration_bounds = array<i64: 2, 1>, scalar_prefetch = 0 : i64, scratch_operands = 0 : i64, tpu.core_type = #tpu.core_type<tc>, window_params = [{transform_indices = @transform_0, window_bounds = array<i64: 1, 8, 4, 16>}, {transform_indices = @transform_1, window_bounds = array<i64: 1, 4, 16>}, {pipeline_mode = #tpu.pipeline_mode<synchronous>, transform_indices = @transform_2, window_bounds = array<i64: 64, 4>}, {pipeline_mode = #tpu.pipeline_mode<synchronous>, transform_indices = @transform_3, window_bounds = array<i64: 64, 4>}, {pipeline_mode = #tpu.pipeline_mode<synchronous>, transform_indices = @transform_4, window_bounds = array<i64: 64, 1>}, {pipeline_mode = #tpu.pipeline_mode<synchronous>, transform_indices = @transform_5, window_bounds = array<i64: 64, 64>}, {pipeline_mode = #tpu.pipeline_mode<synchronous>, transform_indices = @transform_6, window_bounds = array<i64: 64, 1>}, {transform_indices = @transform_7, window_bounds = array<i64: 1, 64, 16>}, {transform_indices = @transform_8, window_bounds = array<i64: 1, 64, 1>}]} {
    %c0 = arith.constant 0 : index
    %c0_0 = arith.constant 0 : index
    %0 = vector.load %arg4[%c0, %c0_0] : memref<64x4xbf16, #tpu.memory_space<vmem>>, vector<64x4xbf16>
    %c0_1 = arith.constant 0 : index
    %c0_2 = arith.constant 0 : index
    %1 = vector.load %arg5[%c0_1, %c0_2] : memref<64x4xbf16, #tpu.memory_space<vmem>>, vector<64x4xbf16>
    %c0_3 = arith.constant 0 : index
    %c0_4 = arith.constant 0 : index
    %2 = vector.load %arg7[%c0_3, %c0_4] : memref<64x64xbf16, #tpu.memory_space<vmem>>, vector<64x64xbf16>
    %c0_5 = arith.constant 0 : index
    %c0_6 = arith.constant 0 : index
    %c0_7 = arith.constant 0 : index
    %3 = vector.load %arg3[%c0_5, %c0_6, %c0_7] : memref<1x4x16xbf16, #tpu.memory_space<vmem>>, vector<1x4x16xbf16>
    %4 = vector.shape_cast %3 : vector<1x4x16xbf16> to vector<4x16xbf16>
    %cst = arith.constant dense<0.000000e+00> : vector<64x16xf32>
    %5 = tpu.matmul %1, %4, %cst {dimension_numbers = #tpu.dot_dimension_numbers<[1], [0], [0], [1], [0, 0, 1, 1], [], []>} : vector<64x4xbf16>, vector<4x16xbf16>, vector<64x16xf32> -> vector<64x16xf32>
    %c0_8 = arith.constant 0 : index
    %c0_9 = arith.constant 0 : index
    %6 = vector.load %arg6[%c0_8, %c0_9] : memref<64x1xf32, #tpu.memory_space<vmem>>, vector<64x1xf32>
    %7 = vector.broadcast %6 : vector<64x1xf32> to vector<64x16xf32>
    %8 = arith.addf %5, %7 : vector<64x16xf32>
    %c0_10 = arith.constant 0 : index
    %c0_11 = arith.constant 0 : index
    %9 = vector.load %arg8[%c0_10, %c0_11] : memref<64x1xf32, #tpu.memory_space<vmem>>, vector<64x1xf32>
    %10 = vector.shape_cast %9 : vector<64x1xf32> to vector<64x1xf32>
    %11 = vector.broadcast %10 : vector<64x1xf32> to vector<64x16xf32>
    %c0_12 = arith.constant 0 : index
    %c0_13 = arith.constant 0 : index
    %c0_14 = arith.constant 0 : index
    %c0_15 = arith.constant 0 : index
    %12 = vector.load %arg2[%c0_12, %c0_13, %c0_14, %c0_15] : memref<1x8x4x16xbf16, #tpu.memory_space<vmem>>, vector<1x1x4x16xbf16>
    %13 = vector.shape_cast %12 : vector<1x1x4x16xbf16> to vector<4x16xbf16>
    %cst_16 = arith.constant dense<0.000000e+00> : vector<64x16xf32>
    %14 = tpu.matmul %0, %13, %cst_16 {dimension_numbers = #tpu.dot_dimension_numbers<[1], [0], [0], [1], [0, 0, 1, 1], [], []>} : vector<64x4xbf16>, vector<4x16xbf16>, vector<64x16xf32> -> vector<64x16xf32>
    %15 = arith.addf %14, %8 : vector<64x16xf32>
    %cst_17 = arith.constant 2.000000e+01 : f32
    %16 = vector.broadcast %cst_17 : f32 to vector<64x16xf32>
    %17 = arith.minimumf %15, %16 : vector<64x16xf32>
    %18 = math.exp %17 : vector<64x16xf32>
    %cst_18 = arith.constant 2.000000e+00 : f32
    %19 = vector.broadcast %cst_18 : f32 to vector<64x16xf32>
    %20 = arith.addf %18, %19 : vector<64x16xf32>
    %21 = arith.mulf %18, %20 : vector<64x16xf32>
    %cst_19 = arith.constant 2.000000e+00 : f32
    %22 = vector.broadcast %cst_19 : f32 to vector<64x16xf32>
    %23 = arith.addf %21, %22 : vector<64x16xf32>
    %24 = tpu.reciprocal %23 {approx = true} : vector<64x16xf32> -> vector<64x16xf32>
    %25 = arith.mulf %21, %24 : vector<64x16xf32>
    %26 = arith.mulf %15, %25 : vector<64x16xf32>
    %cst_20 = arith.constant 2.000000e+01 : f32
    %27 = vector.broadcast %cst_20 : f32 to vector<64x16xf32>
    %28 = arith.cmpf ogt, %15, %27 : vector<64x16xf32>
    %29 = arith.select %28, %15, %26 : vector<64x16xi1>, vector<64x16xf32>
    %30 = arith.truncf %29 : vector<64x16xf32> to vector<64x16xbf16>
    %cst_21 = arith.constant dense<0.000000e+00> : vector<64x16xf32>
    %31 = tpu.matmul %2, %30, %cst_21 {dimension_numbers = #tpu.dot_dimension_numbers<[1], [0], [0], [1], [0, 0, 1, 1], [], []>} : vector<64x64xbf16>, vector<64x16xbf16>, vector<64x16xf32> -> vector<64x16xf32>
    %32 = arith.addf %31, %11 : vector<64x16xf32>
    %cst_22 = arith.constant 2.000000e+01 : f32
    %33 = vector.broadcast %cst_22 : f32 to vector<64x16xf32>
    %34 = arith.minimumf %32, %33 : vector<64x16xf32>
    %35 = math.exp %34 : vector<64x16xf32>
    %cst_23 = arith.constant 2.000000e+00 : f32
    %36 = vector.broadcast %cst_23 : f32 to vector<64x16xf32>
    %37 = arith.addf %35, %36 : vector<64x16xf32>
    %38 = arith.mulf %35, %37 : vector<64x16xf32>
    %cst_24 = arith.constant 2.000000e+00 : f32
    %39 = vector.broadcast %cst_24 : f32 to vector<64x16xf32>
    %40 = arith.addf %38, %39 : vector<64x16xf32>
    %41 = tpu.reciprocal %40 {approx = true} : vector<64x16xf32> -> vector<64x16xf32>
    %42 = arith.mulf %38, %41 : vector<64x16xf32>
    %43 = arith.mulf %32, %42 : vector<64x16xf32>
    %cst_25 = arith.constant 2.000000e+01 : f32
    %44 = vector.broadcast %cst_25 : f32 to vector<64x16xf32>
    %45 = arith.cmpf ogt, %32, %44 : vector<64x16xf32>
    %46 = arith.select %45, %32, %43 : vector<64x16xi1>, vector<64x16xf32>
    %c0_26 = arith.constant 0 : index
    %c1 = arith.constant 1 : index
    %c0_27 = arith.constant 0 : index
    %c0_28 = arith.constant 0 : index
    %47 = vector.load %arg2[%c0_26, %c1, %c0_27, %c0_28] : memref<1x8x4x16xbf16, #tpu.memory_space<vmem>>, vector<1x1x4x16xbf16>
    %48 = vector.shape_cast %47 : vector<1x1x4x16xbf16> to vector<4x16xbf16>
    %cst_29 = arith.constant dense<0.000000e+00> : vector<64x16xf32>
    %49 = tpu.matmul %0, %48, %cst_29 {dimension_numbers = #tpu.dot_dimension_numbers<[1], [0], [0], [1], [0, 0, 1, 1], [], []>} : vector<64x4xbf16>, vector<4x16xbf16>, vector<64x16xf32> -> vector<64x16xf32>
    %50 = arith.addf %49, %8 : vector<64x16xf32>
    %cst_30 = arith.constant 2.000000e+01 : f32
    %51 = vector.broadcast %cst_30 : f32 to vector<64x16xf32>
    %52 = arith.minimumf %50, %51 : vector<64x16xf32>
    %53 = math.exp %52 : vector<64x16xf32>
    %cst_31 = arith.constant 2.000000e+00 : f32
    %54 = vector.broadcast %cst_31 : f32 to vector<64x16xf32>
    %55 = arith.addf %53, %54 : vector<64x16xf32>
    %56 = arith.mulf %53, %55 : vector<64x16xf32>
    %cst_32 = arith.constant 2.000000e+00 : f32
    %57 = vector.broadcast %cst_32 : f32 to vector<64x16xf32>
    %58 = arith.addf %56, %57 : vector<64x16xf32>
    %59 = tpu.reciprocal %58 {approx = true} : vector<64x16xf32> -> vector<64x16xf32>
    %60 = arith.mulf %56, %59 : vector<64x16xf32>
    %61 = arith.mulf %50, %60 : vector<64x16xf32>
    %cst_33 = arith.constant 2.000000e+01 : f32
    %62 = vector.broadcast %cst_33 : f32 to vector<64x16xf32>
    %63 = arith.cmpf ogt, %50, %62 : vector<64x16xf32>
    %64 = arith.select %63, %50, %61 : vector<64x16xi1>, vector<64x16xf32>
    %65 = arith.truncf %64 : vector<64x16xf32> to vector<64x16xbf16>
    %cst_34 = arith.constant dense<0.000000e+00> : vector<64x16xf32>
    %66 = tpu.matmul %2, %65, %cst_34 {dimension_numbers = #tpu.dot_dimension_numbers<[1], [0], [0], [1], [0, 0, 1, 1], [], []>} : vector<64x64xbf16>, vector<64x16xbf16>, vector<64x16xf32> -> vector<64x16xf32>
    %67 = arith.addf %66, %11 : vector<64x16xf32>
    %cst_35 = arith.constant 2.000000e+01 : f32
    %68 = vector.broadcast %cst_35 : f32 to vector<64x16xf32>
    %69 = arith.minimumf %67, %68 : vector<64x16xf32>
    %70 = math.exp %69 : vector<64x16xf32>
    %cst_36 = arith.constant 2.000000e+00 : f32
    %71 = vector.broadcast %cst_36 : f32 to vector<64x16xf32>
    %72 = arith.addf %70, %71 : vector<64x16xf32>
    %73 = arith.mulf %70, %72 : vector<64x16xf32>
    %cst_37 = arith.constant 2.000000e+00 : f32
    %74 = vector.broadcast %cst_37 : f32 to vector<64x16xf32>
    %75 = arith.addf %73, %74 : vector<64x16xf32>
    %76 = tpu.reciprocal %75 {approx = true} : vector<64x16xf32> -> vector<64x16xf32>
    %77 = arith.mulf %73, %76 : vector<64x16xf32>
    %78 = arith.mulf %67, %77 : vector<64x16xf32>
    %cst_38 = arith.constant 2.000000e+01 : f32
    %79 = vector.broadcast %cst_38 : f32 to vector<64x16xf32>
    %80 = arith.cmpf ogt, %67, %79 : vector<64x16xf32>
    %81 = arith.select %80, %67, %78 : vector<64x16xi1>, vector<64x16xf32>
    %82 = arith.maximumf %46, %81 : vector<64x16xf32>
    %83 = arith.addf %46, %81 : vector<64x16xf32>
    %c0_39 = arith.constant 0 : index
    %c2 = arith.constant 2 : index
    %c0_40 = arith.constant 0 : index
    %c0_41 = arith.constant 0 : index
    %84 = vector.load %arg2[%c0_39, %c2, %c0_40, %c0_41] : memref<1x8x4x16xbf16, #tpu.memory_space<vmem>>, vector<1x1x4x16xbf16>
    %85 = vector.shape_cast %84 : vector<1x1x4x16xbf16> to vector<4x16xbf16>
    %cst_42 = arith.constant dense<0.000000e+00> : vector<64x16xf32>
    %86 = tpu.matmul %0, %85, %cst_42 {dimension_numbers = #tpu.dot_dimension_numbers<[1], [0], [0], [1], [0, 0, 1, 1], [], []>} : vector<64x4xbf16>, vector<4x16xbf16>, vector<64x16xf32> -> vector<64x16xf32>
    %87 = arith.addf %86, %8 : vector<64x16xf32>
    %cst_43 = arith.constant 2.000000e+01 : f32
    %88 = vector.broadcast %cst_43 : f32 to vector<64x16xf32>
    %89 = arith.minimumf %87, %88 : vector<64x16xf32>
    %90 = math.exp %89 : vector<64x16xf32>
    %cst_44 = arith.constant 2.000000e+00 : f32
    %91 = vector.broadcast %cst_44 : f32 to vector<64x16xf32>
    %92 = arith.addf %90, %91 : vector<64x16xf32>
    %93 = arith.mulf %90, %92 : vector<64x16xf32>
    %cst_45 = arith.constant 2.000000e+00 : f32
    %94 = vector.broadcast %cst_45 : f32 to vector<64x16xf32>
    %95 = arith.addf %93, %94 : vector<64x16xf32>
    %96 = tpu.reciprocal %95 {approx = true} : vector<64x16xf32> -> vector<64x16xf32>
    %97 = arith.mulf %93, %96 : vector<64x16xf32>
    %98 = arith.mulf %87, %97 : vector<64x16xf32>
    %cst_46 = arith.constant 2.000000e+01 : f32
    %99 = vector.broadcast %cst_46 : f32 to vector<64x16xf32>
    %100 = arith.cmpf ogt, %87, %99 : vector<64x16xf32>
    %101 = arith.select %100, %87, %98 : vector<64x16xi1>, vector<64x16xf32>
    %102 = arith.truncf %101 : vector<64x16xf32> to vector<64x16xbf16>
    %cst_47 = arith.constant dense<0.000000e+00> : vector<64x16xf32>
    %103 = tpu.matmul %2, %102, %cst_47 {dimension_numbers = #tpu.dot_dimension_numbers<[1], [0], [0], [1], [0, 0, 1, 1], [], []>} : vector<64x64xbf16>, vector<64x16xbf16>, vector<64x16xf32> -> vector<64x16xf32>
    %104 = arith.addf %103, %11 : vector<64x16xf32>
    %cst_48 = arith.constant 2.000000e+01 : f32
    %105 = vector.broadcast %cst_48 : f32 to vector<64x16xf32>
    %106 = arith.minimumf %104, %105 : vector<64x16xf32>
    %107 = math.exp %106 : vector<64x16xf32>
    %cst_49 = arith.constant 2.000000e+00 : f32
    %108 = vector.broadcast %cst_49 : f32 to vector<64x16xf32>
    %109 = arith.addf %107, %108 : vector<64x16xf32>
    %110 = arith.mulf %107, %109 : vector<64x16xf32>
    %cst_50 = arith.constant 2.000000e+00 : f32
    %111 = vector.broadcast %cst_50 : f32 to vector<64x16xf32>
    %112 = arith.addf %110, %111 : vector<64x16xf32>
    %113 = tpu.reciprocal %112 {approx = true} : vector<64x16xf32> -> vector<64x16xf32>
    %114 = arith.mulf %110, %113 : vector<64x16xf32>
    %115 = arith.mulf %104, %114 : vector<64x16xf32>
    %cst_51 = arith.constant 2.000000e+01 : f32
    %116 = vector.broadcast %cst_51 : f32 to vector<64x16xf32>
    %117 = arith.cmpf ogt, %104, %116 : vector<64x16xf32>
    %118 = arith.select %117, %104, %115 : vector<64x16xi1>, vector<64x16xf32>
    %119 = arith.maximumf %82, %118 : vector<64x16xf32>
    %120 = arith.addf %83, %118 : vector<64x16xf32>
    %c0_52 = arith.constant 0 : index
    %c3 = arith.constant 3 : index
    %c0_53 = arith.constant 0 : index
    %c0_54 = arith.constant 0 : index
    %121 = vector.load %arg2[%c0_52, %c3, %c0_53, %c0_54] : memref<1x8x4x16xbf16, #tpu.memory_space<vmem>>, vector<1x1x4x16xbf16>
    %122 = vector.shape_cast %121 : vector<1x1x4x16xbf16> to vector<4x16xbf16>
    %cst_55 = arith.constant dense<0.000000e+00> : vector<64x16xf32>
    %123 = tpu.matmul %0, %122, %cst_55 {dimension_numbers = #tpu.dot_dimension_numbers<[1], [0], [0], [1], [0, 0, 1, 1], [], []>} : vector<64x4xbf16>, vector<4x16xbf16>, vector<64x16xf32> -> vector<64x16xf32>
    %124 = arith.addf %123, %8 : vector<64x16xf32>
    %cst_56 = arith.constant 2.000000e+01 : f32
    %125 = vector.broadcast %cst_56 : f32 to vector<64x16xf32>
    %126 = arith.minimumf %124, %125 : vector<64x16xf32>
    %127 = math.exp %126 : vector<64x16xf32>
    %cst_57 = arith.constant 2.000000e+00 : f32
    %128 = vector.broadcast %cst_57 : f32 to vector<64x16xf32>
    %129 = arith.addf %127, %128 : vector<64x16xf32>
    %130 = arith.mulf %127, %129 : vector<64x16xf32>
    %cst_58 = arith.constant 2.000000e+00 : f32
    %131 = vector.broadcast %cst_58 : f32 to vector<64x16xf32>
    %132 = arith.addf %130, %131 : vector<64x16xf32>
    %133 = tpu.reciprocal %132 {approx = true} : vector<64x16xf32> -> vector<64x16xf32>
    %134 = arith.mulf %130, %133 : vector<64x16xf32>
    %135 = arith.mulf %124, %134 : vector<64x16xf32>
    %cst_59 = arith.constant 2.000000e+01 : f32
    %136 = vector.broadcast %cst_59 : f32 to vector<64x16xf32>
    %137 = arith.cmpf ogt, %124, %136 : vector<64x16xf32>
    %138 = arith.select %137, %124, %135 : vector<64x16xi1>, vector<64x16xf32>
    %139 = arith.truncf %138 : vector<64x16xf32> to vector<64x16xbf16>
    %cst_60 = arith.constant dense<0.000000e+00> : vector<64x16xf32>
    %140 = tpu.matmul %2, %139, %cst_60 {dimension_numbers = #tpu.dot_dimension_numbers<[1], [0], [0], [1], [0, 0, 1, 1], [], []>} : vector<64x64xbf16>, vector<64x16xbf16>, vector<64x16xf32> -> vector<64x16xf32>
    %141 = arith.addf %140, %11 : vector<64x16xf32>
    %cst_61 = arith.constant 2.000000e+01 : f32
    %142 = vector.broadcast %cst_61 : f32 to vector<64x16xf32>
    %143 = arith.minimumf %141, %142 : vector<64x16xf32>
    %144 = math.exp %143 : vector<64x16xf32>
    %cst_62 = arith.constant 2.000000e+00 : f32
    %145 = vector.broadcast %cst_62 : f32 to vector<64x16xf32>
    %146 = arith.addf %144, %145 : vector<64x16xf32>
    %147 = arith.mulf %144, %146 : vector<64x16xf32>
    %cst_63 = arith.constant 2.000000e+00 : f32
    %148 = vector.broadcast %cst_63 : f32 to vector<64x16xf32>
    %149 = arith.addf %147, %148 : vector<64x16xf32>
    %150 = tpu.reciprocal %149 {approx = true} : vector<64x16xf32> -> vector<64x16xf32>
    %151 = arith.mulf %147, %150 : vector<64x16xf32>
    %152 = arith.mulf %141, %151 : vector<64x16xf32>
    %cst_64 = arith.constant 2.000000e+01 : f32
    %153 = vector.broadcast %cst_64 : f32 to vector<64x16xf32>
    %154 = arith.cmpf ogt, %141, %153 : vector<64x16xf32>
    %155 = arith.select %154, %141, %152 : vector<64x16xi1>, vector<64x16xf32>
    %156 = arith.maximumf %119, %155 : vector<64x16xf32>
    %157 = arith.addf %120, %155 : vector<64x16xf32>
    %c0_65 = arith.constant 0 : index
    %c4 = arith.constant 4 : index
    %c0_66 = arith.constant 0 : index
    %c0_67 = arith.constant 0 : index
    %158 = vector.load %arg2[%c0_65, %c4, %c0_66, %c0_67] : memref<1x8x4x16xbf16, #tpu.memory_space<vmem>>, vector<1x1x4x16xbf16>
    %159 = vector.shape_cast %158 : vector<1x1x4x16xbf16> to vector<4x16xbf16>
    %cst_68 = arith.constant dense<0.000000e+00> : vector<64x16xf32>
    %160 = tpu.matmul %0, %159, %cst_68 {dimension_numbers = #tpu.dot_dimension_numbers<[1], [0], [0], [1], [0, 0, 1, 1], [], []>} : vector<64x4xbf16>, vector<4x16xbf16>, vector<64x16xf32> -> vector<64x16xf32>
    %161 = arith.addf %160, %8 : vector<64x16xf32>
    %cst_69 = arith.constant 2.000000e+01 : f32
    %162 = vector.broadcast %cst_69 : f32 to vector<64x16xf32>
    %163 = arith.minimumf %161, %162 : vector<64x16xf32>
    %164 = math.exp %163 : vector<64x16xf32>
    %cst_70 = arith.constant 2.000000e+00 : f32
    %165 = vector.broadcast %cst_70 : f32 to vector<64x16xf32>
    %166 = arith.addf %164, %165 : vector<64x16xf32>
    %167 = arith.mulf %164, %166 : vector<64x16xf32>
    %cst_71 = arith.constant 2.000000e+00 : f32
    %168 = vector.broadcast %cst_71 : f32 to vector<64x16xf32>
    %169 = arith.addf %167, %168 : vector<64x16xf32>
    %170 = tpu.reciprocal %169 {approx = true} : vector<64x16xf32> -> vector<64x16xf32>
    %171 = arith.mulf %167, %170 : vector<64x16xf32>
    %172 = arith.mulf %161, %171 : vector<64x16xf32>
    %cst_72 = arith.constant 2.000000e+01 : f32
    %173 = vector.broadcast %cst_72 : f32 to vector<64x16xf32>
    %174 = arith.cmpf ogt, %161, %173 : vector<64x16xf32>
    %175 = arith.select %174, %161, %172 : vector<64x16xi1>, vector<64x16xf32>
    %176 = arith.truncf %175 : vector<64x16xf32> to vector<64x16xbf16>
    %cst_73 = arith.constant dense<0.000000e+00> : vector<64x16xf32>
    %177 = tpu.matmul %2, %176, %cst_73 {dimension_numbers = #tpu.dot_dimension_numbers<[1], [0], [0], [1], [0, 0, 1, 1], [], []>} : vector<64x64xbf16>, vector<64x16xbf16>, vector<64x16xf32> -> vector<64x16xf32>
    %178 = arith.addf %177, %11 : vector<64x16xf32>
    %cst_74 = arith.constant 2.000000e+01 : f32
    %179 = vector.broadcast %cst_74 : f32 to vector<64x16xf32>
    %180 = arith.minimumf %178, %179 : vector<64x16xf32>
    %181 = math.exp %180 : vector<64x16xf32>
    %cst_75 = arith.constant 2.000000e+00 : f32
    %182 = vector.broadcast %cst_75 : f32 to vector<64x16xf32>
    %183 = arith.addf %181, %182 : vector<64x16xf32>
    %184 = arith.mulf %181, %183 : vector<64x16xf32>
    %cst_76 = arith.constant 2.000000e+00 : f32
    %185 = vector.broadcast %cst_76 : f32 to vector<64x16xf32>
    %186 = arith.addf %184, %185 : vector<64x16xf32>
    %187 = tpu.reciprocal %186 {approx = true} : vector<64x16xf32> -> vector<64x16xf32>
    %188 = arith.mulf %184, %187 : vector<64x16xf32>
    %189 = arith.mulf %178, %188 : vector<64x16xf32>
    %cst_77 = arith.constant 2.000000e+01 : f32
    %190 = vector.broadcast %cst_77 : f32 to vector<64x16xf32>
    %191 = arith.cmpf ogt, %178, %190 : vector<64x16xf32>
    %192 = arith.select %191, %178, %189 : vector<64x16xi1>, vector<64x16xf32>
    %193 = arith.maximumf %156, %192 : vector<64x16xf32>
    %194 = arith.addf %157, %192 : vector<64x16xf32>
    %c0_78 = arith.constant 0 : index
    %c5 = arith.constant 5 : index
    %c0_79 = arith.constant 0 : index
    %c0_80 = arith.constant 0 : index
    %195 = vector.load %arg2[%c0_78, %c5, %c0_79, %c0_80] : memref<1x8x4x16xbf16, #tpu.memory_space<vmem>>, vector<1x1x4x16xbf16>
    %196 = vector.shape_cast %195 : vector<1x1x4x16xbf16> to vector<4x16xbf16>
    %cst_81 = arith.constant dense<0.000000e+00> : vector<64x16xf32>
    %197 = tpu.matmul %0, %196, %cst_81 {dimension_numbers = #tpu.dot_dimension_numbers<[1], [0], [0], [1], [0, 0, 1, 1], [], []>} : vector<64x4xbf16>, vector<4x16xbf16>, vector<64x16xf32> -> vector<64x16xf32>
    %198 = arith.addf %197, %8 : vector<64x16xf32>
    %cst_82 = arith.constant 2.000000e+01 : f32
    %199 = vector.broadcast %cst_82 : f32 to vector<64x16xf32>
    %200 = arith.minimumf %198, %199 : vector<64x16xf32>
    %201 = math.exp %200 : vector<64x16xf32>
    %cst_83 = arith.constant 2.000000e+00 : f32
    %202 = vector.broadcast %cst_83 : f32 to vector<64x16xf32>
    %203 = arith.addf %201, %202 : vector<64x16xf32>
    %204 = arith.mulf %201, %203 : vector<64x16xf32>
    %cst_84 = arith.constant 2.000000e+00 : f32
    %205 = vector.broadcast %cst_84 : f32 to vector<64x16xf32>
    %206 = arith.addf %204, %205 : vector<64x16xf32>
    %207 = tpu.reciprocal %206 {approx = true} : vector<64x16xf32> -> vector<64x16xf32>
    %208 = arith.mulf %204, %207 : vector<64x16xf32>
    %209 = arith.mulf %198, %208 : vector<64x16xf32>
    %cst_85 = arith.constant 2.000000e+01 : f32
    %210 = vector.broadcast %cst_85 : f32 to vector<64x16xf32>
    %211 = arith.cmpf ogt, %198, %210 : vector<64x16xf32>
    %212 = arith.select %211, %198, %209 : vector<64x16xi1>, vector<64x16xf32>
    %213 = arith.truncf %212 : vector<64x16xf32> to vector<64x16xbf16>
    %cst_86 = arith.constant dense<0.000000e+00> : vector<64x16xf32>
    %214 = tpu.matmul %2, %213, %cst_86 {dimension_numbers = #tpu.dot_dimension_numbers<[1], [0], [0], [1], [0, 0, 1, 1], [], []>} : vector<64x64xbf16>, vector<64x16xbf16>, vector<64x16xf32> -> vector<64x16xf32>
    %215 = arith.addf %214, %11 : vector<64x16xf32>
    %cst_87 = arith.constant 2.000000e+01 : f32
    %216 = vector.broadcast %cst_87 : f32 to vector<64x16xf32>
    %217 = arith.minimumf %215, %216 : vector<64x16xf32>
    %218 = math.exp %217 : vector<64x16xf32>
    %cst_88 = arith.constant 2.000000e+00 : f32
    %219 = vector.broadcast %cst_88 : f32 to vector<64x16xf32>
    %220 = arith.addf %218, %219 : vector<64x16xf32>
    %221 = arith.mulf %218, %220 : vector<64x16xf32>
    %cst_89 = arith.constant 2.000000e+00 : f32
    %222 = vector.broadcast %cst_89 : f32 to vector<64x16xf32>
    %223 = arith.addf %221, %222 : vector<64x16xf32>
    %224 = tpu.reciprocal %223 {approx = true} : vector<64x16xf32> -> vector<64x16xf32>
    %225 = arith.mulf %221, %224 : vector<64x16xf32>
    %226 = arith.mulf %215, %225 : vector<64x16xf32>
    %cst_90 = arith.constant 2.000000e+01 : f32
    %227 = vector.broadcast %cst_90 : f32 to vector<64x16xf32>
    %228 = arith.cmpf ogt, %215, %227 : vector<64x16xf32>
    %229 = arith.select %228, %215, %226 : vector<64x16xi1>, vector<64x16xf32>
    %230 = arith.maximumf %193, %229 : vector<64x16xf32>
    %231 = arith.addf %194, %229 : vector<64x16xf32>
    %c0_91 = arith.constant 0 : index
    %c6 = arith.constant 6 : index
    %c0_92 = arith.constant 0 : index
    %c0_93 = arith.constant 0 : index
    %232 = vector.load %arg2[%c0_91, %c6, %c0_92, %c0_93] : memref<1x8x4x16xbf16, #tpu.memory_space<vmem>>, vector<1x1x4x16xbf16>
    %233 = vector.shape_cast %232 : vector<1x1x4x16xbf16> to vector<4x16xbf16>
    %cst_94 = arith.constant dense<0.000000e+00> : vector<64x16xf32>
    %234 = tpu.matmul %0, %233, %cst_94 {dimension_numbers = #tpu.dot_dimension_numbers<[1], [0], [0], [1], [0, 0, 1, 1], [], []>} : vector<64x4xbf16>, vector<4x16xbf16>, vector<64x16xf32> -> vector<64x16xf32>
    %235 = arith.addf %234, %8 : vector<64x16xf32>
    %cst_95 = arith.constant 2.000000e+01 : f32
    %236 = vector.broadcast %cst_95 : f32 to vector<64x16xf32>
    %237 = arith.minimumf %235, %236 : vector<64x16xf32>
    %238 = math.exp %237 : vector<64x16xf32>
    %cst_96 = arith.constant 2.000000e+00 : f32
    %239 = vector.broadcast %cst_96 : f32 to vector<64x16xf32>
    %240 = arith.addf %238, %239 : vector<64x16xf32>
    %241 = arith.mulf %238, %240 : vector<64x16xf32>
    %cst_97 = arith.constant 2.000000e+00 : f32
    %242 = vector.broadcast %cst_97 : f32 to vector<64x16xf32>
    %243 = arith.addf %241, %242 : vector<64x16xf32>
    %244 = tpu.reciprocal %243 {approx = true} : vector<64x16xf32> -> vector<64x16xf32>
    %245 = arith.mulf %241, %244 : vector<64x16xf32>
    %246 = arith.mulf %235, %245 : vector<64x16xf32>
    %cst_98 = arith.constant 2.000000e+01 : f32
    %247 = vector.broadcast %cst_98 : f32 to vector<64x16xf32>
    %248 = arith.cmpf ogt, %235, %247 : vector<64x16xf32>
    %249 = arith.select %248, %235, %246 : vector<64x16xi1>, vector<64x16xf32>
    %250 = arith.truncf %249 : vector<64x16xf32> to vector<64x16xbf16>
    %cst_99 = arith.constant dense<0.000000e+00> : vector<64x16xf32>
    %251 = tpu.matmul %2, %250, %cst_99 {dimension_numbers = #tpu.dot_dimension_numbers<[1], [0], [0], [1], [0, 0, 1, 1], [], []>} : vector<64x64xbf16>, vector<64x16xbf16>, vector<64x16xf32> -> vector<64x16xf32>
    %252 = arith.addf %251, %11 : vector<64x16xf32>
    %cst_100 = arith.constant 2.000000e+01 : f32
    %253 = vector.broadcast %cst_100 : f32 to vector<64x16xf32>
    %254 = arith.minimumf %252, %253 : vector<64x16xf32>
    %255 = math.exp %254 : vector<64x16xf32>
    %cst_101 = arith.constant 2.000000e+00 : f32
    %256 = vector.broadcast %cst_101 : f32 to vector<64x16xf32>
    %257 = arith.addf %255, %256 : vector<64x16xf32>
    %258 = arith.mulf %255, %257 : vector<64x16xf32>
    %cst_102 = arith.constant 2.000000e+00 : f32
    %259 = vector.broadcast %cst_102 : f32 to vector<64x16xf32>
    %260 = arith.addf %258, %259 : vector<64x16xf32>
    %261 = tpu.reciprocal %260 {approx = true} : vector<64x16xf32> -> vector<64x16xf32>
    %262 = arith.mulf %258, %261 : vector<64x16xf32>
    %263 = arith.mulf %252, %262 : vector<64x16xf32>
    %cst_103 = arith.constant 2.000000e+01 : f32
    %264 = vector.broadcast %cst_103 : f32 to vector<64x16xf32>
    %265 = arith.cmpf ogt, %252, %264 : vector<64x16xf32>
    %266 = arith.select %265, %252, %263 : vector<64x16xi1>, vector<64x16xf32>
    %267 = arith.maximumf %230, %266 : vector<64x16xf32>
    %268 = arith.addf %231, %266 : vector<64x16xf32>
    %c0_104 = arith.constant 0 : index
    %c7 = arith.constant 7 : index
    %c0_105 = arith.constant 0 : index
    %c0_106 = arith.constant 0 : index
    %269 = vector.load %arg2[%c0_104, %c7, %c0_105, %c0_106] : memref<1x8x4x16xbf16, #tpu.memory_space<vmem>>, vector<1x1x4x16xbf16>
    %270 = vector.shape_cast %269 : vector<1x1x4x16xbf16> to vector<4x16xbf16>
    %cst_107 = arith.constant dense<0.000000e+00> : vector<64x16xf32>
    %271 = tpu.matmul %0, %270, %cst_107 {dimension_numbers = #tpu.dot_dimension_numbers<[1], [0], [0], [1], [0, 0, 1, 1], [], []>} : vector<64x4xbf16>, vector<4x16xbf16>, vector<64x16xf32> -> vector<64x16xf32>
    %272 = arith.addf %271, %8 : vector<64x16xf32>
    %cst_108 = arith.constant 2.000000e+01 : f32
    %273 = vector.broadcast %cst_108 : f32 to vector<64x16xf32>
    %274 = arith.minimumf %272, %273 : vector<64x16xf32>
    %275 = math.exp %274 : vector<64x16xf32>
    %cst_109 = arith.constant 2.000000e+00 : f32
    %276 = vector.broadcast %cst_109 : f32 to vector<64x16xf32>
    %277 = arith.addf %275, %276 : vector<64x16xf32>
    %278 = arith.mulf %275, %277 : vector<64x16xf32>
    %cst_110 = arith.constant 2.000000e+00 : f32
    %279 = vector.broadcast %cst_110 : f32 to vector<64x16xf32>
    %280 = arith.addf %278, %279 : vector<64x16xf32>
    %281 = tpu.reciprocal %280 {approx = true} : vector<64x16xf32> -> vector<64x16xf32>
    %282 = arith.mulf %278, %281 : vector<64x16xf32>
    %283 = arith.mulf %272, %282 : vector<64x16xf32>
    %cst_111 = arith.constant 2.000000e+01 : f32
    %284 = vector.broadcast %cst_111 : f32 to vector<64x16xf32>
    %285 = arith.cmpf ogt, %272, %284 : vector<64x16xf32>
    %286 = arith.select %285, %272, %283 : vector<64x16xi1>, vector<64x16xf32>
    %287 = arith.truncf %286 : vector<64x16xf32> to vector<64x16xbf16>
    %cst_112 = arith.constant dense<0.000000e+00> : vector<64x16xf32>
    %288 = tpu.matmul %2, %287, %cst_112 {dimension_numbers = #tpu.dot_dimension_numbers<[1], [0], [0], [1], [0, 0, 1, 1], [], []>} : vector<64x64xbf16>, vector<64x16xbf16>, vector<64x16xf32> -> vector<64x16xf32>
    %289 = arith.addf %288, %11 : vector<64x16xf32>
    %cst_113 = arith.constant 2.000000e+01 : f32
    %290 = vector.broadcast %cst_113 : f32 to vector<64x16xf32>
    %291 = arith.minimumf %289, %290 : vector<64x16xf32>
    %292 = math.exp %291 : vector<64x16xf32>
    %cst_114 = arith.constant 2.000000e+00 : f32
    %293 = vector.broadcast %cst_114 : f32 to vector<64x16xf32>
    %294 = arith.addf %292, %293 : vector<64x16xf32>
    %295 = arith.mulf %292, %294 : vector<64x16xf32>
    %cst_115 = arith.constant 2.000000e+00 : f32
    %296 = vector.broadcast %cst_115 : f32 to vector<64x16xf32>
    %297 = arith.addf %295, %296 : vector<64x16xf32>
    %298 = tpu.reciprocal %297 {approx = true} : vector<64x16xf32> -> vector<64x16xf32>
    %299 = arith.mulf %295, %298 : vector<64x16xf32>
    %300 = arith.mulf %289, %299 : vector<64x16xf32>
    %cst_116 = arith.constant 2.000000e+01 : f32
    %301 = vector.broadcast %cst_116 : f32 to vector<64x16xf32>
    %302 = arith.cmpf ogt, %289, %301 : vector<64x16xf32>
    %303 = arith.select %302, %289, %300 : vector<64x16xi1>, vector<64x16xf32>
    %304 = arith.maximumf %267, %303 : vector<64x16xf32>
    %305 = arith.addf %268, %303 : vector<64x16xf32>
    %c0_117 = arith.constant 0 : index
    %c0_118 = arith.constant 0 : index
    %c0_119 = arith.constant 0 : index
    %306 = vector.load %arg9[%c0_117, %c0_118, %c0_119] : memref<1x64x16xf32, #tpu.memory_space<vmem>>, vector<1x64x16xf32>
    %307 = vector.shape_cast %306 : vector<1x64x16xf32> to vector<64x16xf32>
    %308 = vector.shape_cast %304 : vector<64x16xf32> to vector<1x64x16xf32>
    tpu.vector_store %arg9[%c0_117, %c0_118, %c0_119], %308 {strides = array<i32>} : memref<1x64x16xf32, #tpu.memory_space<vmem>>, vector<1x64x16xf32>,
    %c0_i32 = arith.constant 0 : i32
    %309 = arith.cmpi eq, %arg1, %c0_i32 : i32
    %310 = arith.extui %309 : i1 to i32
    %c0_i32_120 = arith.constant 0 : i32
    %311 = arith.cmpi ne, %310, %c0_i32_120 : i32
    scf.if %311 {
      %cst_128 = arith.constant 0.000000e+00 : f32
      %318 = vector.broadcast %cst_128 : f32 to vector<1x64x1xf32>
      %c0_129 = arith.constant 0 : index
      %c0_130 = arith.constant 0 : index
      %c0_131 = arith.constant 0 : index
      %319 = vector.load %arg10[%c0_129, %c0_130, %c0_131] : memref<1x64x1xf32, #tpu.memory_space<vmem>>, vector<1x64x1xf32>
      tpu.vector_store %arg10[%c0_129, %c0_130, %c0_131], %318 {strides = array<i32>} : memref<1x64x1xf32, #tpu.memory_space<vmem>>, vector<1x64x1xf32>,
    } else {
    }
    %c0_121 = arith.constant 0 : index
    %c0_122 = arith.constant 0 : index
    %c0_123 = arith.constant 0 : index
    %312 = vector.load %arg10[%c0_121, %c0_122, %c0_123] : memref<1x64x1xf32, #tpu.memory_space<vmem>>, vector<1x64x1xf32>
    %cst_124 = arith.constant dense<0.000000e+00> : vector<64xf32>
    %313 = vector.multi_reduction <add>, %305, %cst_124 [1] : vector<64x16xf32> to vector<64xf32>
    %314 = vector.shape_cast %313 : vector<64xf32> to vector<64x1xf32>
    %315 = vector.shape_cast %314 : vector<64x1xf32> to vector<1x64x1xf32>
    %316 = arith.addf %312, %315 : vector<1x64x1xf32>
    %c0_125 = arith.constant 0 : index
    %c0_126 = arith.constant 0 : index
    %c0_127 = arith.constant 0 : index
    %317 = vector.load %arg10[%c0_125, %c0_126, %c0_127] : memref<1x64x1xf32, #tpu.memory_space<vmem>>, vector<1x64x1xf32>
    tpu.vector_store %arg10[%c0_125, %c0_126, %c0_127], %316 {strides = array<i32>} : memref<1x64x1xf32, #tpu.memory_space<vmem>>, vector<1x64x1xf32>,
    return
  }
  func.func @transform_0(%arg0: i32, %arg1: i32) -> (i32, i32, i32, i32) {
    %c0_i32 = arith.constant 0 : i32
    %c0_i32_0 = arith.constant 0 : i32
    %c0_i32_1 = arith.constant 0 : i32
    return %arg0, %c0_i32, %c0_i32_0, %arg1 : i32, i32, i32, i32
  }
  func.func @transform_1(%arg0: i32, %arg1: i32) -> (i32, i32, i32) {
    %c0_i32 = arith.constant 0 : i32
    %c0_i32_0 = arith.constant 0 : i32
    return %arg0, %c0_i32, %arg1 : i32, i32, i32
  }
  func.func @transform_2(%arg0: i32, %arg1: i32) -> (i32, i32) {
    %c0_i32 = arith.constant 0 : i32
    %c0_i32_0 = arith.constant 0 : i32
    %c0_i32_1 = arith.constant 0 : i32
    return %c0_i32, %c0_i32_0 : i32, i32
  }
  func.func @transform_3(%arg0: i32, %arg1: i32) -> (i32, i32) {
    %c0_i32 = arith.constant 0 : i32
    %c0_i32_0 = arith.constant 0 : i32
    %c0_i32_1 = arith.constant 0 : i32
    return %c0_i32, %c0_i32_0 : i32, i32
  }
  func.func @transform_4(%arg0: i32, %arg1: i32) -> (i32, i32) {
    %c0_i32 = arith.constant 0 : i32
    %c0_i32_0 = arith.constant 0 : i32
    %c0_i32_1 = arith.constant 0 : i32
    return %c0_i32, %c0_i32_0 : i32, i32
  }
  func.func @transform_5(%arg0: i32, %arg1: i32) -> (i32, i32) {
    %c0_i32 = arith.constant 0 : i32
    %c0_i32_0 = arith.constant 0 : i32
    %c0_i32_1 = arith.constant 0 : i32
    return %c0_i32, %c0_i32_0 : i32, i32
  }
  func.func @transform_6(%arg0: i32, %arg1: i32) -> (i32, i32) {
    %c0_i32 = arith.constant 0 : i32
    %c0_i32_0 = arith.constant 0 : i32
    %c0_i32_1 = arith.constant 0 : i32
    return %c0_i32, %c0_i32_0 : i32, i32
  }
  func.func @transform_7(%arg0: i32, %arg1: i32) -> (i32, i32, i32) {
    %c0_i32 = arith.constant 0 : i32
    %c0_i32_0 = arith.constant 0 : i32
    return %arg0, %c0_i32, %arg1 : i32, i32, i32
  }
  func.func @transform_8(%arg0: i32, %arg1: i32) -> (i32, i32, i32) {
    %c0_i32 = arith.constant 0 : i32
    %c0_i32_0 = arith.constant 0 : i32
    %c0_i32_1 = arith.constant 0 : i32
    return %arg0, %c0_i32, %c0_i32_0 : i32, i32, i32
  }
}

</mosaic_0001>

<llo_original>
// kernel: edgeconv_forward.1
$region0: #{edgeconv_forward.1}
  #allocation0 [shape = 'u32[]', space=smem, size = 0x4, offset = 0x4, fixed_abs, tag = 'smem constant byte address 0x4 - core index']
  #allocation1 [shape = 'u32[144,128]{1,0:T(1,128)}', space=vmem, size = 0x12000, scoped, tag = 'internal scratch']
  %s0 = inlined_call_operand.vmem [shape: bf16[2,8,4,16], index: 0, kind: input, shape index: {}]
  %s1 = inlined_call_operand.vmem [shape: bf16[2,4,16], index: 1, kind: input, shape index: {}]
  %s2 = inlined_call_operand.vmem [shape: bf16[64,4], index: 2, kind: input, shape index: {}]
  %s3 = inlined_call_operand.vmem [shape: bf16[64,4], index: 3, kind: input, shape index: {}]
  %s4 = inlined_call_operand.vmem [shape: f32[64,1], index: 4, kind: input, shape index: {}]
  %s5 = inlined_call_operand.vmem [shape: bf16[64,64], index: 5, kind: input, shape index: {}]
  %s6 = inlined_call_operand.vmem [shape: f32[64,1], index: 6, kind: input, shape index: {}]
  %s7 = inlined_call_operand.vmem [shape: f32[2,64,16], index: 7, kind: output, shape index: {0}]
  %s8 = inlined_call_operand.vmem [shape: f32[2,64,1], index: 8, kind: output, shape index: {1}]
  %9 = xla_tuple %s7, %s8
  %s10 = sld [smem:[#allocation0]]
  $region73: #{edgeconv_forward.1} parent=0
    _
  %s12 = ssub.s32 1, %s10
  %s13 = scalar_select 0, %s12, %s10
  loop: start=0, step=1, limit=4
  $region2: #{edgeconv_forward.1} parent=0 // loop_pre_header
    _
  $region3: #{edgeconv_forward.1} parent=0 // loop_header
    %s15 = sphi 0, %s19
    %p16 = scmp.ge.s32.totalorder %s15, 4
    %s22 = sphi 0, %s34
    %s23 = sphi 0, %s30
    %s24 = sphi 0, %s22
    %s25 = sphi 0, %s23
    %s26 = sphi 0, %s24
    %s27 = sphi 0, %s25
    %s39 = sphi 0, %s41
    %s42 = sphi 0, %s39
    %s43 = sphi 0, %s42
    %s59 = sphi 0, %s43
    %s67 = sphi 0, %s69
    %s70 = sphi 0, %s67
    %s71 = sphi 0, %s70
    %s87 = sphi 0, %s71
    %s91 = sphi 0, %s91
    %s93 = sphi 0, %s91
    %s94 = sphi 0, %s93
    %s108 = sphi 0, %s94
    %s112 = sphi 0, %s112
    %s114 = sphi 0, %s112
    %s115 = sphi 0, %s114
    %s129 = sphi 0, %s115
    %s133 = sphi 0, %s133
    %s135 = sphi 0, %s133
    %s136 = sphi 0, %s135
    %s150 = sphi 0, %s136
    %s154 = sphi 0, %s154
    %s156 = sphi 0, %s154
    %s157 = sphi 0, %s156
    %s171 = sphi 0, %s157
    %s175 = sphi 0, %s175
    %s177 = sphi 0, %s175
    %s178 = sphi 0, %s177
    %s192 = sphi 0, %s178
    %s200 = sphi 0, %s202
    %s203 = sphi 0, %s200
    %s204 = sphi 0, %s203
    %s220 = sphi 0, %s204
    %s226 = sphi 0, %s228
    %s229 = sphi 0, %s226
    %s230 = sphi 0, %s229
    %s246 = sphi 0, %s230
  $region4: #{edgeconv_forward.1} parent=0 // loop_header_branch
    %18 = sbr.rel (%p16) target = $region8
  $region5: #{edgeconv_forward.1} parent=0 // loop_body
    %s20 = ssub.s32 %s15, 1
    %s21 = ssub.s32 %s15, 2
    %s28 = sadd.s32 1, %s23
    %p29 = scmp.ge.s32.totalorder %s28, 1
    %s30 = scalar_select %p29, 0, %s28
    %s31 = sadd.s32 1, %s22
    %s32 = scalar_select %p29, %s31, %s22
    %p33 = scmp.ge.s32.totalorder %s32, 2
    %s34 = scalar_select %p33, 0, %s32
    %s35 = ssub.s32 %s22, %s34
    %s36 = ssub.s32 %s23, %s30
    %s37 = sor.u32 %s35, %s36
    %p38 = scmp.eq.s32.totalorder %s37, 0
    %s40 = sadd.s32 %s39, 1
    %s41 = scalar_select %p38, %s39, %s40
    %p44 = pneg %p38
    %p45 = scmp.eq.s32.totalorder %s15, 1
    %p46 = por %p44, %p45
    %p47 = scmp.ne.s32.totalorder %s39, %s42
    %p48 = scmp.eq.s32.totalorder %s15, 0
    %p49 = por %p47, %p48
    %p50 = scmp.ne.s32.totalorder %s39, %s42
    %p51 = scmp.eq.s32.totalorder %s20, 1
    %p52 = por %p50, %p51
    %p53 = scmp.ne.s32.totalorder %s42, %s43
    %p54 = scmp.eq.s32.totalorder %s20, 0
    %p55 = por %p53, %p54
    %p56 = scmp.ne.s32.totalorder %s42, %s43
    %p57 = scmp.eq.s32.totalorder %s21, 1
    %p58 = por %p56, %p57
    %p60 = scmp.ne.s32.totalorder %s43, %s59
    %p61 = scmp.eq.s32.totalorder %s21, 0
    %p62 = por %p60, %p61
    %s63 = ssub.s32 %s22, %s34
    %s64 = ssub.s32 %s23, %s30
    %s65 = sor.u32 %s63, %s64
    %p66 = scmp.eq.s32.totalorder %s65, 0
    %s68 = sadd.s32 %s67, 1
    %s69 = scalar_select %p66, %s67, %s68
    %p72 = pneg %p66
    %p73 = scmp.eq.s32.totalorder %s15, 1
    %p74 = por %p72, %p73
    %p75 = scmp.ne.s32.totalorder %s67, %s70
    %p76 = scmp.eq.s32.totalorder %s15, 0
    %p77 = por %p75, %p76
    %p78 = scmp.ne.s32.totalorder %s67, %s70
    %p79 = scmp.eq.s32.totalorder %s20, 1
    %p80 = por %p78, %p79
    %p81 = scmp.ne.s32.totalorder %s70, %s71
    %p82 = scmp.eq.s32.totalorder %s20, 0
    %p83 = por %p81, %p82
    %p84 = scmp.ne.s32.totalorder %s70, %s71
    %p85 = scmp.eq.s32.totalorder %s21, 1
    %p86 = por %p84, %p85
    %p88 = scmp.ne.s32.totalorder %s71, %s87
    %p89 = scmp.eq.s32.totalorder %s21, 0
    %p90 = por %p88, %p89
    %s92 = sadd.s32 %s91, 1
    %p95 = scmp.eq.s32.totalorder %s15, 1
    %p96 = scmp.ne.s32.totalorder %s91, %s93
    %p97 = scmp.eq.s32.totalorder %s15, 0
    %p98 = por %p96, %p97
    %p99 = scmp.ne.s32.totalorder %s91, %s93
    %p100 = scmp.eq.s32.totalorder %s20, 1
    %p101 = por %p99, %p100
    %p102 = scmp.ne.s32.totalorder %s93, %s94
    %p103 = scmp.eq.s32.totalorder %s20, 0
    %p104 = por %p102, %p103
    %p105 = scmp.ne.s32.totalorder %s93, %s94
    %p106 = scmp.eq.s32.totalorder %s21, 1
    %p107 = por %p105, %p106
    %p109 = scmp.ne.s32.totalorder %s94, %s108
    %p110 = scmp.eq.s32.totalorder %s21, 0
    %p111 = por %p109, %p110
    %s113 = sadd.s32 %s112, 1
    %p116 = scmp.eq.s32.totalorder %s15, 1
    %p117 = scmp.ne.s32.totalorder %s112, %s114
    %p118 = scmp.eq.s32.totalorder %s15, 0
    %p119 = por %p117, %p118
    %p120 = scmp.ne.s32.totalorder %s112, %s114
    %p121 = scmp.eq.s32.totalorder %s20, 1
    %p122 = por %p120, %p121
    %p123 = scmp.ne.s32.totalorder %s114, %s115
    %p124 = scmp.eq.s32.totalorder %s20, 0
    %p125 = por %p123, %p124
    %p126 = scmp.ne.s32.totalorder %s114, %s115
    %p127 = scmp.eq.s32.totalorder %s21, 1
    %p128 = por %p126, %p127
    %p130 = scmp.ne.s32.totalorder %s115, %s129
    %p131 = scmp.eq.s32.totalorder %s21, 0
    %p132 = por %p130, %p131
    %s134 = sadd.s32 %s133, 1
    %p137 = scmp.eq.s32.totalorder %s15, 1
    %p138 = scmp.ne.s32.totalorder %s133, %s135
    %p139 = scmp.eq.s32.totalorder %s15, 0
    %p140 = por %p138, %p139
    %p141 = scmp.ne.s32.totalorder %s133, %s135
    %p142 = scmp.eq.s32.totalorder %s20, 1
    %p143 = por %p141, %p142
    %p144 = scmp.ne.s32.totalorder %s135, %s136
    %p145 = scmp.eq.s32.totalorder %s20, 0
    %p146 = por %p144, %p145
    %p147 = scmp.ne.s32.totalorder %s135, %s136
    %p148 = scmp.eq.s32.totalorder %s21, 1
    %p149 = por %p147, %p148
    %p151 = scmp.ne.s32.totalorder %s136, %s150
    %p152 = scmp.eq.s32.totalorder %s21, 0
    %p153 = por %p151, %p152
    %s155 = sadd.s32 %s154, 1
    %p158 = scmp.eq.s32.totalorder %s15, 1
    %p159 = scmp.ne.s32.totalorder %s154, %s156
    %p160 = scmp.eq.s32.totalorder %s15, 0
    %p161 = por %p159, %p160
    %p162 = scmp.ne.s32.totalorder %s154, %s156
    %p163 = scmp.eq.s32.totalorder %s20, 1
    %p164 = por %p162, %p163
    %p165 = scmp.ne.s32.totalorder %s156, %s157
    %p166 = scmp.eq.s32.totalorder %s20, 0
    %p167 = por %p165, %p166
    %p168 = scmp.ne.s32.totalorder %s156, %s157
    %p169 = scmp.eq.s32.totalorder %s21, 1
    %p170 = por %p168, %p169
    %p172 = scmp.ne.s32.totalorder %s157, %s171
    %p173 = scmp.eq.s32.totalorder %s21, 0
    %p174 = por %p172, %p173
    %s176 = sadd.s32 %s175, 1
    %p179 = scmp.eq.s32.totalorder %s15, 1
    %p180 = scmp.ne.s32.totalorder %s175, %s177
    %p181 = scmp.eq.s32.totalorder %s15, 0
    %p182 = por %p180, %p181
    %p183 = scmp.ne.s32.totalorder %s175, %s177
    %p184 = scmp.eq.s32.totalorder %s20, 1
    %p185 = por %p183, %p184
    %p186 = scmp.ne.s32.totalorder %s177, %s178
    %p187 = scmp.eq.s32.totalorder %s20, 0
    %p188 = por %p186, %p187
    %p189 = scmp.ne.s32.totalorder %s177, %s178
    %p190 = scmp.eq.s32.totalorder %s21, 1
    %p191 = por %p189, %p190
    %p193 = scmp.ne.s32.totalorder %s178, %s192
    %p194 = scmp.eq.s32.totalorder %s21, 0
    %p195 = por %p193, %p194
    %s196 = ssub.s32 %s22, %s34
    %s197 = ssub.s32 %s23, %s30
    %s198 = sor.u32 %s196, %s197
    %p199 = scmp.eq.s32.totalorder %s198, 0
    %s201 = sadd.s32 %s200, 1
    %s202 = scalar_select %p199, %s200, %s201
    %p205 = pneg %p199
    %p206 = scmp.eq.s32.totalorder %s15, 1
    %p207 = por %p205, %p206
    %p208 = scmp.ne.s32.totalorder %s200, %s203
    %p209 = scmp.eq.s32.totalorder %s15, 0
    %p210 = por %p208, %p209
    %p211 = scmp.ne.s32.totalorder %s200, %s203
    %p212 = scmp.eq.s32.totalorder %s20, 1
    %p213 = por %p211, %p212
    %p214 = scmp.ne.s32.totalorder %s203, %s204
    %p215 = scmp.eq.s32.totalorder %s20, 0
    %p216 = por %p214, %p215
    %p217 = scmp.ne.s32.totalorder %s203, %s204
    %p218 = scmp.eq.s32.totalorder %s21, 1
    %p219 = por %p217, %p218
    %p221 = scmp.ne.s32.totalorder %s204, %s220
    %p222 = scmp.eq.s32.totalorder %s21, 0
    %p223 = por %p221, %p222
    %s224 = ssub.s32 %s22, %s34
    %p225 = scmp.eq.s32.totalorder %s224, 0
    %s227 = sadd.s32 %s226, 1
    %s228 = scalar_select %p225, %s226, %s227
    %p231 = pneg %p225
    %p232 = scmp.eq.s32.totalorder %s15, 1
    %p233 = por %p231, %p232
    %p234 = scmp.ne.s32.totalorder %s226, %s229
    %p235 = scmp.eq.s32.totalorder %s15, 0
    %p236 = por %p234, %p235
    %p237 = scmp.ne.s32.totalorder %s226, %s229
    %p238 = scmp.eq.s32.totalorder %s20, 1
    %p239 = por %p237, %p238
    %p240 = scmp.ne.s32.totalorder %s229, %s230
    %p241 = scmp.eq.s32.totalorder %s20, 0
    %p242 = por %p240, %p241
    %p243 = scmp.ne.s32.totalorder %s229, %s230
    %p244 = scmp.eq.s32.totalorder %s21, 1
    %p245 = por %p243, %p244
    %p247 = scmp.ne.s32.totalorder %s230, %s246
    %p248 = scmp.eq.s32.totalorder %s21, 0
    %p249 = por %p247, %p248
    %p250 = scmp.le.s32.totalorder 1, %s15
    %p251 = scmp.lt.s32.totalorder %s15, 3
    %p252 = pnand %p250, %p251
    %p253 = pneg %p252
    // Predicated region
    $region9: #{edgeconv_forward.1} parent=5 // pred_check
      _
    $region10: #{edgeconv_forward.1} parent=5 // pred_check_branch
      %255 = sbr.rel (%p252) target = $region12
    $region11: #{edgeconv_forward.1} parent=5 // pred_region
      %s256 = ssub.s32 %s15, 1
      // Predicated region
      $region13: #{edgeconv_forward.1} parent=11 // pred_check
        %p257 = pneg %p104
      $region14: #{edgeconv_forward.1} parent=11 // pred_check_branch
        %259 = sbr.rel (%p257) target = $region16
      $region15: #{edgeconv_forward.1} parent=11 // pred_region
        _
      $region16: #{edgeconv_forward.1} parent=11 // pred_fallthru
        _
      // Predicated region
      $region17: #{edgeconv_forward.1} parent=11 // pred_check
        %p260 = pneg %p125
      $region18: #{edgeconv_forward.1} parent=11 // pred_check_branch
        %262 = sbr.rel (%p260) target = $region20
      $region19: #{edgeconv_forward.1} parent=11 // pred_region
        _
      $region20: #{edgeconv_forward.1} parent=11 // pred_fallthru
        _
      // Predicated region
      $region21: #{edgeconv_forward.1} parent=11 // pred_check
        %p263 = pneg %p146
      $region22: #{edgeconv_forward.1} parent=11 // pred_check_branch
        %265 = sbr.rel (%p263) target = $region24
      $region23: #{edgeconv_forward.1} parent=11 // pred_region
        _
      $region24: #{edgeconv_forward.1} parent=11 // pred_fallthru
        _
      // Predicated region
      $region25: #{edgeconv_forward.1} parent=11 // pred_check
        %p266 = pneg %p167
      $region26: #{edgeconv_forward.1} parent=11 // pred_check_branch
        %268 = sbr.rel (%p266) target = $region28
      $region27: #{edgeconv_forward.1} parent=11 // pred_region
        _
      $region28: #{edgeconv_forward.1} parent=11 // pred_fallthru
        _
      // Predicated region
      $region29: #{edgeconv_forward.1} parent=11 // pred_check
        %p269 = pneg %p188
      $region30: #{edgeconv_forward.1} parent=11 // pred_check_branch
        %271 = sbr.rel (%p269) target = $region32
      $region31: #{edgeconv_forward.1} parent=11 // pred_region
        _
      $region32: #{edgeconv_forward.1} parent=11 // pred_fallthru
        _
    $region12: #{edgeconv_forward.1} parent=5 // pred_fallthru
      _
    %p272 = scmp.lt.s32.totalorder %s15, 2
    // Predicated region
    $region33: #{edgeconv_forward.1} parent=5 // pred_check
      %p273 = pneg %p272
    $region34: #{edgeconv_forward.1} parent=5 // pred_check_branch
      %275 = sbr.rel (%p273) target = $region36
    $region35: #{edgeconv_forward.1} parent=5 // pred_region
      // Predicated region
      $region37: #{edgeconv_forward.1} parent=35 // pred_check
        %p276 = pneg %p49
      $region38: #{edgeconv_forward.1} parent=35 // pred_check_branch
        %278 = sbr.rel (%p276) target = $region40
      $region39: #{edgeconv_forward.1} parent=35 // pred_region
        %p279 = scmp.lt.s32.totalorder %s22, 1
        %s280 = scalar_select %p279, %s22, 1
        %p281 = scmp.lt.s32.totalorder %s23, 0
        %s282 = scalar_select %p281, %s23, 0
        %s283 = smul.addr %s280, 8
        %s284 = sadd.s32 %s282, %s283
        %s285 = smul.addr %s284, 2
        %s286 = scalar_lea.vmem %s0, %s285
      $region40: #{edgeconv_forward.1} parent=35 // pred_fallthru
        _
      // Predicated region
      $region41: #{edgeconv_forward.1} parent=35 // pred_check
        %p287 = pneg %p77
      $region42: #{edgeconv_forward.1} parent=35 // pred_check_branch
        %289 = sbr.rel (%p287) target = $region44
      $region43: #{edgeconv_forward.1} parent=35 // pred_region
        %p290 = scmp.lt.s32.totalorder %s22, 1
        %s291 = scalar_select %p290, %s22, 1
        %p292 = scmp.lt.s32.totalorder %s23, 0
        %s293 = scalar_select %p292, %s23, 0
        %s294 = sadd.s32 %s293, %s291
        %s295 = smul.addr %s294, 2
        %s296 = scalar_lea.vmem %s1, %s295
      $region44: #{edgeconv_forward.1} parent=35 // pred_fallthru
        _
    $region36: #{edgeconv_forward.1} parent=5 // pred_fallthru
      _
    %p297 = scmp.le.s32.totalorder 1, %s15
    %p298 = scmp.lt.s32.totalorder %s15, 3
    %p299 = pnand %p297, %p298
    %p300 = pneg %p299
    // Predicated region
    $region45: #{edgeconv_forward.1} parent=5 // pred_check
      _
    $region46: #{edgeconv_forward.1} parent=5 // pred_check_branch
      %302 = sbr.rel (%p299) target = $region48
    $region47: #{edgeconv_forward.1} parent=5 // pred_region
      %s303 = ssub.s32 %s15, 1
      %p304 = scmp.lt.s32.totalorder %s24, 1
      %s305 = scalar_select %p304, %s24, 1
      %p306 = scmp.lt.s32.totalorder %s25, 0
      %s307 = scalar_select %p306, %s25, 0
      %s308 = smul.addr %s305, 8
      %s309 = sadd.s32 %s307, %s308
      %s310 = smul.addr %s309, 2
      %s311 = scalar_lea.vmem %s0, %s310
      %p312 = pneg %p55
      %p313 = pneg %p52
      %p314 = scmp.lt.s32.totalorder %s24, 1
      %s315 = scalar_select %p314, %s24, 1
      %p316 = scmp.lt.s32.totalorder %s25, 0
      %s317 = scalar_select %p316, %s25, 0
      %s318 = sadd.s32 %s317, %s315
      %s319 = smul.addr %s318, 2
      %s320 = scalar_lea.vmem %s1, %s319
      %p321 = pneg %p83
      %p322 = pneg %p80
      %p323 = pneg %p104
      %p324 = pneg %p101
      %p325 = pneg %p125
      %p326 = pneg %p122
      %p327 = pneg %p146
      %p328 = pneg %p143
      %p329 = pneg %p167
      %p330 = pneg %p164
      %p331 = pneg %p188
      %p332 = pneg %p185
      %p333 = pneg %p216
      %p334 = pneg %p213
      %p335 = scmp.lt.s32.totalorder %s24, 1
      %s336 = scalar_select %p335, %s24, 1
      %p337 = scmp.lt.s32.totalorder %s25, 0
      %s338 = scalar_select %p337, %s25, 0
      %s339 = smul.addr %s336, 8
      %s340 = sadd.s32 %s338, %s339
      %s341 = smul.addr %s340, 8
      %s342 = scalar_lea.vmem %s7, %s341
      %p343 = pneg %p242
      %p344 = pneg %p239
      %p345 = scmp.lt.s32.totalorder %s24, 1
      %s346 = scalar_select %p345, %s24, 1
      %s347 = smul.addr %s346, 8
      %s348 = smul.addr %s347, 8
      %s349 = scalar_lea.vmem %s8, %s348
      %p350 = scmp.lt.s32.totalorder %s24, 1
      %s351 = scalar_select %p350, %s24, 1
      %p352 = scmp.lt.s32.totalorder %s25, 0
      %s353 = scalar_select %p352, %s25, 0
      %s354 = smul.addr %s351, 8
      %s355 = sadd.s32 %s353, %s354
      %s356 = smul.addr %s355, 2
      %s357 = scalar_lea.vmem %s0, %s356
      %p358 = scmp.lt.s32.totalorder %s24, 1
      %s359 = scalar_select %p358, %s24, 1
      %p360 = scmp.lt.s32.totalorder %s25, 0
      %s361 = scalar_select %p360, %s25, 0
      %s362 = sadd.s32 %s361, %s359
      %s363 = smul.addr %s362, 2
      %s364 = scalar_lea.vmem %s1, %s363
      %p365 = scmp.lt.s32.totalorder %s24, 1
      %s366 = scalar_select %p365, %s24, 1
      %p367 = scmp.lt.s32.totalorder %s25, 0
      %s368 = scalar_select %p367, %s25, 0
      %s369 = smul.addr %s366, 8
      %s370 = sadd.s32 %s368, %s369
      %s371 = smul.addr %s370, 8
      %s372 = scalar_lea.vmem %s7, %s371
      %p373 = scmp.lt.s32.totalorder %s24, 1
      %s374 = scalar_select %p373, %s24, 1
      %s375 = smul.addr %s374, 8
      %s376 = smul.addr %s375, 8
      %s377 = scalar_lea.vmem %s8, %s376
      %v379 = vld [vmem:[%s2] sm:$0xf]
      %v380 = vld [vmem:[%s2 + $0x4] sm:$0xf]
      %v381 = vld [vmem:[%s2 + $0x8] sm:$0xf]
      %v382 = vld [vmem:[%s2 + $0xc] sm:$0xf]
      %v383 = vld [vmem:[%s2 + $0x10] sm:$0xf]
      %v384 = vld [vmem:[%s2 + $0x14] sm:$0xf]
      %v385 = vld [vmem:[%s2 + $0x18] sm:$0xf]
      %v386 = vld [vmem:[%s2 + $0x1c] sm:$0xf]
      %v387 = vld [vmem:[%s3] sm:$0xf]
      %v388 = vld [vmem:[%s3 + $0x4] sm:$0xf]
      %v389 = vld [vmem:[%s3 + $0x8] sm:$0xf]
      %v390 = vld [vmem:[%s3 + $0xc] sm:$0xf]
      %v391 = vld [vmem:[%s3 + $0x10] sm:$0xf]
      %v392 = vld [vmem:[%s3 + $0x14] sm:$0xf]
      %v393 = vld [vmem:[%s3 + $0x18] sm:$0xf]
      %v394 = vld [vmem:[%s3 + $0x1c] sm:$0xf]
      %v395 = vld [vmem:[%s5] sm:$0xf]
      %v396 = vld [vmem:[%s5 + $0x4] sm:$0xf]
      %v397 = vld [vmem:[%s5 + $0x8] sm:$0xf]
      %v398 = vld [vmem:[%s5 + $0xc] sm:$0xf]
      %v399 = vld [vmem:[%s5 + $0x10] sm:$0xf]
      %v400 = vld [vmem:[%s5 + $0x14] sm:$0xf]
      %v401 = vld [vmem:[%s5 + $0x18] sm:$0xf]
      %v402 = vld [vmem:[%s5 + $0x1c] sm:$0xf]
      %v403 = vld [vmem:[%s364] sm:$0x3]
      %v404 = vld [vmem:[%s4] sm:$0xff]
      %v405 = vld [vmem:[%s4 + $0x8] sm:$0xff]
      %v406 = vld [vmem:[%s4 + $0x10] sm:$0xff]
      %v407 = vld [vmem:[%s4 + $0x18] sm:$0xff]
      %v408 = vld [vmem:[%s4 + $0x20] sm:$0xff]
      %v409 = vld [vmem:[%s4 + $0x28] sm:$0xff]
      %v410 = vld [vmem:[%s4 + $0x30] sm:$0xff]
      %v411 = vld [vmem:[%s4 + $0x38] sm:$0xff]
      %413 = vset.pattern.permute.xlu0 0
      %414 = vperm.xlu0 %413, %v404
      %v415 = vpop.permute.xlu0 %414
      %418 = vset.pattern.permute.xlu0 0
      %419 = vperm.xlu0 %418, %v405
      %v420 = vpop.permute.xlu0 %419
      %423 = vset.pattern.permute.xlu0 0
      %424 = vperm.xlu0 %423, %v406
      %v425 = vpop.permute.xlu0 %424
      %428 = vset.pattern.permute.xlu0 0
      %429 = vperm.xlu0 %428, %v407
      %v430 = vpop.permute.xlu0 %429
      %433 = vset.pattern.permute.xlu0 0
      %434 = vperm.xlu0 %433, %v408
      %v435 = vpop.permute.xlu0 %434
      %438 = vset.pattern.permute.xlu0 0
      %439 = vperm.xlu0 %438, %v409
      %v440 = vpop.permute.xlu0 %439
      %443 = vset.pattern.permute.xlu0 0
      %444 = vperm.xlu0 %443, %v410
      %v445 = vpop.permute.xlu0 %444
      %448 = vset.pattern.permute.xlu0 0
      %449 = vperm.xlu0 %448, %v411
      %v450 = vpop.permute.xlu0 %449
      %v460 = vunpack.c.l.b16 %v387
      %v461 = vunpack.c.l.b16 %v388
      %v462 = vunpack.c.l.b16 %v389
      %v463 = vunpack.c.l.b16 %v390
      %v464 = vunpack.c.l.b16 %v391
      %v465 = vunpack.c.l.b16 %v392
      %v466 = vunpack.c.l.b16 %v393
      %v467 = vunpack.c.l.b16 %v394
      %v468 = vpack.c.b16 %v461, %v460
      %v469 = vpack.c.b16 %v463, %v462
      %v470 = vpack.c.b16 %v465, %v464
      %v471 = vpack.c.b16 %v467, %v466
      %vm472 = vcmask 31744
      %v474 = vsel %vm472, %v468, 0
      %v477 = vsel %vm472, %v469, 0
      %v480 = vsel %vm472, %v470, 0
      %v483 = vsel %vm472, %v471, 0
      %vm485 = vcmask 1041408
      %v487 = vsel %vm485, %v403, 0
      %489 = vmatprep.subr.bf16.mxu0 0
      %490 = vmatpush1.bf16.msra.mxu0 %v487
      %491 = vmatprep.subr.bf16.mxu0 0
      %492 = vmatpush1.bf16.msra.mxu0 0
      %493 = vmatprep.subr.bf16.mxu0 0
      %494 = vmatpush1.bf16.msra.mxu0 0
      %495 = vmatprep.subr.bf16.mxu0 0
      %496 = vmatpush1.bf16.msra.mxu0 0
      %497 = vmatprep.subr.bf16.mxu0 0
      %498 = vmatpush1.bf16.msra.mxu0 0
      %499 = vmatprep.subr.bf16.mxu0 0
      %500 = vmatpush1.bf16.msra.mxu0 0
      %501 = vmatprep.subr.bf16.mxu0 0
      %502 = vmatpush1.bf16.msra.mxu0 0
      %503 = vmatprep.subr.bf16.mxu0 0
      %504 = vmatpush1.bf16.msra.mxu0 0
      %505 = vmatprep.subr.bf16.mxu0 0
      %506 = vmatpush1.bf16.msra.mxu0 0
      %507 = vmatprep.subr.bf16.mxu0 0
      %508 = vmatpush1.bf16.msra.mxu0 0
      %509 = vmatprep.subr.bf16.mxu0 0
      %510 = vmatpush1.bf16.msra.mxu0 0
      %511 = vmatprep.subr.bf16.mxu0 0
      %512 = vmatpush1.bf16.msra.mxu0 0
      %513 = vmatprep.subr.bf16.mxu0 0
      %514 = vmatpush1.bf16.msra.mxu0 0
      %515 = vmatprep.subr.bf16.mxu0 0
      %516 = vmatpush1.bf16.msra.mxu0 0
      %517 = vmatprep.subr.bf16.mxu0 0
      %518 = vmatpush1.bf16.msra.mxu0 0
      %519 = vmatprep.subr.bf16.mxu0 0
      %520 = vmatpush1.bf16.msra.mxu0 0
      %521 = vmatprep.mubr.bf16.mxu0 0
      %522 = vmatmul.mubr.bf16.gmra.mrb[0].mxu0 %v474
      %v523 = vpop.f32.mrb[0].mxu0
      %v524 = vadd.f32 %v415, %v523
      %v525 = vpop.f32.mrb[0].mxu0
      %v526 = vpop.f32.mrb[0].mxu0
      %v527 = vadd.f32 %v420, %v526
      %v528 = vpop.f32.mrb[0].mxu0
      %529 = vmatprep.mubr.bf16.mxu0 0
      %530 = vmatmul.mubr.bf16.gmra.mrb[0].mxu0 %v477
      %v531 = vpop.f32.mrb[0].mxu0
      %v532 = vadd.f32 %v425, %v531
      %v533 = vpop.f32.mrb[0].mxu0
      %v534 = vpop.f32.mrb[0].mxu0
      %v535 = vadd.f32 %v430, %v534
      %v536 = vpop.f32.mrb[0].mxu0
      %537 = vmatprep.mubr.bf16.mxu0 0
      %538 = vmatmul.mubr.bf16.gmra.mrb[0].mxu0 %v480
      %v539 = vpop.f32.mrb[0].mxu0
      %v540 = vadd.f32 %v435, %v539
      %v541 = vpop.f32.mrb[0].mxu0
      %v542 = vpop.f32.mrb[0].mxu0
      %v543 = vadd.f32 %v440, %v542
      %v544 = vpop.f32.mrb[0].mxu0
      %545 = vmatprep.mubr.bf16.mxu0 0
      %546 = vmatmul.mubr.bf16.gmra.mrb[0].mxu0 %v483
      %v547 = vpop.f32.mrb[0].mxu0
      %v548 = vadd.f32 %v445, %v547
      %v549 = vpop.f32.mrb[0].mxu0
      %v550 = vpop.f32.mrb[0].mxu0
      %v551 = vadd.f32 %v450, %v550
      %v552 = vpop.f32.mrb[0].mxu0
      %553 = vdwg.mxu0
      %v554 = vld [vmem:[%s6] sm:$0xff]
      %v555 = vld [vmem:[%s6 + $0x8] sm:$0xff]
      %v556 = vld [vmem:[%s6 + $0x10] sm:$0xff]
      %v557 = vld [vmem:[%s6 + $0x18] sm:$0xff]
      %v558 = vld [vmem:[%s6 + $0x20] sm:$0xff]
      %v559 = vld [vmem:[%s6 + $0x28] sm:$0xff]
      %v560 = vld [vmem:[%s6 + $0x30] sm:$0xff]
      %v561 = vld [vmem:[%s6 + $0x38] sm:$0xff]
      %563 = vset.pattern.permute.xlu0 0
      %564 = vperm.xlu0 %563, %v554
      %v565 = vpop.permute.xlu0 %564
      %568 = vset.pattern.permute.xlu0 0
      %569 = vperm.xlu0 %568, %v555
      %v570 = vpop.permute.xlu0 %569
      %573 = vset.pattern.permute.xlu0 0
      %574 = vperm.xlu0 %573, %v556
      %v575 = vpop.permute.xlu0 %574
      %578 = vset.pattern.permute.xlu0 0
      %579 = vperm.xlu0 %578, %v557
      %v580 = vpop.permute.xlu0 %579
      %583 = vset.pattern.permute.xlu0 0
      %584 = vperm.xlu0 %583, %v558
      %v585 = vpop.permute.xlu0 %584
      %588 = vset.pattern.permute.xlu0 0
      %589 = vperm.xlu0 %588, %v559
      %v590 = vpop.permute.xlu0 %589
      %593 = vset.pattern.permute.xlu0 0
      %594 = vperm.xlu0 %593, %v560
      %v595 = vpop.permute.xlu0 %594
      %598 = vset.pattern.permute.xlu0 0
      %599 = vperm.xlu0 %598, %v561
      %v600 = vpop.permute.xlu0 %599
      %v602 = vld [vmem:[%s357] sm:$0x3]
      %v611 = vunpack.c.l.b16 %v379
      %v612 = vunpack.c.l.b16 %v380
      %v613 = vunpack.c.l.b16 %v381
      %v614 = vunpack.c.l.b16 %v382
      %v615 = vunpack.c.l.b16 %v383
      %v616 = vunpack.c.l.b16 %v384
      %v617 = vunpack.c.l.b16 %v385
      %v618 = vunpack.c.l.b16 %v386
      %v619 = vpack.c.b16 %v612, %v611
      %v620 = vpack.c.b16 %v614, %v613
      %v621 = vpack.c.b16 %v616, %v615
      %v622 = vpack.c.b16 %v618, %v617
      %v624 = vsel %vm472, %v619, 0
      %v627 = vsel %vm472, %v620, 0
      %v630 = vsel %vm472, %v621, 0
      %v633 = vsel %vm472, %v622, 0
      %v636 = vsel %vm485, %v602, 0
      %638 = vmatprep.subr.bf16.mxu0 0
      %639 = vmatpush1.bf16.msra.mxu0 %v636
      %640 = vmatprep.subr.bf16.mxu0 0
      %641 = vmatpush1.bf16.msra.mxu0 0
      %642 = vmatprep.subr.bf16.mxu0 0
      %643 = vmatpush1.bf16.msra.mxu0 0
      %644 = vmatprep.subr.bf16.mxu0 0
      %645 = vmatpush1.bf16.msra.mxu0 0
      %646 = vmatprep.subr.bf16.mxu0 0
      %647 = vmatpush1.bf16.msra.mxu0 0
      %648 = vmatprep.subr.bf16.mxu0 0
      %649 = vmatpush1.bf16.msra.mxu0 0
      %650 = vmatprep.subr.bf16.mxu0 0
      %651 = vmatpush1.bf16.msra.mxu0 0
      %652 = vmatprep.subr.bf16.mxu0 0
      %653 = vmatpush1.bf16.msra.mxu0 0
      %654 = vmatprep.subr.bf16.mxu0 0
      %655 = vmatpush1.bf16.msra.mxu0 0
      %656 = vmatprep.subr.bf16.mxu0 0
      %657 = vmatpush1.bf16.msra.mxu0 0
      %658 = vmatprep.subr.bf16.mxu0 0
      %659 = vmatpush1.bf16.msra.mxu0 0
      %660 = vmatprep.subr.bf16.mxu0 0
      %661 = vmatpush1.bf16.msra.mxu0 0
      %662 = vmatprep.subr.bf16.mxu0 0
      %663 = vmatpush1.bf16.msra.mxu0 0
      %664 = vmatprep.subr.bf16.mxu0 0
      %665 = vmatpush1.bf16.msra.mxu0 0
      %666 = vmatprep.subr.bf16.mxu0 0
      %667 = vmatpush1.bf16.msra.mxu0 0
      %668 = vmatprep.subr.bf16.mxu0 0
      %669 = vmatpush1.bf16.msra.mxu0 0
      %670 = vmatprep.mubr.bf16.mxu0 0
      %671 = vmatmul.mubr.bf16.gmra.mrb[0].mxu0 %v624
      %v672 = vpop.f32.mrb[0].mxu0
      %v673 = vadd.f32 %v524, %v672
      %v674 = vpop.f32.mrb[0].mxu0
      %v675 = vpop.f32.mrb[0].mxu0
      %v676 = vadd.f32 %v527, %v675
      %v677 = vpop.f32.mrb[0].mxu0
      %678 = vmatprep.mubr.bf16.mxu0 0
      %679 = vmatmul.mubr.bf16.gmra.mrb[0].mxu0 %v627
      %v680 = vpop.f32.mrb[0].mxu0
      %v681 = vadd.f32 %v532, %v680
      %v682 = vpop.f32.mrb[0].mxu0
      %v683 = vpop.f32.mrb[0].mxu0
      %v684 = vadd.f32 %v535, %v683
      %v685 = vpop.f32.mrb[0].mxu0
      %686 = vmatprep.mubr.bf16.mxu0 0
      %687 = vmatmul.mubr.bf16.gmra.mrb[0].mxu0 %v630
      %v688 = vpop.f32.mrb[0].mxu0
      %v689 = vadd.f32 %v540, %v688
      %v690 = vpop.f32.mrb[0].mxu0
      %v691 = vpop.f32.mrb[0].mxu0
      %v692 = vadd.f32 %v543, %v691
      %v693 = vpop.f32.mrb[0].mxu0
      %694 = vmatprep.mubr.bf16.mxu0 0
      %695 = vmatmul.mubr.bf16.gmra.mrb[0].mxu0 %v633
      %v696 = vpop.f32.mrb[0].mxu0
      %v697 = vadd.f32 %v548, %v696
      %v698 = vpop.f32.mrb[0].mxu0
      %v699 = vpop.f32.mrb[0].mxu0
      %v700 = vadd.f32 %v551, %v699
      %v701 = vpop.f32.mrb[0].mxu0
      %702 = vdwg.mxu0
      %v703 = vmin.f32 %v673, 20.0
      %v704 = vmin.f32 %v676, 20.0
      %v705 = vmin.f32 %v681, 20.0
      %v706 = vmin.f32 %v684, 20.0
      %v707 = vmin.f32 %v689, 20.0
      %v708 = vmin.f32 %v692, 20.0
      %v709 = vmin.f32 %v697, 20.0
      %v710 = vmin.f32 %v700, 20.0
      %v711 = vmul.f32 %v703, 1.442695
      %v712 = vpow.pop %v711
      %v713 = vmul.f32 %v704, 1.442695
      %v714 = vpow.pop %v713
      %v715 = vmul.f32 %v705, 1.442695
      %v716 = vpow.pop %v715
      %v717 = vmul.f32 %v706, 1.442695
      %v718 = vpow.pop %v717
      %v719 = vmul.f32 %v707, 1.442695
      %v720 = vpow.pop %v719
      %v721 = vmul.f32 %v708, 1.442695
      %v722 = vpow.pop %v721
      %v723 = vmul.f32 %v709, 1.442695
      %v724 = vpow.pop %v723
      %v725 = vmul.f32 %v710, 1.442695
      %v726 = vpow.pop %v725
      %v727 = vadd.f32 %v712, 2.0
      %v728 = vadd.f32 %v714, 2.0
      %v729 = vadd.f32 %v716, 2.0
      %v730 = vadd.f32 %v718, 2.0
      %v731 = vadd.f32 %v720, 2.0
      %v732 = vadd.f32 %v722, 2.0
      %v733 = vadd.f32 %v724, 2.0
      %v734 = vadd.f32 %v726, 2.0
      %v735 = vmul.f32 %v712, %v727
      %v736 = vmul.f32 %v714, %v728
      %v737 = vmul.f32 %v716, %v729
      %v738 = vmul.f32 %v718, %v730
      %v739 = vmul.f32 %v720, %v731
      %v740 = vmul.f32 %v722, %v732
      %v741 = vmul.f32 %v724, %v733
      %v742 = vmul.f32 %v726, %v734
      %v743 = vadd.f32 %v735, 2.0
      %v744 = vadd.f32 %v736, 2.0
      %v745 = vadd.f32 %v737, 2.0
      %v746 = vadd.f32 %v738, 2.0
      %v747 = vadd.f32 %v739, 2.0
      %v748 = vadd.f32 %v740, 2.0
      %v749 = vadd.f32 %v741, 2.0
      %v750 = vadd.f32 %v742, 2.0
      %v751 = vrcp.pop %v743
      %v752 = vrcp.pop %v744
      %v753 = vrcp.pop %v745
      %v754 = vrcp.pop %v746
      %v755 = vrcp.pop %v747
      %v756 = vrcp.pop %v748
      %v757 = vrcp.pop %v749
      %v758 = vrcp.pop %v750
      %v759 = vmul.f32 %v735, %v751
      %v760 = vmul.f32 %v736, %v752
      %v761 = vmul.f32 %v737, %v753
      %v762 = vmul.f32 %v738, %v754
      %v763 = vmul.f32 %v739, %v755
      %v764 = vmul.f32 %v740, %v756
      %v765 = vmul.f32 %v741, %v757
      %v766 = vmul.f32 %v742, %v758
      %v767 = vmul.f32 %v673, %v759
      %v768 = vmul.f32 %v676, %v760
      %v769 = vmul.f32 %v681, %v761
      %v770 = vmul.f32 %v684, %v762
      %v771 = vmul.f32 %v689, %v763
      %v772 = vmul.f32 %v692, %v764
      %v773 = vmul.f32 %v697, %v765
      %v774 = vmul.f32 %v700, %v766
      %vm775 = vcmp.gt.f32.partialorder %v673, 20.0
      %vm776 = vcmp.gt.f32.partialorder %v676, 20.0
      %vm777 = vcmp.gt.f32.partialorder %v681, 20.0
      %vm778 = vcmp.gt.f32.partialorder %v684, 20.0
      %vm779 = vcmp.gt.f32.partialorder %v689, 20.0
      %vm780 = vcmp.gt.f32.partialorder %v692, 20.0
      %vm781 = vcmp.gt.f32.partialorder %v697, 20.0
      %vm782 = vcmp.gt.f32.partialorder %v700, 20.0
      %v783 = vsel %vm775, %v673, %v767
      %v784 = vsel %vm776, %v676, %v768
      %v785 = vsel %vm777, %v681, %v769
      %v786 = vsel %vm778, %v684, %v770
      %v787 = vsel %vm779, %v689, %v771
      %v788 = vsel %vm780, %v692, %v772
      %v789 = vsel %vm781, %v697, %v773
      %v790 = vsel %vm782, %v700, %v774
      %v791 = vpack.c.bf16 %v784, %v783
      %v792 = vpack.c.bf16 %v786, %v785
      %v793 = vpack.c.bf16 %v788, %v787
      %v794 = vpack.c.bf16 %v790, %v789
      %v803 = vunpack.c.l.b16 %v395
      %v804 = vunpack.c.l.b16 %v396
      %v805 = vunpack.c.l.b16 %v397
      %v806 = vunpack.c.l.b16 %v398
      %v807 = vunpack.c.l.b16 %v399
      %v808 = vunpack.c.l.b16 %v400
      %v809 = vunpack.c.l.b16 %v401
      %v810 = vunpack.c.l.b16 %v402
      %v811 = vpack.c.b16 %v804, %v803
      %v812 = vpack.c.b16 %v806, %v805
      %v813 = vpack.c.b16 %v808, %v807
      %v814 = vpack.c.b16 %v810, %v809
      %vm815 = vcmask 523264
      %v817 = vsel %vm815, %v811, 0
      %v820 = vsel %vm815, %v812, 0
      %v823 = vsel %vm815, %v813, 0
      %v826 = vsel %vm815, %v814, 0
      %828 = vmatprep.subr.bf16.mxu0 0
      %829 = vmatpush1.bf16.msra.mxu0 %v791
      %830 = vmatprep.subr.bf16.mxu0 0
      %831 = vmatpush1.bf16.msra.mxu0 %v792
      %832 = vmatprep.subr.bf16.mxu0 0
      %833 = vmatpush1.bf16.msra.mxu0 %v793
      %834 = vmatprep.subr.bf16.mxu0 0
      %835 = vmatpush1.bf16.msra.mxu0 %v794
      %836 = vmatprep.subr.bf16.mxu0 0
      %837 = vmatpush1.bf16.msra.mxu0 0
      %838 = vmatprep.subr.bf16.mxu0 0
      %839 = vmatpush1.bf16.msra.mxu0 0
      %840 = vmatprep.subr.bf16.mxu0 0
      %841 = vmatpush1.bf16.msra.mxu0 0
      %842 = vmatprep.subr.bf16.mxu0 0
      %843 = vmatpush1.bf16.msra.mxu0 0
      %844 = vmatprep.subr.bf16.mxu0 0
      %845 = vmatpush1.bf16.msra.mxu0 0
      %846 = vmatprep.subr.bf16.mxu0 0
      %847 = vmatpush1.bf16.msra.mxu0 0
      %848 = vmatprep.subr.bf16.mxu0 0
      %849 = vmatpush1.bf16.msra.mxu0 0
      %850 = vmatprep.subr.bf16.mxu0 0
      %851 = vmatpush1.bf16.msra.mxu0 0
      %852 = vmatprep.subr.bf16.mxu0 0
      %853 = vmatpush1.bf16.msra.mxu0 0
      %854 = vmatprep.subr.bf16.mxu0 0
      %855 = vmatpush1.bf16.msra.mxu0 0
      %856 = vmatprep.subr.bf16.mxu0 0
      %857 = vmatpush1.bf16.msra.mxu0 0
      %858 = vmatprep.subr.bf16.mxu0 0
      %859 = vmatpush1.bf16.msra.mxu0 0
      %860 = vmatprep.mubr.bf16.mxu0 0
      %861 = vmatmul.mubr.bf16.gmra.mrb[0].mxu0 %v817
      %v862 = vpop.f32.mrb[0].mxu0
      %v863 = vadd.f32 %v565, %v862
      %v864 = vpop.f32.mrb[0].mxu0
      %v865 = vpop.f32.mrb[0].mxu0
      %v866 = vadd.f32 %v570, %v865
      %v867 = vpop.f32.mrb[0].mxu0
      %868 = vmatprep.mubr.bf16.mxu0 0
      %869 = vmatmul.mubr.bf16.gmra.mrb[0].mxu0 %v820
      %v870 = vpop.f32.mrb[0].mxu0
      %v871 = vadd.f32 %v575, %v870
      %v872 = vpop.f32.mrb[0].mxu0
      %v873 = vpop.f32.mrb[0].mxu0
      %v874 = vadd.f32 %v580, %v873
      %v875 = vpop.f32.mrb[0].mxu0
      %876 = vmatprep.mubr.bf16.mxu0 0
      %877 = vmatmul.mubr.bf16.gmra.mrb[0].mxu0 %v823
      %v878 = vpop.f32.mrb[0].mxu0
      %v879 = vadd.f32 %v585, %v878
      %v880 = vpop.f32.mrb[0].mxu0
      %v881 = vpop.f32.mrb[0].mxu0
      %v882 = vadd.f32 %v590, %v881
      %v883 = vpop.f32.mrb[0].mxu0
      %884 = vmatprep.mubr.bf16.mxu0 0
      %885 = vmatmul.mubr.bf16.gmra.mrb[0].mxu0 %v826
      %v886 = vpop.f32.mrb[0].mxu0
      %v887 = vadd.f32 %v595, %v886
      %v888 = vpop.f32.mrb[0].mxu0
      %v889 = vpop.f32.mrb[0].mxu0
      %v890 = vadd.f32 %v600, %v889
      %v891 = vpop.f32.mrb[0].mxu0
      %892 = vdwg.mxu0
      %v893 = vmin.f32 %v863, 20.0
      %v894 = vmin.f32 %v866, 20.0
      %v895 = vmin.f32 %v871, 20.0
      %v896 = vmin.f32 %v874, 20.0
      %v897 = vmin.f32 %v879, 20.0
      %v898 = vmin.f32 %v882, 20.0
      %v899 = vmin.f32 %v887, 20.0
      %v900 = vmin.f32 %v890, 20.0
      %v901 = vmul.f32 %v893, 1.442695
      %v902 = vpow.pop %v901
      %v903 = vmul.f32 %v894, 1.442695
      %v904 = vpow.pop %v903
      %v905 = vmul.f32 %v895, 1.442695
      %v906 = vpow.pop %v905
      %v907 = vmul.f32 %v896, 1.442695
      %v908 = vpow.pop %v907
      %v909 = vmul.f32 %v897, 1.442695
      %v910 = vpow.pop %v909
      %v911 = vmul.f32 %v898, 1.442695
      %v912 = vpow.pop %v911
      %v913 = vmul.f32 %v899, 1.442695
      %v914 = vpow.pop %v913
      %v915 = vmul.f32 %v900, 1.442695
      %v916 = vpow.pop %v915
      %v917 = vadd.f32 %v902, 2.0
      %v918 = vadd.f32 %v904, 2.0
      %v919 = vadd.f32 %v906, 2.0
      %v920 = vadd.f32 %v908, 2.0
      %v921 = vadd.f32 %v910, 2.0
      %v922 = vadd.f32 %v912, 2.0
      %v923 = vadd.f32 %v914, 2.0
      %v924 = vadd.f32 %v916, 2.0
      %v925 = vmul.f32 %v902, %v917
      %v926 = vmul.f32 %v904, %v918
      %v927 = vmul.f32 %v906, %v919
      %v928 = vmul.f32 %v908, %v920
      %v929 = vmul.f32 %v910, %v921
      %v930 = vmul.f32 %v912, %v922
      %v931 = vmul.f32 %v914, %v923
      %v932 = vmul.f32 %v916, %v924
      %v933 = vadd.f32 %v925, 2.0
      %v934 = vadd.f32 %v926, 2.0
      %v935 = vadd.f32 %v927, 2.0
      %v936 = vadd.f32 %v928, 2.0
      %v937 = vadd.f32 %v929, 2.0
      %v938 = vadd.f32 %v930, 2.0
      %v939 = vadd.f32 %v931, 2.0
      %v940 = vadd.f32 %v932, 2.0
      %v941 = vrcp.pop %v933
      %v942 = vrcp.pop %v934
      %v943 = vrcp.pop %v935
      %v944 = vrcp.pop %v936
      %v945 = vrcp.pop %v937
      %v946 = vrcp.pop %v938
      %v947 = vrcp.pop %v939
      %v948 = vrcp.pop %v940
      %v949 = vmul.f32 %v925, %v941
      %v950 = vmul.f32 %v926, %v942
      %v951 = vmul.f32 %v927, %v943
      %v952 = vmul.f32 %v928, %v944
      %v953 = vmul.f32 %v929, %v945
      %v954 = vmul.f32 %v930, %v946
      %v955 = vmul.f32 %v931, %v947
      %v956 = vmul.f32 %v932, %v948
      %v957 = vmul.f32 %v863, %v949
      %v958 = vmul.f32 %v866, %v950
      %v959 = vmul.f32 %v871, %v951
      %v960 = vmul.f32 %v874, %v952
      %v961 = vmul.f32 %v879, %v953
      %v962 = vmul.f32 %v882, %v954
      %v963 = vmul.f32 %v887, %v955
      %v964 = vmul.f32 %v890, %v956
      %vm965 = vcmp.gt.f32.partialorder %v863, 20.0
      %vm966 = vcmp.gt.f32.partialorder %v866, 20.0
      %vm967 = vcmp.gt.f32.partialorder %v871, 20.0
      %vm968 = vcmp.gt.f32.partialorder %v874, 20.0
      %vm969 = vcmp.gt.f32.partialorder %v879, 20.0
      %vm970 = vcmp.gt.f32.partialorder %v882, 20.0
      %vm971 = vcmp.gt.f32.partialorder %v887, 20.0
      %vm972 = vcmp.gt.f32.partialorder %v890, 20.0
      %v973 = vsel %vm965, %v863, %v957
      %v974 = vsel %vm966, %v866, %v958
      %v975 = vsel %vm967, %v871, %v959
      %v976 = vsel %vm968, %v874, %v960
      %v977 = vsel %vm969, %v879, %v961
      %v978 = vsel %vm970, %v882, %v962
      %v979 = vsel %vm971, %v887, %v963
      %v980 = vsel %vm972, %v890, %v964
      %s981 = scalar_lea.vmem %s357, 2
      %v982 = vld [vmem:[%s981] sm:$0x3]
      %v984 = vsel %vm485, %v982, 0
      %986 = vmatprep.subr.bf16.mxu0 0
      %987 = vmatpush1.bf16.msra.mxu0 %v984
      %988 = vmatprep.subr.bf16.mxu0 0
      %989 = vmatpush1.bf16.msra.mxu0 0
      %990 = vmatprep.subr.bf16.mxu0 0
      %991 = vmatpush1.bf16.msra.mxu0 0
      %992 = vmatprep.subr.bf16.mxu0 0
      %993 = vmatpush1.bf16.msra.mxu0 0
      %994 = vmatprep.subr.bf16.mxu0 0
      %995 = vmatpush1.bf16.msra.mxu0 0
      %996 = vmatprep.subr.bf16.mxu0 0
      %997 = vmatpush1.bf16.msra.mxu0 0
      %998 = vmatprep.subr.bf16.mxu0 0
      %999 = vmatpush1.bf16.msra.mxu0 0
      %1000 = vmatprep.subr.bf16.mxu0 0
      %1001 = vmatpush1.bf16.msra.mxu0 0
      %1002 = vmatprep.subr.bf16.mxu0 0
      %1003 = vmatpush1.bf16.msra.mxu0 0
      %1004 = vmatprep.subr.bf16.mxu0 0
      %1005 = vmatpush1.bf16.msra.mxu0 0
      %1006 = vmatprep.subr.bf16.mxu0 0
      %1007 = vmatpush1.bf16.msra.mxu0 0
      %1008 = vmatprep.subr.bf16.mxu0 0
      %1009 = vmatpush1.bf16.msra.mxu0 0
      %1010 = vmatprep.subr.bf16.mxu0 0
      %1011 = vmatpush1.bf16.msra.mxu0 0
      %1012 = vmatprep.subr.bf16.mxu0 0
      %1013 = vmatpush1.bf16.msra.mxu0 0
      %1014 = vmatprep.subr.bf16.mxu0 0
      %1015 = vmatpush1.bf16.msra.mxu0 0
      %1016 = vmatprep.subr.bf16.mxu0 0
      %1017 = vmatpush1.bf16.msra.mxu0 0
      %1018 = vmatprep.mubr.bf16.mxu0 0
      %1019 = vmatmul.mubr.bf16.gmra.mrb[0].mxu0 %v624
      %v1020 = vpop.f32.mrb[0].mxu0
      %v1021 = vadd.f32 %v524, %v1020
      %v1022 = vpop.f32.mrb[0].mxu0
      %v1023 = vpop.f32.mrb[0].mxu0
      %v1024 = vadd.f32 %v527, %v1023
      %v1025 = vpop.f32.mrb[0].mxu0
      %1026 = vmatprep.mubr.bf16.mxu0 0
      %1027 = vmatmul.mubr.bf16.gmra.mrb[0].mxu0 %v627
      %v1028 = vpop.f32.mrb[0].mxu0
      %v1029 = vadd.f32 %v532, %v1028
      %v1030 = vpop.f32.mrb[0].mxu0
      %v1031 = vpop.f32.mrb[0].mxu0
      %v1032 = vadd.f32 %v535, %v1031
      %v1033 = vpop.f32.mrb[0].mxu0
      %1034 = vmatprep.mubr.bf16.mxu0 0
      %1035 = vmatmul.mubr.bf16.gmra.mrb[0].mxu0 %v630
      %v1036 = vpop.f32.mrb[0].mxu0
      %v1037 = vadd.f32 %v540, %v1036
      %v1038 = vpop.f32.mrb[0].mxu0
      %v1039 = vpop.f32.mrb[0].mxu0
      %v1040 = vadd.f32 %v543, %v1039
      %v1041 = vpop.f32.mrb[0].mxu0
      %1042 = vmatprep.mubr.bf16.mxu0 0
      %1043 = vmatmul.mubr.bf16.gmra.mrb[0].mxu0 %v633
      %v1044 = vpop.f32.mrb[0].mxu0
      %v1045 = vadd.f32 %v548, %v1044
      %v1046 = vpop.f32.mrb[0].mxu0
      %v1047 = vpop.f32.mrb[0].mxu0
      %v1048 = vadd.f32 %v551, %v1047
      %v1049 = vpop.f32.mrb[0].mxu0
      %1050 = vdwg.mxu0
      %v1051 = vmin.f32 %v1021, 20.0
      %v1052 = vmin.f32 %v1024, 20.0
      %v1053 = vmin.f32 %v1029, 20.0
      %v1054 = vmin.f32 %v1032, 20.0
      %v1055 = vmin.f32 %v1037, 20.0
      %v1056 = vmin.f32 %v1040, 20.0
      %v1057 = vmin.f32 %v1045, 20.0
      %v1058 = vmin.f32 %v1048, 20.0
      %v1059 = vmul.f32 %v1051, 1.442695
      %v1060 = vpow.pop %v1059
      %v1061 = vmul.f32 %v1052, 1.442695
      %v1062 = vpow.pop %v1061
      %v1063 = vmul.f32 %v1053, 1.442695
      %v1064 = vpow.pop %v1063
      %v1065 = vmul.f32 %v1054, 1.442695
      %v1066 = vpow.pop %v1065
      %v1067 = vmul.f32 %v1055, 1.442695
      %v1068 = vpow.pop %v1067
      %v1069 = vmul.f32 %v1056, 1.442695
      %v1070 = vpow.pop %v1069
      %v1071 = vmul.f32 %v1057, 1.442695
      %v1072 = vpow.pop %v1071
      %v1073 = vmul.f32 %v1058, 1.442695
      %v1074 = vpow.pop %v1073
      %v1075 = vadd.f32 %v1060, 2.0
      %v1076 = vadd.f32 %v1062, 2.0
      %v1077 = vadd.f32 %v1064, 2.0
      %v1078 = vadd.f32 %v1066, 2.0
      %v1079 = vadd.f32 %v1068, 2.0
      %v1080 = vadd.f32 %v1070, 2.0
      %v1081 = vadd.f32 %v1072, 2.0
      %v1082 = vadd.f32 %v1074, 2.0
      %v1083 = vmul.f32 %v1060, %v1075
      %v1084 = vmul.f32 %v1062, %v1076
      %v1085 = vmul.f32 %v1064, %v1077
      %v1086 = vmul.f32 %v1066, %v1078
      %v1087 = vmul.f32 %v1068, %v1079
      %v1088 = vmul.f32 %v1070, %v1080
      %v1089 = vmul.f32 %v1072, %v1081
      %v1090 = vmul.f32 %v1074, %v1082
      %v1091 = vadd.f32 %v1083, 2.0
      %v1092 = vadd.f32 %v1084, 2.0
      %v1093 = vadd.f32 %v1085, 2.0
      %v1094 = vadd.f32 %v1086, 2.0
      %v1095 = vadd.f32 %v1087, 2.0
      %v1096 = vadd.f32 %v1088, 2.0
      %v1097 = vadd.f32 %v1089, 2.0
      %v1098 = vadd.f32 %v1090, 2.0
      %v1099 = vrcp.pop %v1091
      %v1100 = vrcp.pop %v1092
      %v1101 = vrcp.pop %v1093
      %v1102 = vrcp.pop %v1094
      %v1103 = vrcp.pop %v1095
      %v1104 = vrcp.pop %v1096
      %v1105 = vrcp.pop %v1097
      %v1106 = vrcp.pop %v1098
      %v1107 = vmul.f32 %v1083, %v1099
      %v1108 = vmul.f32 %v1084, %v1100
      %v1109 = vmul.f32 %v1085, %v1101
      %v1110 = vmul.f32 %v1086, %v1102
      %v1111 = vmul.f32 %v1087, %v1103
      %v1112 = vmul.f32 %v1088, %v1104
      %v1113 = vmul.f32 %v1089, %v1105
      %v1114 = vmul.f32 %v1090, %v1106
      %v1115 = vmul.f32 %v1021, %v1107
      %v1116 = vmul.f32 %v1024, %v1108
      %v1117 = vmul.f32 %v1029, %v1109
      %v1118 = vmul.f32 %v1032, %v1110
      %v1119 = vmul.f32 %v1037, %v1111
      %v1120 = vmul.f32 %v1040, %v1112
      %v1121 = vmul.f32 %v1045, %v1113
      %v1122 = vmul.f32 %v1048, %v1114
      %vm1123 = vcmp.gt.f32.partialorder %v1021, 20.0
      %vm1124 = vcmp.gt.f32.partialorder %v1024, 20.0
      %vm1125 = vcmp.gt.f32.partialorder %v1029, 20.0
      %vm1126 = vcmp.gt.f32.partialorder %v1032, 20.0
      %vm1127 = vcmp.gt.f32.partialorder %v1037, 20.0
      %vm1128 = vcmp.gt.f32.partialorder %v1040, 20.0
      %vm1129 = vcmp.gt.f32.partialorder %v1045, 20.0
      %vm1130 = vcmp.gt.f32.partialorder %v1048, 20.0
      %v1131 = vsel %vm1123, %v1021, %v1115
      %v1132 = vsel %vm1124, %v1024, %v1116
      %v1133 = vsel %vm1125, %v1029, %v1117
      %v1134 = vsel %vm1126, %v1032, %v1118
      %v1135 = vsel %vm1127, %v1037, %v1119
      %v1136 = vsel %vm1128, %v1040, %v1120
      %v1137 = vsel %vm1129, %v1045, %v1121
      %v1138 = vsel %vm1130, %v1048, %v1122
      %v1139 = vpack.c.bf16 %v1132, %v1131
      %v1140 = vpack.c.bf16 %v1134, %v1133
      %v1141 = vpack.c.bf16 %v1136, %v1135
      %v1142 = vpack.c.bf16 %v1138, %v1137
      %1143 = vmatprep.subr.bf16.mxu0 0
      %1144 = vmatpush1.bf16.msra.mxu0 %v1139
      %1145 = vmatprep.subr.bf16.mxu0 0
      %1146 = vmatpush1.bf16.msra.mxu0 %v1140
      %1147 = vmatprep.subr.bf16.mxu0 0
      %1148 = vmatpush1.bf16.msra.mxu0 %v1141
      %1149 = vmatprep.subr.bf16.mxu0 0
      %1150 = vmatpush1.bf16.msra.mxu0 %v1142
      %1151 = vmatprep.subr.bf16.mxu0 0
      %1152 = vmatpush1.bf16.msra.mxu0 0
      %1153 = vmatprep.subr.bf16.mxu0 0
      %1154 = vmatpush1.bf16.msra.mxu0 0
      %1155 = vmatprep.subr.bf16.mxu0 0
      %1156 = vmatpush1.bf16.msra.mxu0 0
      %1157 = vmatprep.subr.bf16.mxu0 0
      %1158 = vmatpush1.bf16.msra.mxu0 0
      %1159 = vmatprep.subr.bf16.mxu0 0
      %1160 = vmatpush1.bf16.msra.mxu0 0
      %1161 = vmatprep.subr.bf16.mxu0 0
      %1162 = vmatpush1.bf16.msra.mxu0 0
      %1163 = vmatprep.subr.bf16.mxu0 0
      %1164 = vmatpush1.bf16.msra.mxu0 0
      %1165 = vmatprep.subr.bf16.mxu0 0
      %1166 = vmatpush1.bf16.msra.mxu0 0
      %1167 = vmatprep.subr.bf16.mxu0 0
      %1168 = vmatpush1.bf16.msra.mxu0 0
      %1169 = vmatprep.subr.bf16.mxu0 0
      %1170 = vmatpush1.bf16.msra.mxu0 0
      %1171 = vmatprep.subr.bf16.mxu0 0
      %1172 = vmatpush1.bf16.msra.mxu0 0
      %1173 = vmatprep.subr.bf16.mxu0 0
      %1174 = vmatpush1.bf16.msra.mxu0 0
      %1175 = vmatprep.mubr.bf16.mxu0 0
      %1176 = vmatmul.mubr.bf16.gmra.mrb[0].mxu0 %v817
      %v1177 = vpop.f32.mrb[0].mxu0
      %v1178 = vadd.f32 %v565, %v1177
      %v1179 = vpop.f32.mrb[0].mxu0
      %v1180 = vpop.f32.mrb[0].mxu0
      %v1181 = vadd.f32 %v570, %v1180
      %v1182 = vpop.f32.mrb[0].mxu0
      %1183 = vmatprep.mubr.bf16.mxu0 0
      %1184 = vmatmul.mubr.bf16.gmra.mrb[0].mxu0 %v820
      %v1185 = vpop.f32.mrb[0].mxu0
      %v1186 = vadd.f32 %v575, %v1185
      %v1187 = vpop.f32.mrb[0].mxu0
      %v1188 = vpop.f32.mrb[0].mxu0
      %v1189 = vadd.f32 %v580, %v1188
      %v1190 = vpop.f32.mrb[0].mxu0
      %1191 = vmatprep.mubr.bf16.mxu0 0
      %1192 = vmatmul.mubr.bf16.gmra.mrb[0].mxu0 %v823
      %v1193 = vpop.f32.mrb[0].mxu0
      %v1194 = vadd.f32 %v585, %v1193
      %v1195 = vpop.f32.mrb[0].mxu0
      %v1196 = vpop.f32.mrb[0].mxu0
      %v1197 = vadd.f32 %v590, %v1196
      %v1198 = vpop.f32.mrb[0].mxu0
      %1199 = vmatprep.mubr.bf16.mxu0 0
      %1200 = vmatmul.mubr.bf16.gmra.mrb[0].mxu0 %v826
      %v1201 = vpop.f32.mrb[0].mxu0
      %v1202 = vadd.f32 %v595, %v1201
      %v1203 = vpop.f32.mrb[0].mxu0
      %v1204 = vpop.f32.mrb[0].mxu0
      %v1205 = vadd.f32 %v600, %v1204
      %v1206 = vpop.f32.mrb[0].mxu0
      %1207 = vdwg.mxu0
      %v1208 = vmin.f32 %v1178, 20.0
      %v1209 = vmin.f32 %v1181, 20.0
      %v1210 = vmin.f32 %v1186, 20.0
      %v1211 = vmin.f32 %v1189, 20.0
      %v1212 = vmin.f32 %v1194, 20.0
      %v1213 = vmin.f32 %v1197, 20.0
      %v1214 = vmin.f32 %v1202, 20.0
      %v1215 = vmin.f32 %v1205, 20.0
      %v1216 = vmul.f32 %v1208, 1.442695
      %v1217 = vpow.pop %v1216
      %v1218 = vmul.f32 %v1209, 1.442695
      %v1219 = vpow.pop %v1218
      %v1220 = vmul.f32 %v1210, 1.442695
      %v1221 = vpow.pop %v1220
      %v1222 = vmul.f32 %v1211, 1.442695
      %v1223 = vpow.pop %v1222
      %v1224 = vmul.f32 %v1212, 1.442695
      %v1225 = vpow.pop %v1224
      %v1226 = vmul.f32 %v1213, 1.442695
      %v1227 = vpow.pop %v1226
      %v1228 = vmul.f32 %v1214, 1.442695
      %v1229 = vpow.pop %v1228
      %v1230 = vmul.f32 %v1215, 1.442695
      %v1231 = vpow.pop %v1230
      %v1232 = vadd.f32 %v1217, 2.0
      %v1233 = vadd.f32 %v1219, 2.0
      %v1234 = vadd.f32 %v1221, 2.0
      %v1235 = vadd.f32 %v1223, 2.0
      %v1236 = vadd.f32 %v1225, 2.0
      %v1237 = vadd.f32 %v1227, 2.0
      %v1238 = vadd.f32 %v1229, 2.0
      %v1239 = vadd.f32 %v1231, 2.0
      %v1240 = vmul.f32 %v1217, %v1232
      %v1241 = vmul.f32 %v1219, %v1233
      %v1242 = vmul.f32 %v1221, %v1234
      %v1243 = vmul.f32 %v1223, %v1235
      %v1244 = vmul.f32 %v1225, %v1236
      %v1245 = vmul.f32 %v1227, %v1237
      %v1246 = vmul.f32 %v1229, %v1238
      %v1247 = vmul.f32 %v1231, %v1239
      %v1248 = vadd.f32 %v1240, 2.0
      %v1249 = vadd.f32 %v1241, 2.0
      %v1250 = vadd.f32 %v1242, 2.0
      %v1251 = vadd.f32 %v1243, 2.0
      %v1252 = vadd.f32 %v1244, 2.0
      %v1253 = vadd.f32 %v1245, 2.0
      %v1254 = vadd.f32 %v1246, 2.0
      %v1255 = vadd.f32 %v1247, 2.0
      %v1256 = vrcp.pop %v1248
      %v1257 = vrcp.pop %v1249
      %v1258 = vrcp.pop %v1250
      %v1259 = vrcp.pop %v1251
      %v1260 = vrcp.pop %v1252
      %v1261 = vrcp.pop %v1253
      %v1262 = vrcp.pop %v1254
      %v1263 = vrcp.pop %v1255
      %v1264 = vmul.f32 %v1240, %v1256
      %v1265 = vmul.f32 %v1241, %v1257
      %v1266 = vmul.f32 %v1242, %v1258
      %v1267 = vmul.f32 %v1243, %v1259
      %v1268 = vmul.f32 %v1244, %v1260
      %v1269 = vmul.f32 %v1245, %v1261
      %v1270 = vmul.f32 %v1246, %v1262
      %v1271 = vmul.f32 %v1247, %v1263
      %v1272 = vmul.f32 %v1178, %v1264
      %v1273 = vmul.f32 %v1181, %v1265
      %v1274 = vmul.f32 %v1186, %v1266
      %v1275 = vmul.f32 %v1189, %v1267
      %v1276 = vmul.f32 %v1194, %v1268
      %v1277 = vmul.f32 %v1197, %v1269
      %v1278 = vmul.f32 %v1202, %v1270
      %v1279 = vmul.f32 %v1205, %v1271
      %vm1280 = vcmp.gt.f32.partialorder %v1178, 20.0
      %vm1281 = vcmp.gt.f32.partialorder %v1181, 20.0
      %vm1282 = vcmp.gt.f32.partialorder %v1186, 20.0
      %vm1283 = vcmp.gt.f32.partialorder %v1189, 20.0
      %vm1284 = vcmp.gt.f32.partialorder %v1194, 20.0
      %vm1285 = vcmp.gt.f32.partialorder %v1197, 20.0
      %vm1286 = vcmp.gt.f32.partialorder %v1202, 20.0
      %vm1287 = vcmp.gt.f32.partialorder %v1205, 20.0
      %v1288 = vsel %vm1280, %v1178, %v1272
      %v1289 = vsel %vm1281, %v1181, %v1273
      %v1290 = vsel %vm1282, %v1186, %v1274
      %v1291 = vsel %vm1283, %v1189, %v1275
      %v1292 = vsel %vm1284, %v1194, %v1276
      %v1293 = vsel %vm1285, %v1197, %v1277
      %v1294 = vsel %vm1286, %v1202, %v1278
      %v1295 = vsel %vm1287, %v1205, %v1279
      %v1296 = vmax.f32 %v973, %v1288
      %v1297 = vmax.f32 %v974, %v1289
      %v1298 = vmax.f32 %v975, %v1290
      %v1299 = vmax.f32 %v976, %v1291
      %v1300 = vmax.f32 %v977, %v1292
      %v1301 = vmax.f32 %v978, %v1293
      %v1302 = vmax.f32 %v979, %v1294
      %v1303 = vmax.f32 %v980, %v1295
      %v1304 = vadd.f32 %v973, %v1288
      %v1305 = vadd.f32 %v974, %v1289
      %v1306 = vadd.f32 %v975, %v1290
      %v1307 = vadd.f32 %v976, %v1291
      %v1308 = vadd.f32 %v977, %v1292
      %v1309 = vadd.f32 %v978, %v1293
      %v1310 = vadd.f32 %v979, %v1294
      %v1311 = vadd.f32 %v980, %v1295
      %s1312 = scalar_lea.vmem %s357, 4
      %v1313 = vld [vmem:[%s1312] sm:$0x3]
      %v1315 = vsel %vm485, %v1313, 0
      %1317 = vmatprep.subr.bf16.mxu0 0
      %1318 = vmatpush1.bf16.msra.mxu0 %v1315
      %1319 = vmatprep.subr.bf16.mxu0 0
      %1320 = vmatpush1.bf16.msra.mxu0 0
      %1321 = vmatprep.subr.bf16.mxu0 0
      %1322 = vmatpush1.bf16.msra.mxu0 0
      %1323 = vmatprep.subr.bf16.mxu0 0
      %1324 = vmatpush1.bf16.msra.mxu0 0
      %1325 = vmatprep.subr.bf16.mxu0 0
      %1326 = vmatpush1.bf16.msra.mxu0 0
      %1327 = vmatprep.subr.bf16.mxu0 0
      %1328 = vmatpush1.bf16.msra.mxu0 0
      %1329 = vmatprep.subr.bf16.mxu0 0
      %1330 = vmatpush1.bf16.msra.mxu0 0
      %1331 = vmatprep.subr.bf16.mxu0 0
      %1332 = vmatpush1.bf16.msra.mxu0 0
      %1333 = vmatprep.subr.bf16.mxu0 0
      %1334 = vmatpush1.bf16.msra.mxu0 0
      %1335 = vmatprep.subr.bf16.mxu0 0
      %1336 = vmatpush1.bf16.msra.mxu0 0
      %1337 = vmatprep.subr.bf16.mxu0 0
      %1338 = vmatpush1.bf16.msra.mxu0 0
      %1339 = vmatprep.subr.bf16.mxu0 0
      %1340 = vmatpush1.bf16.msra.mxu0 0
      %1341 = vmatprep.subr.bf16.mxu0 0
      %1342 = vmatpush1.bf16.msra.mxu0 0
      %1343 = vmatprep.subr.bf16.mxu0 0
      %1344 = vmatpush1.bf16.msra.mxu0 0
      %1345 = vmatprep.subr.bf16.mxu0 0
      %1346 = vmatpush1.bf16.msra.mxu0 0
      %1347 = vmatprep.subr.bf16.mxu0 0
      %1348 = vmatpush1.bf16.msra.mxu0 0
      %1349 = vmatprep.mubr.bf16.mxu0 0
      %1350 = vmatmul.mubr.bf16.gmra.mrb[0].mxu0 %v624
      %v1351 = vpop.f32.mrb[0].mxu0
      %v1352 = vadd.f32 %v524, %v1351
      %v1353 = vpop.f32.mrb[0].mxu0
      %v1354 = vpop.f32.mrb[0].mxu0
      %v1355 = vadd.f32 %v527, %v1354
      %v1356 = vpop.f32.mrb[0].mxu0
      %1357 = vmatprep.mubr.bf16.mxu0 0
      %1358 = vmatmul.mubr.bf16.gmra.mrb[0].mxu0 %v627
      %v1359 = vpop.f32.mrb[0].mxu0
      %v1360 = vadd.f32 %v532, %v1359
      %v1361 = vpop.f32.mrb[0].mxu0
      %v1362 = vpop.f32.mrb[0].mxu0
      %v1363 = vadd.f32 %v535, %v1362
      %v1364 = vpop.f32.mrb[0].mxu0
      %1365 = vmatprep.mubr.bf16.mxu0 0
      %1366 = vmatmul.mubr.bf16.gmra.mrb[0].mxu0 %v630
      %v1367 = vpop.f32.mrb[0].mxu0
      %v1368 = vadd.f32 %v540, %v1367
      %v1369 = vpop.f32.mrb[0].mxu0
      %v1370 = vpop.f32.mrb[0].mxu0
      %v1371 = vadd.f32 %v543, %v1370
      %v1372 = vpop.f32.mrb[0].mxu0
      %1373 = vmatprep.mubr.bf16.mxu0 0
      %1374 = vmatmul.mubr.bf16.gmra.mrb[0].mxu0 %v633
      %v1375 = vpop.f32.mrb[0].mxu0
      %v1376 = vadd.f32 %v548, %v1375
      %v1377 = vpop.f32.mrb[0].mxu0
      %v1378 = vpop.f32.mrb[0].mxu0
      %v1379 = vadd.f32 %v551, %v1378
      %v1380 = vpop.f32.mrb[0].mxu0
      %1381 = vdwg.mxu0
      %v1382 = vmin.f32 %v1352, 20.0
      %v1383 = vmin.f32 %v1355, 20.0
      %v1384 = vmin.f32 %v1360, 20.0
      %v1385 = vmin.f32 %v1363, 20.0
      %v1386 = vmin.f32 %v1368, 20.0
      %v1387 = vmin.f32 %v1371, 20.0
      %v1388 = vmin.f32 %v1376, 20.0
      %v1389 = vmin.f32 %v1379, 20.0
      %v1390 = vmul.f32 %v1382, 1.442695
      %v1391 = vpow.pop %v1390
      %v1392 = vmul.f32 %v1383, 1.442695
      %v1393 = vpow.pop %v1392
      %v1394 = vmul.f32 %v1384, 1.442695
      %v1395 = vpow.pop %v1394
      %v1396 = vmul.f32 %v1385, 1.442695
      %v1397 = vpow.pop %v1396
      %v1398 = vmul.f32 %v1386, 1.442695
      %v1399 = vpow.pop %v1398
      %v1400 = vmul.f32 %v1387, 1.442695
      %v1401 = vpow.pop %v1400
      %v1402 = vmul.f32 %v1388, 1.442695
      %v1403 = vpow.pop %v1402
      %v1404 = vmul.f32 %v1389, 1.442695
      %v1405 = vpow.pop %v1404
      %v1406 = vadd.f32 %v1391, 2.0
      %v1407 = vadd.f32 %v1393, 2.0
      %v1408 = vadd.f32 %v1395, 2.0
      %v1409 = vadd.f32 %v1397, 2.0
      %v1410 = vadd.f32 %v1399, 2.0
      %v1411 = vadd.f32 %v1401, 2.0
      %v1412 = vadd.f32 %v1403, 2.0
      %v1413 = vadd.f32 %v1405, 2.0
      %v1414 = vmul.f32 %v1391, %v1406
      %v1415 = vmul.f32 %v1393, %v1407
      %v1416 = vmul.f32 %v1395, %v1408
      %v1417 = vmul.f32 %v1397, %v1409
      %v1418 = vmul.f32 %v1399, %v1410
      %v1419 = vmul.f32 %v1401, %v1411
      %v1420 = vmul.f32 %v1403, %v1412
      %v1421 = vmul.f32 %v1405, %v1413
      %v1422 = vadd.f32 %v1414, 2.0
      %v1423 = vadd.f32 %v1415, 2.0
      %v1424 = vadd.f32 %v1416, 2.0
      %v1425 = vadd.f32 %v1417, 2.0
      %v1426 = vadd.f32 %v1418, 2.0
      %v1427 = vadd.f32 %v1419, 2.0
      %v1428 = vadd.f32 %v1420, 2.0
      %v1429 = vadd.f32 %v1421, 2.0
      %v1430 = vrcp.pop %v1422
      %v1431 = vrcp.pop %v1423
      %v1432 = vrcp.pop %v1424
      %v1433 = vrcp.pop %v1425
      %v1434 = vrcp.pop %v1426
      %v1435 = vrcp.pop %v1427
      %v1436 = vrcp.pop %v1428
      %v1437 = vrcp.pop %v1429
      %v1438 = vmul.f32 %v1414, %v1430
      %v1439 = vmul.f32 %v1415, %v1431
      %v1440 = vmul.f32 %v1416, %v1432
      %v1441 = vmul.f32 %v1417, %v1433
      %v1442 = vmul.f32 %v1418, %v1434
      %v1443 = vmul.f32 %v1419, %v1435
      %v1444 = vmul.f32 %v1420, %v1436
      %v1445 = vmul.f32 %v1421, %v1437
      %v1446 = vmul.f32 %v1352, %v1438
      %v1447 = vmul.f32 %v1355, %v1439
      %v1448 = vmul.f32 %v1360, %v1440
      %v1449 = vmul.f32 %v1363, %v1441
      %v1450 = vmul.f32 %v1368, %v1442
      %v1451 = vmul.f32 %v1371, %v1443
      %v1452 = vmul.f32 %v1376, %v1444
      %v1453 = vmul.f32 %v1379, %v1445
      %vm1454 = vcmp.gt.f32.partialorder %v1352, 20.0
      %vm1455 = vcmp.gt.f32.partialorder %v1355, 20.0
      %vm1456 = vcmp.gt.f32.partialorder %v1360, 20.0
      %vm1457 = vcmp.gt.f32.partialorder %v1363, 20.0
      %vm1458 = vcmp.gt.f32.partialorder %v1368, 20.0
      %vm1459 = vcmp.gt.f32.partialorder %v1371, 20.0
      %vm1460 = vcmp.gt.f32.partialorder %v1376, 20.0
      %vm1461 = vcmp.gt.f32.partialorder %v1379, 20.0
      %v1462 = vsel %vm1454, %v1352, %v1446
      %v1463 = vsel %vm1455, %v1355, %v1447
      %v1464 = vsel %vm1456, %v1360, %v1448
      %v1465 = vsel %vm1457, %v1363, %v1449
      %v1466 = vsel %vm1458, %v1368, %v1450
      %v1467 = vsel %vm1459, %v1371, %v1451
      %v1468 = vsel %vm1460, %v1376, %v1452
      %v1469 = vsel %vm1461, %v1379, %v1453
      %v1470 = vpack.c.bf16 %v1463, %v1462
      %v1471 = vpack.c.bf16 %v1465, %v1464
      %v1472 = vpack.c.bf16 %v1467, %v1466
      %v1473 = vpack.c.bf16 %v1469, %v1468
      %1474 = vmatprep.subr.bf16.mxu0 0
      %1475 = vmatpush1.bf16.msra.mxu0 %v1470
      %1476 = vmatprep.subr.bf16.mxu0 0
      %1477 = vmatpush1.bf16.msra.mxu0 %v1471
      %1478 = vmatprep.subr.bf16.mxu0 0
      %1479 = vmatpush1.bf16.msra.mxu0 %v1472
      %1480 = vmatprep.subr.bf16.mxu0 0
      %1481 = vmatpush1.bf16.msra.mxu0 %v1473
      %1482 = vmatprep.subr.bf16.mxu0 0
      %1483 = vmatpush1.bf16.msra.mxu0 0
      %1484 = vmatprep.subr.bf16.mxu0 0
      %1485 = vmatpush1.bf16.msra.mxu0 0
      %1486 = vmatprep.subr.bf16.mxu0 0
      %1487 = vmatpush1.bf16.msra.mxu0 0
      %1488 = vmatprep.subr.bf16.mxu0 0
      %1489 = vmatpush1.bf16.msra.mxu0 0
      %1490 = vmatprep.subr.bf16.mxu0 0
      %1491 = vmatpush1.bf16.msra.mxu0 0
      %1492 = vmatprep.subr.bf16.mxu0 0
      %1493 = vmatpush1.bf16.msra.mxu0 0
      %1494 = vmatprep.subr.bf16.mxu0 0
      %1495 = vmatpush1.bf16.msra.mxu0 0
      %1496 = vmatprep.subr.bf16.mxu0 0
      %1497 = vmatpush1.bf16.msra.mxu0 0
      %1498 = vmatprep.subr.bf16.mxu0 0
      %1499 = vmatpush1.bf16.msra.mxu0 0
      %1500 = vmatprep.subr.bf16.mxu0 0
      %1501 = vmatpush1.bf16.msra.mxu0 0
      %1502 = vmatprep.subr.bf16.mxu0 0
      %1503 = vmatpush1.bf16.msra.mxu0 0
      %1504 = vmatprep.subr.bf16.mxu0 0
      %1505 = vmatpush1.bf16.msra.mxu0 0
      %1506 = vmatprep.mubr.bf16.mxu0 0
      %1507 = vmatmul.mubr.bf16.gmra.mrb[0].mxu0 %v817
      %v1508 = vpop.f32.mrb[0].mxu0
      %v1509 = vadd.f32 %v565, %v1508
      %v1510 = vpop.f32.mrb[0].mxu0
      %v1511 = vpop.f32.mrb[0].mxu0
      %v1512 = vadd.f32 %v570, %v1511
      %v1513 = vpop.f32.mrb[0].mxu0
      %1514 = vmatprep.mubr.bf16.mxu0 0
      %1515 = vmatmul.mubr.bf16.gmra.mrb[0].mxu0 %v820
      %v1516 = vpop.f32.mrb[0].mxu0
      %v1517 = vadd.f32 %v575, %v1516
      %v1518 = vpop.f32.mrb[0].mxu0
      %v1519 = vpop.f32.mrb[0].mxu0
      %v1520 = vadd.f32 %v580, %v1519
      %v1521 = vpop.f32.mrb[0].mxu0
      %1522 = vmatprep.mubr.bf16.mxu0 0
      %1523 = vmatmul.mubr.bf16.gmra.mrb[0].mxu0 %v823
      %v1524 = vpop.f32.mrb[0].mxu0
      %v1525 = vadd.f32 %v585, %v1524
      %v1526 = vpop.f32.mrb[0].mxu0
      %v1527 = vpop.f32.mrb[0].mxu0
      %v1528 = vadd.f32 %v590, %v1527
      %v1529 = vpop.f32.mrb[0].mxu0
      %1530 = vmatprep.mubr.bf16.mxu0 0
      %1531 = vmatmul.mubr.bf16.gmra.mrb[0].mxu0 %v826
      %v1532 = vpop.f32.mrb[0].mxu0
      %v1533 = vadd.f32 %v595, %v1532
      %v1534 = vpop.f32.mrb[0].mxu0
      %v1535 = vpop.f32.mrb[0].mxu0
      %v1536 = vadd.f32 %v600, %v1535
      %v1537 = vpop.f32.mrb[0].mxu0
      %1538 = vdwg.mxu0
      %v1539 = vmin.f32 %v1509, 20.0
      %v1540 = vmin.f32 %v1512, 20.0
      %v1541 = vmin.f32 %v1517, 20.0
      %v1542 = vmin.f32 %v1520, 20.0
      %v1543 = vmin.f32 %v1525, 20.0
      %v1544 = vmin.f32 %v1528, 20.0
      %v1545 = vmin.f32 %v1533, 20.0
      %v1546 = vmin.f32 %v1536, 20.0
      %v1547 = vmul.f32 %v1539, 1.442695
      %v1548 = vpow.pop %v1547
      %v1549 = vmul.f32 %v1540, 1.442695
      %v1550 = vpow.pop %v1549
      %v1551 = vmul.f32 %v1541, 1.442695
      %v1552 = vpow.pop %v1551
      %v1553 = vmul.f32 %v1542, 1.442695
      %v1554 = vpow.pop %v1553
      %v1555 = vmul.f32 %v1543, 1.442695
      %v1556 = vpow.pop %v1555
      %v1557 = vmul.f32 %v1544, 1.442695
      %v1558 = vpow.pop %v1557
      %v1559 = vmul.f32 %v1545, 1.442695
      %v1560 = vpow.pop %v1559
      %v1561 = vmul.f32 %v1546, 1.442695
      %v1562 = vpow.pop %v1561
      %v1563 = vadd.f32 %v1548, 2.0
      %v1564 = vadd.f32 %v1550, 2.0
      %v1565 = vadd.f32 %v1552, 2.0
      %v1566 = vadd.f32 %v1554, 2.0
      %v1567 = vadd.f32 %v1556, 2.0
      %v1568 = vadd.f32 %v1558, 2.0
      %v1569 = vadd.f32 %v1560, 2.0
      %v1570 = vadd.f32 %v1562, 2.0
      %v1571 = vmul.f32 %v1548, %v1563
      %v1572 = vmul.f32 %v1550, %v1564
      %v1573 = vmul.f32 %v1552, %v1565
      %v1574 = vmul.f32 %v1554, %v1566
      %v1575 = vmul.f32 %v1556, %v1567
      %v1576 = vmul.f32 %v1558, %v1568
      %v1577 = vmul.f32 %v1560, %v1569
      %v1578 = vmul.f32 %v1562, %v1570
      %v1579 = vadd.f32 %v1571, 2.0
      %v1580 = vadd.f32 %v1572, 2.0
      %v1581 = vadd.f32 %v1573, 2.0
      %v1582 = vadd.f32 %v1574, 2.0
      %v1583 = vadd.f32 %v1575, 2.0
      %v1584 = vadd.f32 %v1576, 2.0
      %v1585 = vadd.f32 %v1577, 2.0
      %v1586 = vadd.f32 %v1578, 2.0
      %v1587 = vrcp.pop %v1579
      %v1588 = vrcp.pop %v1580
      %v1589 = vrcp.pop %v1581
      %v1590 = vrcp.pop %v1582
      %v1591 = vrcp.pop %v1583
      %v1592 = vrcp.pop %v1584
      %v1593 = vrcp.pop %v1585
      %v1594 = vrcp.pop %v1586
      %v1595 = vmul.f32 %v1571, %v1587
      %v1596 = vmul.f32 %v1572, %v1588
      %v1597 = vmul.f32 %v1573, %v1589
      %v1598 = vmul.f32 %v1574, %v1590
      %v1599 = vmul.f32 %v1575, %v1591
      %v1600 = vmul.f32 %v1576, %v1592
      %v1601 = vmul.f32 %v1577, %v1593
      %v1602 = vmul.f32 %v1578, %v1594
      %v1603 = vmul.f32 %v1509, %v1595
      %v1604 = vmul.f32 %v1512, %v1596
      %v1605 = vmul.f32 %v1517, %v1597
      %v1606 = vmul.f32 %v1520, %v1598
      %v1607 = vmul.f32 %v1525, %v1599
      %v1608 = vmul.f32 %v1528, %v1600
      %v1609 = vmul.f32 %v1533, %v1601
      %v1610 = vmul.f32 %v1536, %v1602
      %vm1611 = vcmp.gt.f32.partialorder %v1509, 20.0
      %vm1612 = vcmp.gt.f32.partialorder %v1512, 20.0
      %vm1613 = vcmp.gt.f32.partialorder %v1517, 20.0
      %vm1614 = vcmp.gt.f32.partialorder %v1520, 20.0
      %vm1615 = vcmp.gt.f32.partialorder %v1525, 20.0
      %vm1616 = vcmp.gt.f32.partialorder %v1528, 20.0
      %vm1617 = vcmp.gt.f32.partialorder %v1533, 20.0
      %vm1618 = vcmp.gt.f32.partialorder %v1536, 20.0
      %v1619 = vsel %vm1611, %v1509, %v1603
      %v1620 = vsel %vm1612, %v1512, %v1604
      %v1621 = vsel %vm1613, %v1517, %v1605
      %v1622 = vsel %vm1614, %v1520, %v1606
      %v1623 = vsel %vm1615, %v1525, %v1607
      %v1624 = vsel %vm1616, %v1528, %v1608
      %v1625 = vsel %vm1617, %v1533, %v1609
      %v1626 = vsel %vm1618, %v1536, %v1610
      %v1627 = vmax.f32 %v1296, %v1619
      %v1628 = vmax.f32 %v1297, %v1620
      %v1629 = vmax.f32 %v1298, %v1621
      %v1630 = vmax.f32 %v1299, %v1622
      %v1631 = vmax.f32 %v1300, %v1623
      %v1632 = vmax.f32 %v1301, %v1624
      %v1633 = vmax.f32 %v1302, %v1625
      %v1634 = vmax.f32 %v1303, %v1626
      %v1635 = vadd.f32 %v1304, %v1619
      %v1636 = vadd.f32 %v1305, %v1620
      %v1637 = vadd.f32 %v1306, %v1621
      %v1638 = vadd.f32 %v1307, %v1622
      %v1639 = vadd.f32 %v1308, %v1623
      %v1640 = vadd.f32 %v1309, %v1624
      %v1641 = vadd.f32 %v1310, %v1625
      %v1642 = vadd.f32 %v1311, %v1626
      %s1643 = scalar_lea.vmem %s357, 6
      %v1644 = vld [vmem:[%s1643] sm:$0x3]
      %v1646 = vsel %vm485, %v1644, 0
      %1648 = vmatprep.subr.bf16.mxu0 0
      %1649 = vmatpush1.bf16.msra.mxu0 %v1646
      %1650 = vmatprep.subr.bf16.mxu0 0
      %1651 = vmatpush1.bf16.msra.mxu0 0
      %1652 = vmatprep.subr.bf16.mxu0 0
      %1653 = vmatpush1.bf16.msra.mxu0 0
      %1654 = vmatprep.subr.bf16.mxu0 0
      %1655 = vmatpush1.bf16.msra.mxu0 0
      %1656 = vmatprep.subr.bf16.mxu0 0
      %1657 = vmatpush1.bf16.msra.mxu0 0
      %1658 = vmatprep.subr.bf16.mxu0 0
      %1659 = vmatpush1.bf16.msra.mxu0 0
      %1660 = vmatprep.subr.bf16.mxu0 0
      %1661 = vmatpush1.bf16.msra.mxu0 0
      %1662 = vmatprep.subr.bf16.mxu0 0
      %1663 = vmatpush1.bf16.msra.mxu0 0
      %1664 = vmatprep.subr.bf16.mxu0 0
      %1665 = vmatpush1.bf16.msra.mxu0 0
      %1666 = vmatprep.subr.bf16.mxu0 0
      %1667 = vmatpush1.bf16.msra.mxu0 0
      %1668 = vmatprep.subr.bf16.mxu0 0
      %1669 = vmatpush1.bf16.msra.mxu0 0
      %1670 = vmatprep.subr.bf16.mxu0 0
      %1671 = vmatpush1.bf16.msra.mxu0 0
      %1672 = vmatprep.subr.bf16.mxu0 0
      %1673 = vmatpush1.bf16.msra.mxu0 0
      %1674 = vmatprep.subr.bf16.mxu0 0
      %1675 = vmatpush1.bf16.msra.mxu0 0
      %1676 = vmatprep.subr.bf16.mxu0 0
      %1677 = vmatpush1.bf16.msra.mxu0 0
      %1678 = vmatprep.subr.bf16.mxu0 0
      %1679 = vmatpush1.bf16.msra.mxu0 0
      %1680 = vmatprep.mubr.bf16.mxu0 0
      %1681 = vmatmul.mubr.bf16.gmra.mrb[0].mxu0 %v624
      %v1682 = vpop.f32.mrb[0].mxu0
      %v1683 = vadd.f32 %v524, %v1682
      %v1684 = vpop.f32.mrb[0].mxu0
      %v1685 = vpop.f32.mrb[0].mxu0
      %v1686 = vadd.f32 %v527, %v1685
      %v1687 = vpop.f32.mrb[0].mxu0
      %1688 = vmatprep.mubr.bf16.mxu0 0
      %1689 = vmatmul.mubr.bf16.gmra.mrb[0].mxu0 %v627
      %v1690 = vpop.f32.mrb[0].mxu0
      %v1691 = vadd.f32 %v532, %v1690
      %v1692 = vpop.f32.mrb[0].mxu0
      %v1693 = vpop.f32.mrb[0].mxu0
      %v1694 = vadd.f32 %v535, %v1693
      %v1695 = vpop.f32.mrb[0].mxu0
      %1696 = vmatprep.mubr.bf16.mxu0 0
      %1697 = vmatmul.mubr.bf16.gmra.mrb[0].mxu0 %v630
      %v1698 = vpop.f32.mrb[0].mxu0
      %v1699 = vadd.f32 %v540, %v1698
      %v1700 = vpop.f32.mrb[0].mxu0
      %v1701 = vpop.f32.mrb[0].mxu0
      %v1702 = vadd.f32 %v543, %v1701
      %v1703 = vpop.f32.mrb[0].mxu0
      %1704 = vmatprep.mubr.bf16.mxu0 0
      %1705 = vmatmul.mubr.bf16.gmra.mrb[0].mxu0 %v633
      %v1706 = vpop.f32.mrb[0].mxu0
      %v1707 = vadd.f32 %v548, %v1706
      %v1708 = vpop.f32.mrb[0].mxu0
      %v1709 = vpop.f32.mrb[0].mxu0
      %v1710 = vadd.f32 %v551, %v1709
      %v1711 = vpop.f32.mrb[0].mxu0
      %1712 = vdwg.mxu0
      %v1713 = vmin.f32 %v1683, 20.0
      %v1714 = vmin.f32 %v1686, 20.0
      %v1715 = vmin.f32 %v1691, 20.0
      %v1716 = vmin.f32 %v1694, 20.0
      %v1717 = vmin.f32 %v1699, 20.0
      %v1718 = vmin.f32 %v1702, 20.0
      %v1719 = vmin.f32 %v1707, 20.0
      %v1720 = vmin.f32 %v1710, 20.0
      %v1721 = vmul.f32 %v1713, 1.442695
      %v1722 = vpow.pop %v1721
      %v1723 = vmul.f32 %v1714, 1.442695
      %v1724 = vpow.pop %v1723
      %v1725 = vmul.f32 %v1715, 1.442695
      %v1726 = vpow.pop %v1725
      %v1727 = vmul.f32 %v1716, 1.442695
      %v1728 = vpow.pop %v1727
      %v1729 = vmul.f32 %v1717, 1.442695
      %v1730 = vpow.pop %v1729
      %v1731 = vmul.f32 %v1718, 1.442695
      %v1732 = vpow.pop %v1731
      %v1733 = vmul.f32 %v1719, 1.442695
      %v1734 = vpow.pop %v1733
      %v1735 = vmul.f32 %v1720, 1.442695
      %v1736 = vpow.pop %v1735
      %v1737 = vadd.f32 %v1722, 2.0
      %v1738 = vadd.f32 %v1724, 2.0
      %v1739 = vadd.f32 %v1726, 2.0
      %v1740 = vadd.f32 %v1728, 2.0
      %v1741 = vadd.f32 %v1730, 2.0
      %v1742 = vadd.f32 %v1732, 2.0
      %v1743 = vadd.f32 %v1734, 2.0
      %v1744 = vadd.f32 %v1736, 2.0
      %v1745 = vmul.f32 %v1722, %v1737
      %v1746 = vmul.f32 %v1724, %v1738
      %v1747 = vmul.f32 %v1726, %v1739
      %v1748 = vmul.f32 %v1728, %v1740
      %v1749 = vmul.f32 %v1730, %v1741
      %v1750 = vmul.f32 %v1732, %v1742
      %v1751 = vmul.f32 %v1734, %v1743
      %v1752 = vmul.f32 %v1736, %v1744
      %v1753 = vadd.f32 %v1745, 2.0
      %v1754 = vadd.f32 %v1746, 2.0
      %v1755 = vadd.f32 %v1747, 2.0
      %v1756 = vadd.f32 %v1748, 2.0
      %v1757 = vadd.f32 %v1749, 2.0
      %v1758 = vadd.f32 %v1750, 2.0
      %v1759 = vadd.f32 %v1751, 2.0
      %v1760 = vadd.f32 %v1752, 2.0
      %v1761 = vrcp.pop %v1753
      %v1762 = vrcp.pop %v1754
      %v1763 = vrcp.pop %v1755
      %v1764 = vrcp.pop %v1756
      %v1765 = vrcp.pop %v1757
      %v1766 = vrcp.pop %v1758
      %v1767 = vrcp.pop %v1759
      %v1768 = vrcp.pop %v1760
      %v1769 = vmul.f32 %v1745, %v1761
      %v1770 = vmul.f32 %v1746, %v1762
      %v1771 = vmul.f32 %v1747, %v1763
      %v1772 = vmul.f32 %v1748, %v1764
      %v1773 = vmul.f32 %v1749, %v1765
      %v1774 = vmul.f32 %v1750, %v1766
      %v1775 = vmul.f32 %v1751, %v1767
      %v1776 = vmul.f32 %v1752, %v1768
      %v1777 = vmul.f32 %v1683, %v1769
      %v1778 = vmul.f32 %v1686, %v1770
      %v1779 = vmul.f32 %v1691, %v1771
      %v1780 = vmul.f32 %v1694, %v1772
      %v1781 = vmul.f32 %v1699, %v1773
      %v1782 = vmul.f32 %v1702, %v1774
      %v1783 = vmul.f32 %v1707, %v1775
      %v1784 = vmul.f32 %v1710, %v1776
      %vm1785 = vcmp.gt.f32.partialorder %v1683, 20.0
      %vm1786 = vcmp.gt.f32.partialorder %v1686, 20.0
      %vm1787 = vcmp.gt.f32.partialorder %v1691, 20.0
      %vm1788 = vcmp.gt.f32.partialorder %v1694, 20.0
      %vm1789 = vcmp.gt.f32.partialorder %v1699, 20.0
      %vm1790 = vcmp.gt.f32.partialorder %v1702, 20.0
      %vm1791 = vcmp.gt.f32.partialorder %v1707, 20.0
      %vm1792 = vcmp.gt.f32.partialorder %v1710, 20.0
      %v1793 = vsel %vm1785, %v1683, %v1777
      %v1794 = vsel %vm1786, %v1686, %v1778
      %v1795 = vsel %vm1787, %v1691, %v1779
      %v1796 = vsel %vm1788, %v1694, %v1780
      %v1797 = vsel %vm1789, %v1699, %v1781
      %v1798 = vsel %vm1790, %v1702, %v1782
      %v1799 = vsel %vm1791, %v1707, %v1783
      %v1800 = vsel %vm1792, %v1710, %v1784
      %v1801 = vpack.c.bf16 %v1794, %v1793
      %v1802 = vpack.c.bf16 %v1796, %v1795
      %v1803 = vpack.c.bf16 %v1798, %v1797
      %v1804 = vpack.c.bf16 %v1800, %v1799
      %1805 = vmatprep.subr.bf16.mxu0 0
      %1806 = vmatpush1.bf16.msra.mxu0 %v1801
      %1807 = vmatprep.subr.bf16.mxu0 0
      %1808 = vmatpush1.bf16.msra.mxu0 %v1802
      %1809 = vmatprep.subr.bf16.mxu0 0
      %1810 = vmatpush1.bf16.msra.mxu0 %v1803
      %1811 = vmatprep.subr.bf16.mxu0 0
      %1812 = vmatpush1.bf16.msra.mxu0 %v1804
      %1813 = vmatprep.subr.bf16.mxu0 0
      %1814 = vmatpush1.bf16.msra.mxu0 0
      %1815 = vmatprep.subr.bf16.mxu0 0
      %1816 = vmatpush1.bf16.msra.mxu0 0
      %1817 = vmatprep.subr.bf16.mxu0 0
      %1818 = vmatpush1.bf16.msra.mxu0 0
      %1819 = vmatprep.subr.bf16.mxu0 0
      %1820 = vmatpush1.bf16.msra.mxu0 0
      %1821 = vmatprep.subr.bf16.mxu0 0
      %1822 = vmatpush1.bf16.msra.mxu0 0
      %1823 = vmatprep.subr.bf16.mxu0 0
      %1824 = vmatpush1.bf16.msra.mxu0 0
      %1825 = vmatprep.subr.bf16.mxu0 0
      %1826 = vmatpush1.bf16.msra.mxu0 0
      %1827 = vmatprep.subr.bf16.mxu0 0
      %1828 = vmatpush1.bf16.msra.mxu0 0
      %1829 = vmatprep.subr.bf16.mxu0 0
      %1830 = vmatpush1.bf16.msra.mxu0 0
      %1831 = vmatprep.subr.bf16.mxu0 0
      %1832 = vmatpush1.bf16.msra.mxu0 0
      %1833 = vmatprep.subr.bf16.mxu0 0
      %1834 = vmatpush1.bf16.msra.mxu0 0
      %1835 = vmatprep.subr.bf16.mxu0 0
      %1836 = vmatpush1.bf16.msra.mxu0 0
      %1837 = vmatprep.mubr.bf16.mxu0 0
      %1838 = vmatmul.mubr.bf16.gmra.mrb[0].mxu0 %v817
      %v1839 = vpop.f32.mrb[0].mxu0
      %v1840 = vadd.f32 %v565, %v1839
      %v1841 = vpop.f32.mrb[0].mxu0
      %v1842 = vpop.f32.mrb[0].mxu0
      %v1843 = vadd.f32 %v570, %v1842
      %v1844 = vpop.f32.mrb[0].mxu0
      %1845 = vmatprep.mubr.bf16.mxu0 0
      %1846 = vmatmul.mubr.bf16.gmra.mrb[0].mxu0 %v820
      %v1847 = vpop.f32.mrb[0].mxu0
      %v1848 = vadd.f32 %v575, %v1847
      %v1849 = vpop.f32.mrb[0].mxu0
      %v1850 = vpop.f32.mrb[0].mxu0
      %v1851 = vadd.f32 %v580, %v1850
      %v1852 = vpop.f32.mrb[0].mxu0
      %1853 = vmatprep.mubr.bf16.mxu0 0
      %1854 = vmatmul.mubr.bf16.gmra.mrb[0].mxu0 %v823
      %v1855 = vpop.f32.mrb[0].mxu0
      %v1856 = vadd.f32 %v585, %v1855
      %v1857 = vpop.f32.mrb[0].mxu0
      %v1858 = vpop.f32.mrb[0].mxu0
      %v1859 = vadd.f32 %v590, %v1858
      %v1860 = vpop.f32.mrb[0].mxu0
      %1861 = vmatprep.mubr.bf16.mxu0 0
      %1862 = vmatmul.mubr.bf16.gmra.mrb[0].mxu0 %v826
      %v1863 = vpop.f32.mrb[0].mxu0
      %v1864 = vadd.f32 %v595, %v1863
      %v1865 = vpop.f32.mrb[0].mxu0
      %v1866 = vpop.f32.mrb[0].mxu0
      %v1867 = vadd.f32 %v600, %v1866
      %v1868 = vpop.f32.mrb[0].mxu0
      %1869 = vdwg.mxu0
      %v1870 = vmin.f32 %v1840, 20.0
      %v1871 = vmin.f32 %v1843, 20.0
      %v1872 = vmin.f32 %v1848, 20.0
      %v1873 = vmin.f32 %v1851, 20.0
      %v1874 = vmin.f32 %v1856, 20.0
      %v1875 = vmin.f32 %v1859, 20.0
      %v1876 = vmin.f32 %v1864, 20.0
      %v1877 = vmin.f32 %v1867, 20.0
      %v1878 = vmul.f32 %v1870, 1.442695
      %v1879 = vpow.pop %v1878
      %v1880 = vmul.f32 %v1871, 1.442695
      %v1881 = vpow.pop %v1880
      %v1882 = vmul.f32 %v1872, 1.442695
      %v1883 = vpow.pop %v1882
      %v1884 = vmul.f32 %v1873, 1.442695
      %v1885 = vpow.pop %v1884
      %v1886 = vmul.f32 %v1874, 1.442695
      %v1887 = vpow.pop %v1886
      %v1888 = vmul.f32 %v1875, 1.442695
      %v1889 = vpow.pop %v1888
      %v1890 = vmul.f32 %v1876, 1.442695
      %v1891 = vpow.pop %v1890
      %v1892 = vmul.f32 %v1877, 1.442695
      %v1893 = vpow.pop %v1892
      %v1894 = vadd.f32 %v1879, 2.0
      %v1895 = vadd.f32 %v1881, 2.0
      %v1896 = vadd.f32 %v1883, 2.0
      %v1897 = vadd.f32 %v1885, 2.0
      %v1898 = vadd.f32 %v1887, 2.0
      %v1899 = vadd.f32 %v1889, 2.0
      %v1900 = vadd.f32 %v1891, 2.0
      %v1901 = vadd.f32 %v1893, 2.0
      %v1902 = vmul.f32 %v1879, %v1894
      %v1903 = vmul.f32 %v1881, %v1895
      %v1904 = vmul.f32 %v1883, %v1896
      %v1905 = vmul.f32 %v1885, %v1897
      %v1906 = vmul.f32 %v1887, %v1898
      %v1907 = vmul.f32 %v1889, %v1899
      %v1908 = vmul.f32 %v1891, %v1900
      %v1909 = vmul.f32 %v1893, %v1901
      %v1910 = vadd.f32 %v1902, 2.0
      %v1911 = vadd.f32 %v1903, 2.0
      %v1912 = vadd.f32 %v1904, 2.0
      %v1913 = vadd.f32 %v1905, 2.0
      %v1914 = vadd.f32 %v1906, 2.0
      %v1915 = vadd.f32 %v1907, 2.0
      %v1916 = vadd.f32 %v1908, 2.0
      %v1917 = vadd.f32 %v1909, 2.0
      %v1918 = vrcp.pop %v1910
      %v1919 = vrcp.pop %v1911
      %v1920 = vrcp.pop %v1912
      %v1921 = vrcp.pop %v1913
      %v1922 = vrcp.pop %v1914
      %v1923 = vrcp.pop %v1915
      %v1924 = vrcp.pop %v1916
      %v1925 = vrcp.pop %v1917
      %v1926 = vmul.f32 %v1902, %v1918
      %v1927 = vmul.f32 %v1903, %v1919
      %v1928 = vmul.f32 %v1904, %v1920
      %v1929 = vmul.f32 %v1905, %v1921
      %v1930 = vmul.f32 %v1906, %v1922
      %v1931 = vmul.f32 %v1907, %v1923
      %v1932 = vmul.f32 %v1908, %v1924
      %v1933 = vmul.f32 %v1909, %v1925
      %v1934 = vmul.f32 %v1840, %v1926
      %v1935 = vmul.f32 %v1843, %v1927
      %v1936 = vmul.f32 %v1848, %v1928
      %v1937 = vmul.f32 %v1851, %v1929
      %v1938 = vmul.f32 %v1856, %v1930
      %v1939 = vmul.f32 %v1859, %v1931
      %v1940 = vmul.f32 %v1864, %v1932
      %v1941 = vmul.f32 %v1867, %v1933
      %vm1942 = vcmp.gt.f32.partialorder %v1840, 20.0
      %vm1943 = vcmp.gt.f32.partialorder %v1843, 20.0
      %vm1944 = vcmp.gt.f32.partialorder %v1848, 20.0
      %vm1945 = vcmp.gt.f32.partialorder %v1851, 20.0
      %vm1946 = vcmp.gt.f32.partialorder %v1856, 20.0
      %vm1947 = vcmp.gt.f32.partialorder %v1859, 20.0
      %vm1948 = vcmp.gt.f32.partialorder %v1864, 20.0
      %vm1949 = vcmp.gt.f32.partialorder %v1867, 20.0
      %v1950 = vsel %vm1942, %v1840, %v1934
      %v1951 = vsel %vm1943, %v1843, %v1935
      %v1952 = vsel %vm1944, %v1848, %v1936
      %v1953 = vsel %vm1945, %v1851, %v1937
      %v1954 = vsel %vm1946, %v1856, %v1938
      %v1955 = vsel %vm1947, %v1859, %v1939
      %v1956 = vsel %vm1948, %v1864, %v1940
      %v1957 = vsel %vm1949, %v1867, %v1941
      %v1958 = vmax.f32 %v1627, %v1950
      %v1959 = vmax.f32 %v1628, %v1951
      %v1960 = vmax.f32 %v1629, %v1952
      %v1961 = vmax.f32 %v1630, %v1953
      %v1962 = vmax.f32 %v1631, %v1954
      %v1963 = vmax.f32 %v1632, %v1955
      %v1964 = vmax.f32 %v1633, %v1956
      %v1965 = vmax.f32 %v1634, %v1957
      %v1966 = vadd.f32 %v1635, %v1950
      %v1967 = vadd.f32 %v1636, %v1951
      %v1968 = vadd.f32 %v1637, %v1952
      %v1969 = vadd.f32 %v1638, %v1953
      %v1970 = vadd.f32 %v1639, %v1954
      %v1971 = vadd.f32 %v1640, %v1955
      %v1972 = vadd.f32 %v1641, %v1956
      %v1973 = vadd.f32 %v1642, %v1957
      %s1974 = scalar_lea.vmem %s357, 8
      %v1975 = vld [vmem:[%s1974] sm:$0x3]
      %v1977 = vsel %vm485, %v1975, 0
      %1979 = vmatprep.subr.bf16.mxu0 0
      %1980 = vmatpush1.bf16.msra.mxu0 %v1977
      %1981 = vmatprep.subr.bf16.mxu0 0
      %1982 = vmatpush1.bf16.msra.mxu0 0
      %1983 = vmatprep.subr.bf16.mxu0 0
      %1984 = vmatpush1.bf16.msra.mxu0 0
      %1985 = vmatprep.subr.bf16.mxu0 0
      %1986 = vmatpush1.bf16.msra.mxu0 0
      %1987 = vmatprep.subr.bf16.mxu0 0
      %1988 = vmatpush1.bf16.msra.mxu0 0
      %1989 = vmatprep.subr.bf16.mxu0 0
      %1990 = vmatpush1.bf16.msra.mxu0 0
      %1991 = vmatprep.subr.bf16.mxu0 0
      %1992 = vmatpush1.bf16.msra.mxu0 0
      %1993 = vmatprep.subr.bf16.mxu0 0
      %1994 = vmatpush1.bf16.msra.mxu0 0
      %1995 = vmatprep.subr.bf16.mxu0 0
      %1996 = vmatpush1.bf16.msra.mxu0 0
      %1997 = vmatprep.subr.bf16.mxu0 0
      %1998 = vmatpush1.bf16.msra.mxu0 0
      %1999 = vmatprep.subr.bf16.mxu0 0
      %2000 = vmatpush1.bf16.msra.mxu0 0
      %2001 = vmatprep.subr.bf16.mxu0 0
      %2002 = vmatpush1.bf16.msra.mxu0 0
      %2003 = vmatprep.subr.bf16.mxu0 0
      %2004 = vmatpush1.bf16.msra.mxu0 0
      %2005 = vmatprep.subr.bf16.mxu0 0
      %2006 = vmatpush1.bf16.msra.mxu0 0
      %2007 = vmatprep.subr.bf16.mxu0 0
      %2008 = vmatpush1.bf16.msra.mxu0 0
      %2009 = vmatprep.subr.bf16.mxu0 0
      %2010 = vmatpush1.bf16.msra.mxu0 0
      %2011 = vmatprep.mubr.bf16.mxu0 0
      %2012 = vmatmul.mubr.bf16.gmra.mrb[0].mxu0 %v624
      %v2013 = vpop.f32.mrb[0].mxu0
      %v2014 = vadd.f32 %v524, %v2013
      %v2015 = vpop.f32.mrb[0].mxu0
      %v2016 = vpop.f32.mrb[0].mxu0
      %v2017 = vadd.f32 %v527, %v2016
      %v2018 = vpop.f32.mrb[0].mxu0
      %2019 = vmatprep.mubr.bf16.mxu0 0
      %2020 = vmatmul.mubr.bf16.gmra.mrb[0].mxu0 %v627
      %v2021 = vpop.f32.mrb[0].mxu0
      %v2022 = vadd.f32 %v532, %v2021
      %v2023 = vpop.f32.mrb[0].mxu0
      %v2024 = vpop.f32.mrb[0].mxu0
      %v2025 = vadd.f32 %v535, %v2024
      %v2026 = vpop.f32.mrb[0].mxu0
      %2027 = vmatprep.mubr.bf16.mxu0 0
      %2028 = vmatmul.mubr.bf16.gmra.mrb[0].mxu0 %v630
      %v2029 = vpop.f32.mrb[0].mxu0
      %v2030 = vadd.f32 %v540, %v2029
      %v2031 = vpop.f32.mrb[0].mxu0
      %v2032 = vpop.f32.mrb[0].mxu0
      %v2033 = vadd.f32 %v543, %v2032
      %v2034 = vpop.f32.mrb[0].mxu0
      %2035 = vmatprep.mubr.bf16.mxu0 0
      %2036 = vmatmul.mubr.bf16.gmra.mrb[0].mxu0 %v633
      %v2037 = vpop.f32.mrb[0].mxu0
      %v2038 = vadd.f32 %v548, %v2037
      %v2039 = vpop.f32.mrb[0].mxu0
      %v2040 = vpop.f32.mrb[0].mxu0
      %v2041 = vadd.f32 %v551, %v2040
      %v2042 = vpop.f32.mrb[0].mxu0
      %2043 = vdwg.mxu0
      %v2044 = vmin.f32 %v2014, 20.0
      %v2045 = vmin.f32 %v2017, 20.0
      %v2046 = vmin.f32 %v2022, 20.0
      %v2047 = vmin.f32 %v2025, 20.0
      %v2048 = vmin.f32 %v2030, 20.0
      %v2049 = vmin.f32 %v2033, 20.0
      %v2050 = vmin.f32 %v2038, 20.0
      %v2051 = vmin.f32 %v2041, 20.0
      %v2052 = vmul.f32 %v2044, 1.442695
      %v2053 = vpow.pop %v2052
      %v2054 = vmul.f32 %v2045, 1.442695
      %v2055 = vpow.pop %v2054
      %v2056 = vmul.f32 %v2046, 1.442695
      %v2057 = vpow.pop %v2056
      %v2058 = vmul.f32 %v2047, 1.442695
      %v2059 = vpow.pop %v2058
      %v2060 = vmul.f32 %v2048, 1.442695
      %v2061 = vpow.pop %v2060
      %v2062 = vmul.f32 %v2049, 1.442695
      %v2063 = vpow.pop %v2062
      %v2064 = vmul.f32 %v2050, 1.442695
      %v2065 = vpow.pop %v2064
      %v2066 = vmul.f32 %v2051, 1.442695
      %v2067 = vpow.pop %v2066
      %v2068 = vadd.f32 %v2053, 2.0
      %v2069 = vadd.f32 %v2055, 2.0
      %v2070 = vadd.f32 %v2057, 2.0
      %v2071 = vadd.f32 %v2059, 2.0
      %v2072 = vadd.f32 %v2061, 2.0
      %v2073 = vadd.f32 %v2063, 2.0
      %v2074 = vadd.f32 %v2065, 2.0
      %v2075 = vadd.f32 %v2067, 2.0
      %v2076 = vmul.f32 %v2053, %v2068
      %v2077 = vmul.f32 %v2055, %v2069
      %v2078 = vmul.f32 %v2057, %v2070
      %v2079 = vmul.f32 %v2059, %v2071
      %v2080 = vmul.f32 %v2061, %v2072
      %v2081 = vmul.f32 %v2063, %v2073
      %v2082 = vmul.f32 %v2065, %v2074
      %v2083 = vmul.f32 %v2067, %v2075
      %v2084 = vadd.f32 %v2076, 2.0
      %v2085 = vadd.f32 %v2077, 2.0
      %v2086 = vadd.f32 %v2078, 2.0
      %v2087 = vadd.f32 %v2079, 2.0
      %v2088 = vadd.f32 %v2080, 2.0
      %v2089 = vadd.f32 %v2081, 2.0
      %v2090 = vadd.f32 %v2082, 2.0
      %v2091 = vadd.f32 %v2083, 2.0
      %v2092 = vrcp.pop %v2084
      %v2093 = vrcp.pop %v2085
      %v2094 = vrcp.pop %v2086
      %v2095 = vrcp.pop %v2087
      %v2096 = vrcp.pop %v2088
      %v2097 = vrcp.pop %v2089
      %v2098 = vrcp.pop %v2090
      %v2099 = vrcp.pop %v2091
      %v2100 = vmul.f32 %v2076, %v2092
      %v2101 = vmul.f32 %v2077, %v2093
      %v2102 = vmul.f32 %v2078, %v2094
      %v2103 = vmul.f32 %v2079, %v2095
      %v2104 = vmul.f32 %v2080, %v2096
      %v2105 = vmul.f32 %v2081, %v2097
      %v2106 = vmul.f32 %v2082, %v2098
      %v2107 = vmul.f32 %v2083, %v2099
      %v2108 = vmul.f32 %v2014, %v2100
      %v2109 = vmul.f32 %v2017, %v2101
      %v2110 = vmul.f32 %v2022, %v2102
      %v2111 = vmul.f32 %v2025, %v2103
      %v2112 = vmul.f32 %v2030, %v2104
      %v2113 = vmul.f32 %v2033, %v2105
      %v2114 = vmul.f32 %v2038, %v2106
      %v2115 = vmul.f32 %v2041, %v2107
      %vm2116 = vcmp.gt.f32.partialorder %v2014, 20.0
      %vm2117 = vcmp.gt.f32.partialorder %v2017, 20.0
      %vm2118 = vcmp.gt.f32.partialorder %v2022, 20.0
      %vm2119 = vcmp.gt.f32.partialorder %v2025, 20.0
      %vm2120 = vcmp.gt.f32.partialorder %v2030, 20.0
      %vm2121 = vcmp.gt.f32.partialorder %v2033, 20.0
      %vm2122 = vcmp.gt.f32.partialorder %v2038, 20.0
      %vm2123 = vcmp.gt.f32.partialorder %v2041, 20.0
      %v2124 = vsel %vm2116, %v2014, %v2108
      %v2125 = vsel %vm2117, %v2017, %v2109
      %v2126 = vsel %vm2118, %v2022, %v2110
      %v2127 = vsel %vm2119, %v2025, %v2111
      %v2128 = vsel %vm2120, %v2030, %v2112
      %v2129 = vsel %vm2121, %v2033, %v2113
      %v2130 = vsel %vm2122, %v2038, %v2114
      %v2131 = vsel %vm2123, %v2041, %v2115
      %v2132 = vpack.c.bf16 %v2125, %v2124
      %v2133 = vpack.c.bf16 %v2127, %v2126
      %v2134 = vpack.c.bf16 %v2129, %v2128
      %v2135 = vpack.c.bf16 %v2131, %v2130
      %2136 = vmatprep.subr.bf16.mxu0 0
      %2137 = vmatpush1.bf16.msra.mxu0 %v2132
      %2138 = vmatprep.subr.bf16.mxu0 0
      %2139 = vmatpush1.bf16.msra.mxu0 %v2133
      %2140 = vmatprep.subr.bf16.mxu0 0
      %2141 = vmatpush1.bf16.msra.mxu0 %v2134
      %2142 = vmatprep.subr.bf16.mxu0 0
      %2143 = vmatpush1.bf16.msra.mxu0 %v2135
      %2144 = vmatprep.subr.bf16.mxu0 0
      %2145 = vmatpush1.bf16.msra.mxu0 0
      %2146 = vmatprep.subr.bf16.mxu0 0
      %2147 = vmatpush1.bf16.msra.mxu0 0
      %2148 = vmatprep.subr.bf16.mxu0 0
      %2149 = vmatpush1.bf16.msra.mxu0 0
      %2150 = vmatprep.subr.bf16.mxu0 0
      %2151 = vmatpush1.bf16.msra.mxu0 0
      %2152 = vmatprep.subr.bf16.mxu0 0
      %2153 = vmatpush1.bf16.msra.mxu0 0
      %2154 = vmatprep.subr.bf16.mxu0 0
      %2155 = vmatpush1.bf16.msra.mxu0 0
      %2156 = vmatprep.subr.bf16.mxu0 0
      %2157 = vmatpush1.bf16.msra.mxu0 0
      %2158 = vmatprep.subr.bf16.mxu0 0
      %2159 = vmatpush1.bf16.msra.mxu0 0
      %2160 = vmatprep.subr.bf16.mxu0 0
      %2161 = vmatpush1.bf16.msra.mxu0 0
      %2162 = vmatprep.subr.bf16.mxu0 0
      %2163 = vmatpush1.bf16.msra.mxu0 0
      %2164 = vmatprep.subr.bf16.mxu0 0
      %2165 = vmatpush1.bf16.msra.mxu0 0
      %2166 = vmatprep.subr.bf16.mxu0 0
      %2167 = vmatpush1.bf16.msra.mxu0 0
      %2168 = vmatprep.mubr.bf16.mxu0 0
      %2169 = vmatmul.mubr.bf16.gmra.mrb[0].mxu0 %v817
      %v2170 = vpop.f32.mrb[0].mxu0
      %v2171 = vadd.f32 %v565, %v2170
      %v2172 = vpop.f32.mrb[0].mxu0
      %v2173 = vpop.f32.mrb[0].mxu0
      %v2174 = vadd.f32 %v570, %v2173
      %v2175 = vpop.f32.mrb[0].mxu0
      %2176 = vmatprep.mubr.bf16.mxu0 0
      %2177 = vmatmul.mubr.bf16.gmra.mrb[0].mxu0 %v820
      %v2178 = vpop.f32.mrb[0].mxu0
      %v2179 = vadd.f32 %v575, %v2178
      %v2180 = vpop.f32.mrb[0].mxu0
      %v2181 = vpop.f32.mrb[0].mxu0
      %v2182 = vadd.f32 %v580, %v2181
      %v2183 = vpop.f32.mrb[0].mxu0
      %2184 = vmatprep.mubr.bf16.mxu0 0
      %2185 = vmatmul.mubr.bf16.gmra.mrb[0].mxu0 %v823
      %v2186 = vpop.f32.mrb[0].mxu0
      %v2187 = vadd.f32 %v585, %v2186
      %v2188 = vpop.f32.mrb[0].mxu0
      %v2189 = vpop.f32.mrb[0].mxu0
      %v2190 = vadd.f32 %v590, %v2189
      %v2191 = vpop.f32.mrb[0].mxu0
      %2192 = vmatprep.mubr.bf16.mxu0 0
      %2193 = vmatmul.mubr.bf16.gmra.mrb[0].mxu0 %v826
      %v2194 = vpop.f32.mrb[0].mxu0
      %v2195 = vadd.f32 %v595, %v2194
      %v2196 = vpop.f32.mrb[0].mxu0
      %v2197 = vpop.f32.mrb[0].mxu0
      %v2198 = vadd.f32 %v600, %v2197
      %v2199 = vpop.f32.mrb[0].mxu0
      %2200 = vdwg.mxu0
      %v2201 = vmin.f32 %v2171, 20.0
      %v2202 = vmin.f32 %v2174, 20.0
      %v2203 = vmin.f32 %v2179, 20.0
      %v2204 = vmin.f32 %v2182, 20.0
      %v2205 = vmin.f32 %v2187, 20.0
      %v2206 = vmin.f32 %v2190, 20.0
      %v2207 = vmin.f32 %v2195, 20.0
      %v2208 = vmin.f32 %v2198, 20.0
      %v2209 = vmul.f32 %v2201, 1.442695
      %v2210 = vpow.pop %v2209
      %v2211 = vmul.f32 %v2202, 1.442695
      %v2212 = vpow.pop %v2211
      %v2213 = vmul.f32 %v2203, 1.442695
      %v2214 = vpow.pop %v2213
      %v2215 = vmul.f32 %v2204, 1.442695
      %v2216 = vpow.pop %v2215
      %v2217 = vmul.f32 %v2205, 1.442695
      %v2218 = vpow.pop %v2217
      %v2219 = vmul.f32 %v2206, 1.442695
      %v2220 = vpow.pop %v2219
      %v2221 = vmul.f32 %v2207, 1.442695
      %v2222 = vpow.pop %v2221
      %v2223 = vmul.f32 %v2208, 1.442695
      %v2224 = vpow.pop %v2223
      %v2225 = vadd.f32 %v2210, 2.0
      %v2226 = vadd.f32 %v2212, 2.0
      %v2227 = vadd.f32 %v2214, 2.0
      %v2228 = vadd.f32 %v2216, 2.0
      %v2229 = vadd.f32 %v2218, 2.0
      %v2230 = vadd.f32 %v2220, 2.0
      %v2231 = vadd.f32 %v2222, 2.0
      %v2232 = vadd.f32 %v2224, 2.0
      %v2233 = vmul.f32 %v2210, %v2225
      %v2234 = vmul.f32 %v2212, %v2226
      %v2235 = vmul.f32 %v2214, %v2227
      %v2236 = vmul.f32 %v2216, %v2228
      %v2237 = vmul.f32 %v2218, %v2229
      %v2238 = vmul.f32 %v2220, %v2230
      %v2239 = vmul.f32 %v2222, %v2231
      %v2240 = vmul.f32 %v2224, %v2232
      %v2241 = vadd.f32 %v2233, 2.0
      %v2242 = vadd.f32 %v2234, 2.0
      %v2243 = vadd.f32 %v2235, 2.0
      %v2244 = vadd.f32 %v2236, 2.0
      %v2245 = vadd.f32 %v2237, 2.0
      %v2246 = vadd.f32 %v2238, 2.0
      %v2247 = vadd.f32 %v2239, 2.0
      %v2248 = vadd.f32 %v2240, 2.0
      %v2249 = vrcp.pop %v2241
      %v2250 = vrcp.pop %v2242
      %v2251 = vrcp.pop %v2243
      %v2252 = vrcp.pop %v2244
      %v2253 = vrcp.pop %v2245
      %v2254 = vrcp.pop %v2246
      %v2255 = vrcp.pop %v2247
      %v2256 = vrcp.pop %v2248
      %v2257 = vmul.f32 %v2233, %v2249
      %v2258 = vmul.f32 %v2234, %v2250
      %v2259 = vmul.f32 %v2235, %v2251
      %v2260 = vmul.f32 %v2236, %v2252
      %v2261 = vmul.f32 %v2237, %v2253
      %v2262 = vmul.f32 %v2238, %v2254
      %v2263 = vmul.f32 %v2239, %v2255
      %v2264 = vmul.f32 %v2240, %v2256
      %v2265 = vmul.f32 %v2171, %v2257
      %v2266 = vmul.f32 %v2174, %v2258
      %v2267 = vmul.f32 %v2179, %v2259
      %v2268 = vmul.f32 %v2182, %v2260
      %v2269 = vmul.f32 %v2187, %v2261
      %v2270 = vmul.f32 %v2190, %v2262
      %v2271 = vmul.f32 %v2195, %v2263
      %v2272 = vmul.f32 %v2198, %v2264
      %vm2273 = vcmp.gt.f32.partialorder %v2171, 20.0
      %vm2274 = vcmp.gt.f32.partialorder %v2174, 20.0
      %vm2275 = vcmp.gt.f32.partialorder %v2179, 20.0
      %vm2276 = vcmp.gt.f32.partialorder %v2182, 20.0
      %vm2277 = vcmp.gt.f32.partialorder %v2187, 20.0
      %vm2278 = vcmp.gt.f32.partialorder %v2190, 20.0
      %vm2279 = vcmp.gt.f32.partialorder %v2195, 20.0
      %vm2280 = vcmp.gt.f32.partialorder %v2198, 20.0
      %v2281 = vsel %vm2273, %v2171, %v2265
      %v2282 = vsel %vm2274, %v2174, %v2266
      %v2283 = vsel %vm2275, %v2179, %v2267
      %v2284 = vsel %vm2276, %v2182, %v2268
      %v2285 = vsel %vm2277, %v2187, %v2269
      %v2286 = vsel %vm2278, %v2190, %v2270
      %v2287 = vsel %vm2279, %v2195, %v2271
      %v2288 = vsel %vm2280, %v2198, %v2272
      %v2289 = vmax.f32 %v1958, %v2281
      %v2290 = vmax.f32 %v1959, %v2282
      %v2291 = vmax.f32 %v1960, %v2283
      %v2292 = vmax.f32 %v1961, %v2284
      %v2293 = vmax.f32 %v1962, %v2285
      %v2294 = vmax.f32 %v1963, %v2286
      %v2295 = vmax.f32 %v1964, %v2287
      %v2296 = vmax.f32 %v1965, %v2288
      %v2297 = vadd.f32 %v1966, %v2281
      %v2298 = vadd.f32 %v1967, %v2282
      %v2299 = vadd.f32 %v1968, %v2283
      %v2300 = vadd.f32 %v1969, %v2284
      %v2301 = vadd.f32 %v1970, %v2285
      %v2302 = vadd.f32 %v1971, %v2286
      %v2303 = vadd.f32 %v1972, %v2287
      %v2304 = vadd.f32 %v1973, %v2288
      %s2305 = scalar_lea.vmem %s357, 10
      %v2306 = vld [vmem:[%s2305] sm:$0x3]
      %v2308 = vsel %vm485, %v2306, 0
      %2310 = vmatprep.subr.bf16.mxu0 0
      %2311 = vmatpush1.bf16.msra.mxu0 %v2308
      %2312 = vmatprep.subr.bf16.mxu0 0
      %2313 = vmatpush1.bf16.msra.mxu0 0
      %2314 = vmatprep.subr.bf16.mxu0 0
      %2315 = vmatpush1.bf16.msra.mxu0 0
      %2316 = vmatprep.subr.bf16.mxu0 0
      %2317 = vmatpush1.bf16.msra.mxu0 0
      %2318 = vmatprep.subr.bf16.mxu0 0
      %2319 = vmatpush1.bf16.msra.mxu0 0
      %2320 = vmatprep.subr.bf16.mxu0 0
      %2321 = vmatpush1.bf16.msra.mxu0 0
      %2322 = vmatprep.subr.bf16.mxu0 0
      %2323 = vmatpush1.bf16.msra.mxu0 0
      %2324 = vmatprep.subr.bf16.mxu0 0
      %2325 = vmatpush1.bf16.msra.mxu0 0
      %2326 = vmatprep.subr.bf16.mxu0 0
      %2327 = vmatpush1.bf16.msra.mxu0 0
      %2328 = vmatprep.subr.bf16.mxu0 0
      %2329 = vmatpush1.bf16.msra.mxu0 0
      %2330 = vmatprep.subr.bf16.mxu0 0
      %2331 = vmatpush1.bf16.msra.mxu0 0
      %2332 = vmatprep.subr.bf16.mxu0 0
      %2333 = vmatpush1.bf16.msra.mxu0 0
      %2334 = vmatprep.subr.bf16.mxu0 0
      %2335 = vmatpush1.bf16.msra.mxu0 0
      %2336 = vmatprep.subr.bf16.mxu0 0
      %2337 = vmatpush1.bf16.msra.mxu0 0
      %2338 = vmatprep.subr.bf16.mxu0 0
      %2339 = vmatpush1.bf16.msra.mxu0 0
      %2340 = vmatprep.subr.bf16.mxu0 0
      %2341 = vmatpush1.bf16.msra.mxu0 0
      %2342 = vmatprep.mubr.bf16.mxu0 0
      %2343 = vmatmul.mubr.bf16.gmra.mrb[0].mxu0 %v624
      %v2344 = vpop.f32.mrb[0].mxu0
      %v2345 = vadd.f32 %v524, %v2344
      %v2346 = vpop.f32.mrb[0].mxu0
      %v2347 = vpop.f32.mrb[0].mxu0
      %v2348 = vadd.f32 %v527, %v2347
      %v2349 = vpop.f32.mrb[0].mxu0
      %2350 = vmatprep.mubr.bf16.mxu0 0
      %2351 = vmatmul.mubr.bf16.gmra.mrb[0].mxu0 %v627
      %v2352 = vpop.f32.mrb[0].mxu0
      %v2353 = vadd.f32 %v532, %v2352
      %v2354 = vpop.f32.mrb[0].mxu0
      %v2355 = vpop.f32.mrb[0].mxu0
      %v2356 = vadd.f32 %v535, %v2355
      %v2357 = vpop.f32.mrb[0].mxu0
      %2358 = vmatprep.mubr.bf16.mxu0 0
      %2359 = vmatmul.mubr.bf16.gmra.mrb[0].mxu0 %v630
      %v2360 = vpop.f32.mrb[0].mxu0
      %v2361 = vadd.f32 %v540, %v2360
      %v2362 = vpop.f32.mrb[0].mxu0
      %v2363 = vpop.f32.mrb[0].mxu0
      %v2364 = vadd.f32 %v543, %v2363
      %v2365 = vpop.f32.mrb[0].mxu0
      %2366 = vmatprep.mubr.bf16.mxu0 0
      %2367 = vmatmul.mubr.bf16.gmra.mrb[0].mxu0 %v633
      %v2368 = vpop.f32.mrb[0].mxu0
      %v2369 = vadd.f32 %v548, %v2368
      %v2370 = vpop.f32.mrb[0].mxu0
      %v2371 = vpop.f32.mrb[0].mxu0
      %v2372 = vadd.f32 %v551, %v2371
      %v2373 = vpop.f32.mrb[0].mxu0
      %2374 = vdwg.mxu0
      %v2375 = vmin.f32 %v2345, 20.0
      %v2376 = vmin.f32 %v2348, 20.0
      %v2377 = vmin.f32 %v2353, 20.0
      %v2378 = vmin.f32 %v2356, 20.0
      %v2379 = vmin.f32 %v2361, 20.0
      %v2380 = vmin.f32 %v2364, 20.0
      %v2381 = vmin.f32 %v2369, 20.0
      %v2382 = vmin.f32 %v2372, 20.0
      %v2383 = vmul.f32 %v2375, 1.442695
      %v2384 = vpow.pop %v2383
      %v2385 = vmul.f32 %v2376, 1.442695
      %v2386 = vpow.pop %v2385
      %v2387 = vmul.f32 %v2377, 1.442695
      %v2388 = vpow.pop %v2387
      %v2389 = vmul.f32 %v2378, 1.442695
      %v2390 = vpow.pop %v2389
      %v2391 = vmul.f32 %v2379, 1.442695
      %v2392 = vpow.pop %v2391
      %v2393 = vmul.f32 %v2380, 1.442695
      %v2394 = vpow.pop %v2393
      %v2395 = vmul.f32 %v2381, 1.442695
      %v2396 = vpow.pop %v2395
      %v2397 = vmul.f32 %v2382, 1.442695
      %v2398 = vpow.pop %v2397
      %v2399 = vadd.f32 %v2384, 2.0
      %v2400 = vadd.f32 %v2386, 2.0
      %v2401 = vadd.f32 %v2388, 2.0
      %v2402 = vadd.f32 %v2390, 2.0
      %v2403 = vadd.f32 %v2392, 2.0
      %v2404 = vadd.f32 %v2394, 2.0
      %v2405 = vadd.f32 %v2396, 2.0
      %v2406 = vadd.f32 %v2398, 2.0
      %v2407 = vmul.f32 %v2384, %v2399
      %v2408 = vmul.f32 %v2386, %v2400
      %v2409 = vmul.f32 %v2388, %v2401
      %v2410 = vmul.f32 %v2390, %v2402
      %v2411 = vmul.f32 %v2392, %v2403
      %v2412 = vmul.f32 %v2394, %v2404
      %v2413 = vmul.f32 %v2396, %v2405
      %v2414 = vmul.f32 %v2398, %v2406
      %v2415 = vadd.f32 %v2407, 2.0
      %v2416 = vadd.f32 %v2408, 2.0
      %v2417 = vadd.f32 %v2409, 2.0
      %v2418 = vadd.f32 %v2410, 2.0
      %v2419 = vadd.f32 %v2411, 2.0
      %v2420 = vadd.f32 %v2412, 2.0
      %v2421 = vadd.f32 %v2413, 2.0
      %v2422 = vadd.f32 %v2414, 2.0
      %v2423 = vrcp.pop %v2415
      %v2424 = vrcp.pop %v2416
      %v2425 = vrcp.pop %v2417
      %v2426 = vrcp.pop %v2418
      %v2427 = vrcp.pop %v2419
      %v2428 = vrcp.pop %v2420
      %v2429 = vrcp.pop %v2421
      %v2430 = vrcp.pop %v2422
      %v2431 = vmul.f32 %v2407, %v2423
      %v2432 = vmul.f32 %v2408, %v2424
      %v2433 = vmul.f32 %v2409, %v2425
      %v2434 = vmul.f32 %v2410, %v2426
      %v2435 = vmul.f32 %v2411, %v2427
      %v2436 = vmul.f32 %v2412, %v2428
      %v2437 = vmul.f32 %v2413, %v2429
      %v2438 = vmul.f32 %v2414, %v2430
      %v2439 = vmul.f32 %v2345, %v2431
      %v2440 = vmul.f32 %v2348, %v2432
      %v2441 = vmul.f32 %v2353, %v2433
      %v2442 = vmul.f32 %v2356, %v2434
      %v2443 = vmul.f32 %v2361, %v2435
      %v2444 = vmul.f32 %v2364, %v2436
      %v2445 = vmul.f32 %v2369, %v2437
      %v2446 = vmul.f32 %v2372, %v2438
      %vm2447 = vcmp.gt.f32.partialorder %v2345, 20.0
      %vm2448 = vcmp.gt.f32.partialorder %v2348, 20.0
      %vm2449 = vcmp.gt.f32.partialorder %v2353, 20.0
      %vm2450 = vcmp.gt.f32.partialorder %v2356, 20.0
      %vm2451 = vcmp.gt.f32.partialorder %v2361, 20.0
      %vm2452 = vcmp.gt.f32.partialorder %v2364, 20.0
      %vm2453 = vcmp.gt.f32.partialorder %v2369, 20.0
      %vm2454 = vcmp.gt.f32.partialorder %v2372, 20.0
      %v2455 = vsel %vm2447, %v2345, %v2439
      %v2456 = vsel %vm2448, %v2348, %v2440
      %v2457 = vsel %vm2449, %v2353, %v2441
      %v2458 = vsel %vm2450, %v2356, %v2442
      %v2459 = vsel %vm2451, %v2361, %v2443
      %v2460 = vsel %vm2452, %v2364, %v2444
      %v2461 = vsel %vm2453, %v2369, %v2445
      %v2462 = vsel %vm2454, %v2372, %v2446
      %v2463 = vpack.c.bf16 %v2456, %v2455
      %v2464 = vpack.c.bf16 %v2458, %v2457
      %v2465 = vpack.c.bf16 %v2460, %v2459
      %v2466 = vpack.c.bf16 %v2462, %v2461
      %2467 = vmatprep.subr.bf16.mxu0 0
      %2468 = vmatpush1.bf16.msra.mxu0 %v2463
      %2469 = vmatprep.subr.bf16.mxu0 0
      %2470 = vmatpush1.bf16.msra.mxu0 %v2464
      %2471 = vmatprep.subr.bf16.mxu0 0
      %2472 = vmatpush1.bf16.msra.mxu0 %v2465
      %2473 = vmatprep.subr.bf16.mxu0 0
      %2474 = vmatpush1.bf16.msra.mxu0 %v2466
      %2475 = vmatprep.subr.bf16.mxu0 0
      %2476 = vmatpush1.bf16.msra.mxu0 0
      %2477 = vmatprep.subr.bf16.mxu0 0
      %2478 = vmatpush1.bf16.msra.mxu0 0
      %2479 = vmatprep.subr.bf16.mxu0 0
      %2480 = vmatpush1.bf16.msra.mxu0 0
      %2481 = vmatprep.subr.bf16.mxu0 0
      %2482 = vmatpush1.bf16.msra.mxu0 0
      %2483 = vmatprep.subr.bf16.mxu0 0
      %2484 = vmatpush1.bf16.msra.mxu0 0
      %2485 = vmatprep.subr.bf16.mxu0 0
      %2486 = vmatpush1.bf16.msra.mxu0 0
      %2487 = vmatprep.subr.bf16.mxu0 0
      %2488 = vmatpush1.bf16.msra.mxu0 0
      %2489 = vmatprep.subr.bf16.mxu0 0
      %2490 = vmatpush1.bf16.msra.mxu0 0
      %2491 = vmatprep.subr.bf16.mxu0 0
      %2492 = vmatpush1.bf16.msra.mxu0 0
      %2493 = vmatprep.subr.bf16.mxu0 0
      %2494 = vmatpush1.bf16.msra.mxu0 0
      %2495 = vmatprep.subr.bf16.mxu0 0
      %2496 = vmatpush1.bf16.msra.mxu0 0
      %2497 = vmatprep.subr.bf16.mxu0 0
      %2498 = vmatpush1.bf16.msra.mxu0 0
      %2499 = vmatprep.mubr.bf16.mxu0 0
      %2500 = vmatmul.mubr.bf16.gmra.mrb[0].mxu0 %v817
      %v2501 = vpop.f32.mrb[0].mxu0
      %v2502 = vadd.f32 %v565, %v2501
      %v2503 = vpop.f32.mrb[0].mxu0
      %v2504 = vpop.f32.mrb[0].mxu0
      %v2505 = vadd.f32 %v570, %v2504
      %v2506 = vpop.f32.mrb[0].mxu0
      %2507 = vmatprep.mubr.bf16.mxu0 0
      %2508 = vmatmul.mubr.bf16.gmra.mrb[0].mxu0 %v820
      %v2509 = vpop.f32.mrb[0].mxu0
      %v2510 = vadd.f32 %v575, %v2509
      %v2511 = vpop.f32.mrb[0].mxu0
      %v2512 = vpop.f32.mrb[0].mxu0
      %v2513 = vadd.f32 %v580, %v2512
      %v2514 = vpop.f32.mrb[0].mxu0
      %2515 = vmatprep.mubr.bf16.mxu0 0
      %2516 = vmatmul.mubr.bf16.gmra.mrb[0].mxu0 %v823
      %v2517 = vpop.f32.mrb[0].mxu0
      %v2518 = vadd.f32 %v585, %v2517
      %v2519 = vpop.f32.mrb[0].mxu0
      %v2520 = vpop.f32.mrb[0].mxu0
      %v2521 = vadd.f32 %v590, %v2520
      %v2522 = vpop.f32.mrb[0].mxu0
      %2523 = vmatprep.mubr.bf16.mxu0 0
      %2524 = vmatmul.mubr.bf16.gmra.mrb[0].mxu0 %v826
      %v2525 = vpop.f32.mrb[0].mxu0
      %v2526 = vadd.f32 %v595, %v2525
      %v2527 = vpop.f32.mrb[0].mxu0
      %v2528 = vpop.f32.mrb[0].mxu0
      %v2529 = vadd.f32 %v600, %v2528
      %v2530 = vpop.f32.mrb[0].mxu0
      %2531 = vdwg.mxu0
      %v2532 = vmin.f32 %v2502, 20.0
      %v2533 = vmin.f32 %v2505, 20.0
      %v2534 = vmin.f32 %v2510, 20.0
      %v2535 = vmin.f32 %v2513, 20.0
      %v2536 = vmin.f32 %v2518, 20.0
      %v2537 = vmin.f32 %v2521, 20.0
      %v2538 = vmin.f32 %v2526, 20.0
      %v2539 = vmin.f32 %v2529, 20.0
      %v2540 = vmul.f32 %v2532, 1.442695
      %v2541 = vpow.pop %v2540
      %v2542 = vmul.f32 %v2533, 1.442695
      %v2543 = vpow.pop %v2542
      %v2544 = vmul.f32 %v2534, 1.442695
      %v2545 = vpow.pop %v2544
      %v2546 = vmul.f32 %v2535, 1.442695
      %v2547 = vpow.pop %v2546
      %v2548 = vmul.f32 %v2536, 1.442695
      %v2549 = vpow.pop %v2548
      %v2550 = vmul.f32 %v2537, 1.442695
      %v2551 = vpow.pop %v2550
      %v2552 = vmul.f32 %v2538, 1.442695
      %v2553 = vpow.pop %v2552
      %v2554 = vmul.f32 %v2539, 1.442695
      %v2555 = vpow.pop %v2554
      %v2556 = vadd.f32 %v2541, 2.0
      %v2557 = vadd.f32 %v2543, 2.0
      %v2558 = vadd.f32 %v2545, 2.0
      %v2559 = vadd.f32 %v2547, 2.0
      %v2560 = vadd.f32 %v2549, 2.0
      %v2561 = vadd.f32 %v2551, 2.0
      %v2562 = vadd.f32 %v2553, 2.0
      %v2563 = vadd.f32 %v2555, 2.0
      %v2564 = vmul.f32 %v2541, %v2556
      %v2565 = vmul.f32 %v2543, %v2557
      %v2566 = vmul.f32 %v2545, %v2558
      %v2567 = vmul.f32 %v2547, %v2559
      %v2568 = vmul.f32 %v2549, %v2560
      %v2569 = vmul.f32 %v2551, %v2561
      %v2570 = vmul.f32 %v2553, %v2562
      %v2571 = vmul.f32 %v2555, %v2563
      %v2572 = vadd.f32 %v2564, 2.0
      %v2573 = vadd.f32 %v2565, 2.0
      %v2574 = vadd.f32 %v2566, 2.0
      %v2575 = vadd.f32 %v2567, 2.0
      %v2576 = vadd.f32 %v2568, 2.0
      %v2577 = vadd.f32 %v2569, 2.0
      %v2578 = vadd.f32 %v2570, 2.0
      %v2579 = vadd.f32 %v2571, 2.0
      %v2580 = vrcp.pop %v2572
      %v2581 = vrcp.pop %v2573
      %v2582 = vrcp.pop %v2574
      %v2583 = vrcp.pop %v2575
      %v2584 = vrcp.pop %v2576
      %v2585 = vrcp.pop %v2577
      %v2586 = vrcp.pop %v2578
      %v2587 = vrcp.pop %v2579
      %v2588 = vmul.f32 %v2564, %v2580
      %v2589 = vmul.f32 %v2565, %v2581
      %v2590 = vmul.f32 %v2566, %v2582
      %v2591 = vmul.f32 %v2567, %v2583
      %v2592 = vmul.f32 %v2568, %v2584
      %v2593 = vmul.f32 %v2569, %v2585
      %v2594 = vmul.f32 %v2570, %v2586
      %v2595 = vmul.f32 %v2571, %v2587
      %v2596 = vmul.f32 %v2502, %v2588
      %v2597 = vmul.f32 %v2505, %v2589
      %v2598 = vmul.f32 %v2510, %v2590
      %v2599 = vmul.f32 %v2513, %v2591
      %v2600 = vmul.f32 %v2518, %v2592
      %v2601 = vmul.f32 %v2521, %v2593
      %v2602 = vmul.f32 %v2526, %v2594
      %v2603 = vmul.f32 %v2529, %v2595
      %vm2604 = vcmp.gt.f32.partialorder %v2502, 20.0
      %vm2605 = vcmp.gt.f32.partialorder %v2505, 20.0
      %vm2606 = vcmp.gt.f32.partialorder %v2510, 20.0
      %vm2607 = vcmp.gt.f32.partialorder %v2513, 20.0
      %vm2608 = vcmp.gt.f32.partialorder %v2518, 20.0
      %vm2609 = vcmp.gt.f32.partialorder %v2521, 20.0
      %vm2610 = vcmp.gt.f32.partialorder %v2526, 20.0
      %vm2611 = vcmp.gt.f32.partialorder %v2529, 20.0
      %v2612 = vsel %vm2604, %v2502, %v2596
      %v2613 = vsel %vm2605, %v2505, %v2597
      %v2614 = vsel %vm2606, %v2510, %v2598
      %v2615 = vsel %vm2607, %v2513, %v2599
      %v2616 = vsel %vm2608, %v2518, %v2600
      %v2617 = vsel %vm2609, %v2521, %v2601
      %v2618 = vsel %vm2610, %v2526, %v2602
      %v2619 = vsel %vm2611, %v2529, %v2603
      %v2620 = vmax.f32 %v2289, %v2612
      %v2621 = vmax.f32 %v2290, %v2613
      %v2622 = vmax.f32 %v2291, %v2614
      %v2623 = vmax.f32 %v2292, %v2615
      %v2624 = vmax.f32 %v2293, %v2616
      %v2625 = vmax.f32 %v2294, %v2617
      %v2626 = vmax.f32 %v2295, %v2618
      %v2627 = vmax.f32 %v2296, %v2619
      %v2628 = vadd.f32 %v2297, %v2612
      %v2629 = vadd.f32 %v2298, %v2613
      %v2630 = vadd.f32 %v2299, %v2614
      %v2631 = vadd.f32 %v2300, %v2615
      %v2632 = vadd.f32 %v2301, %v2616
      %v2633 = vadd.f32 %v2302, %v2617
      %v2634 = vadd.f32 %v2303, %v2618
      %v2635 = vadd.f32 %v2304, %v2619
      %s2636 = scalar_lea.vmem %s357, 12
      %v2637 = vld [vmem:[%s2636] sm:$0x3]
      %v2639 = vsel %vm485, %v2637, 0
      %2641 = vmatprep.subr.bf16.mxu0 0
      %2642 = vmatpush1.bf16.msra.mxu0 %v2639
      %2643 = vmatprep.subr.bf16.mxu0 0
      %2644 = vmatpush1.bf16.msra.mxu0 0
      %2645 = vmatprep.subr.bf16.mxu0 0
      %2646 = vmatpush1.bf16.msra.mxu0 0
      %2647 = vmatprep.subr.bf16.mxu0 0
      %2648 = vmatpush1.bf16.msra.mxu0 0
      %2649 = vmatprep.subr.bf16.mxu0 0
      %2650 = vmatpush1.bf16.msra.mxu0 0
      %2651 = vmatprep.subr.bf16.mxu0 0
      %2652 = vmatpush1.bf16.msra.mxu0 0
      %2653 = vmatprep.subr.bf16.mxu0 0
      %2654 = vmatpush1.bf16.msra.mxu0 0
      %2655 = vmatprep.subr.bf16.mxu0 0
      %2656 = vmatpush1.bf16.msra.mxu0 0
      %2657 = vmatprep.subr.bf16.mxu0 0
      %2658 = vmatpush1.bf16.msra.mxu0 0
      %2659 = vmatprep.subr.bf16.mxu0 0
      %2660 = vmatpush1.bf16.msra.mxu0 0
      %2661 = vmatprep.subr.bf16.mxu0 0
      %2662 = vmatpush1.bf16.msra.mxu0 0
      %2663 = vmatprep.subr.bf16.mxu0 0
      %2664 = vmatpush1.bf16.msra.mxu0 0
      %2665 = vmatprep.subr.bf16.mxu0 0
      %2666 = vmatpush1.bf16.msra.mxu0 0
      %2667 = vmatprep.subr.bf16.mxu0 0
      %2668 = vmatpush1.bf16.msra.mxu0 0
      %2669 = vmatprep.subr.bf16.mxu0 0
      %2670 = vmatpush1.bf16.msra.mxu0 0
      %2671 = vmatprep.subr.bf16.mxu0 0
      %2672 = vmatpush1.bf16.msra.mxu0 0
      %2673 = vmatprep.mubr.bf16.mxu0 0
      %2674 = vmatmul.mubr.bf16.gmra.mrb[0].mxu0 %v624
      %v2675 = vpop.f32.mrb[0].mxu0
      %v2676 = vadd.f32 %v524, %v2675
      %v2677 = vpop.f32.mrb[0].mxu0
      %v2678 = vpop.f32.mrb[0].mxu0
      %v2679 = vadd.f32 %v527, %v2678
      %v2680 = vpop.f32.mrb[0].mxu0
      %2681 = vmatprep.mubr.bf16.mxu0 0
      %2682 = vmatmul.mubr.bf16.gmra.mrb[0].mxu0 %v627
      %v2683 = vpop.f32.mrb[0].mxu0
      %v2684 = vadd.f32 %v532, %v2683
      %v2685 = vpop.f32.mrb[0].mxu0
      %v2686 = vpop.f32.mrb[0].mxu0
      %v2687 = vadd.f32 %v535, %v2686
      %v2688 = vpop.f32.mrb[0].mxu0
      %2689 = vmatprep.mubr.bf16.mxu0 0
      %2690 = vmatmul.mubr.bf16.gmra.mrb[0].mxu0 %v630
      %v2691 = vpop.f32.mrb[0].mxu0
      %v2692 = vadd.f32 %v540, %v2691
      %v2693 = vpop.f32.mrb[0].mxu0
      %v2694 = vpop.f32.mrb[0].mxu0
      %v2695 = vadd.f32 %v543, %v2694
      %v2696 = vpop.f32.mrb[0].mxu0
      %2697 = vmatprep.mubr.bf16.mxu0 0
      %2698 = vmatmul.mubr.bf16.gmra.mrb[0].mxu0 %v633
      %v2699 = vpop.f32.mrb[0].mxu0
      %v2700 = vadd.f32 %v548, %v2699
      %v2701 = vpop.f32.mrb[0].mxu0
      %v2702 = vpop.f32.mrb[0].mxu0
      %v2703 = vadd.f32 %v551, %v2702
      %v2704 = vpop.f32.mrb[0].mxu0
      %2705 = vdwg.mxu0
      %v2706 = vmin.f32 %v2676, 20.0
      %v2707 = vmin.f32 %v2679, 20.0
      %v2708 = vmin.f32 %v2684, 20.0
      %v2709 = vmin.f32 %v2687, 20.0
      %v2710 = vmin.f32 %v2692, 20.0
      %v2711 = vmin.f32 %v2695, 20.0
      %v2712 = vmin.f32 %v2700, 20.0
      %v2713 = vmin.f32 %v2703, 20.0
      %v2714 = vmul.f32 %v2706, 1.442695
      %v2715 = vpow.pop %v2714
      %v2716 = vmul.f32 %v2707, 1.442695
      %v2717 = vpow.pop %v2716
      %v2718 = vmul.f32 %v2708, 1.442695
      %v2719 = vpow.pop %v2718
      %v2720 = vmul.f32 %v2709, 1.442695
      %v2721 = vpow.pop %v2720
      %v2722 = vmul.f32 %v2710, 1.442695
      %v2723 = vpow.pop %v2722
      %v2724 = vmul.f32 %v2711, 1.442695
      %v2725 = vpow.pop %v2724
      %v2726 = vmul.f32 %v2712, 1.442695
      %v2727 = vpow.pop %v2726
      %v2728 = vmul.f32 %v2713, 1.442695
      %v2729 = vpow.pop %v2728
      %v2730 = vadd.f32 %v2715, 2.0
      %v2731 = vadd.f32 %v2717, 2.0
      %v2732 = vadd.f32 %v2719, 2.0
      %v2733 = vadd.f32 %v2721, 2.0
      %v2734 = vadd.f32 %v2723, 2.0
      %v2735 = vadd.f32 %v2725, 2.0
      %v2736 = vadd.f32 %v2727, 2.0
      %v2737 = vadd.f32 %v2729, 2.0
      %v2738 = vmul.f32 %v2715, %v2730
      %v2739 = vmul.f32 %v2717, %v2731
      %v2740 = vmul.f32 %v2719, %v2732
      %v2741 = vmul.f32 %v2721, %v2733
      %v2742 = vmul.f32 %v2723, %v2734
      %v2743 = vmul.f32 %v2725, %v2735
      %v2744 = vmul.f32 %v2727, %v2736
      %v2745 = vmul.f32 %v2729, %v2737
      %v2746 = vadd.f32 %v2738, 2.0
      %v2747 = vadd.f32 %v2739, 2.0
      %v2748 = vadd.f32 %v2740, 2.0
      %v2749 = vadd.f32 %v2741, 2.0
      %v2750 = vadd.f32 %v2742, 2.0
      %v2751 = vadd.f32 %v2743, 2.0
      %v2752 = vadd.f32 %v2744, 2.0
      %v2753 = vadd.f32 %v2745, 2.0
      %v2754 = vrcp.pop %v2746
      %v2755 = vrcp.pop %v2747
      %v2756 = vrcp.pop %v2748
      %v2757 = vrcp.pop %v2749
      %v2758 = vrcp.pop %v2750
      %v2759 = vrcp.pop %v2751
      %v2760 = vrcp.pop %v2752
      %v2761 = vrcp.pop %v2753
      %v2762 = vmul.f32 %v2738, %v2754
      %v2763 = vmul.f32 %v2739, %v2755
      %v2764 = vmul.f32 %v2740, %v2756
      %v2765 = vmul.f32 %v2741, %v2757
      %v2766 = vmul.f32 %v2742, %v2758
      %v2767 = vmul.f32 %v2743, %v2759
      %v2768 = vmul.f32 %v2744, %v2760
      %v2769 = vmul.f32 %v2745, %v2761
      %v2770 = vmul.f32 %v2676, %v2762
      %v2771 = vmul.f32 %v2679, %v2763
      %v2772 = vmul.f32 %v2684, %v2764
      %v2773 = vmul.f32 %v2687, %v2765
      %v2774 = vmul.f32 %v2692, %v2766
      %v2775 = vmul.f32 %v2695, %v2767
      %v2776 = vmul.f32 %v2700, %v2768
      %v2777 = vmul.f32 %v2703, %v2769
      %vm2778 = vcmp.gt.f32.partialorder %v2676, 20.0
      %vm2779 = vcmp.gt.f32.partialorder %v2679, 20.0
      %vm2780 = vcmp.gt.f32.partialorder %v2684, 20.0
      %vm2781 = vcmp.gt.f32.partialorder %v2687, 20.0
      %vm2782 = vcmp.gt.f32.partialorder %v2692, 20.0
      %vm2783 = vcmp.gt.f32.partialorder %v2695, 20.0
      %vm2784 = vcmp.gt.f32.partialorder %v2700, 20.0
      %vm2785 = vcmp.gt.f32.partialorder %v2703, 20.0
      %v2786 = vsel %vm2778, %v2676, %v2770
      %v2787 = vsel %vm2779, %v2679, %v2771
      %v2788 = vsel %vm2780, %v2684, %v2772
      %v2789 = vsel %vm2781, %v2687, %v2773
      %v2790 = vsel %vm2782, %v2692, %v2774
      %v2791 = vsel %vm2783, %v2695, %v2775
      %v2792 = vsel %vm2784, %v2700, %v2776
      %v2793 = vsel %vm2785, %v2703, %v2777
      %v2794 = vpack.c.bf16 %v2787, %v2786
      %v2795 = vpack.c.bf16 %v2789, %v2788
      %v2796 = vpack.c.bf16 %v2791, %v2790
      %v2797 = vpack.c.bf16 %v2793, %v2792
      %2798 = vmatprep.subr.bf16.mxu0 0
      %2799 = vmatpush1.bf16.msra.mxu0 %v2794
      %2800 = vmatprep.subr.bf16.mxu0 0
      %2801 = vmatpush1.bf16.msra.mxu0 %v2795
      %2802 = vmatprep.subr.bf16.mxu0 0
      %2803 = vmatpush1.bf16.msra.mxu0 %v2796
      %2804 = vmatprep.subr.bf16.mxu0 0
      %2805 = vmatpush1.bf16.msra.mxu0 %v2797
      %2806 = vmatprep.subr.bf16.mxu0 0
      %2807 = vmatpush1.bf16.msra.mxu0 0
      %2808 = vmatprep.subr.bf16.mxu0 0
      %2809 = vmatpush1.bf16.msra.mxu0 0
      %2810 = vmatprep.subr.bf16.mxu0 0
      %2811 = vmatpush1.bf16.msra.mxu0 0
      %2812 = vmatprep.subr.bf16.mxu0 0
      %2813 = vmatpush1.bf16.msra.mxu0 0
      %2814 = vmatprep.subr.bf16.mxu0 0
      %2815 = vmatpush1.bf16.msra.mxu0 0
      %2816 = vmatprep.subr.bf16.mxu0 0
      %2817 = vmatpush1.bf16.msra.mxu0 0
      %2818 = vmatprep.subr.bf16.mxu0 0
      %2819 = vmatpush1.bf16.msra.mxu0 0
      %2820 = vmatprep.subr.bf16.mxu0 0
      %2821 = vmatpush1.bf16.msra.mxu0 0
      %2822 = vmatprep.subr.bf16.mxu0 0
      %2823 = vmatpush1.bf16.msra.mxu0 0
      %2824 = vmatprep.subr.bf16.mxu0 0
      %2825 = vmatpush1.bf16.msra.mxu0 0
      %2826 = vmatprep.subr.bf16.mxu0 0
      %2827 = vmatpush1.bf16.msra.mxu0 0
      %2828 = vmatprep.subr.bf16.mxu0 0
      %2829 = vmatpush1.bf16.msra.mxu0 0
      %2830 = vmatprep.mubr.bf16.mxu0 0
      %2831 = vmatmul.mubr.bf16.gmra.mrb[0].mxu0 %v817
      %v2832 = vpop.f32.mrb[0].mxu0
      %v2833 = vadd.f32 %v565, %v2832
      %v2834 = vpop.f32.mrb[0].mxu0
      %v2835 = vpop.f32.mrb[0].mxu0
      %v2836 = vadd.f32 %v570, %v2835
      %v2837 = vpop.f32.mrb[0].mxu0
      %2838 = vmatprep.mubr.bf16.mxu0 0
      %2839 = vmatmul.mubr.bf16.gmra.mrb[0].mxu0 %v820
      %v2840 = vpop.f32.mrb[0].mxu0
      %v2841 = vadd.f32 %v575, %v2840
      %v2842 = vpop.f32.mrb[0].mxu0
      %v2843 = vpop.f32.mrb[0].mxu0
      %v2844 = vadd.f32 %v580, %v2843
      %v2845 = vpop.f32.mrb[0].mxu0
      %2846 = vmatprep.mubr.bf16.mxu0 0
      %2847 = vmatmul.mubr.bf16.gmra.mrb[0].mxu0 %v823
      %v2848 = vpop.f32.mrb[0].mxu0
      %v2849 = vadd.f32 %v585, %v2848
      %v2850 = vpop.f32.mrb[0].mxu0
      %v2851 = vpop.f32.mrb[0].mxu0
      %v2852 = vadd.f32 %v590, %v2851
      %v2853 = vpop.f32.mrb[0].mxu0
      %2854 = vmatprep.mubr.bf16.mxu0 0
      %2855 = vmatmul.mubr.bf16.gmra.mrb[0].mxu0 %v826
      %v2856 = vpop.f32.mrb[0].mxu0
      %v2857 = vadd.f32 %v595, %v2856
      %v2858 = vpop.f32.mrb[0].mxu0
      %v2859 = vpop.f32.mrb[0].mxu0
      %v2860 = vadd.f32 %v600, %v2859
      %v2861 = vpop.f32.mrb[0].mxu0
      %2862 = vdwg.mxu0
      %v2863 = vmin.f32 %v2833, 20.0
      %v2864 = vmin.f32 %v2836, 20.0
      %v2865 = vmin.f32 %v2841, 20.0
      %v2866 = vmin.f32 %v2844, 20.0
      %v2867 = vmin.f32 %v2849, 20.0
      %v2868 = vmin.f32 %v2852, 20.0
      %v2869 = vmin.f32 %v2857, 20.0
      %v2870 = vmin.f32 %v2860, 20.0
      %v2871 = vmul.f32 %v2863, 1.442695
      %v2872 = vpow.pop %v2871
      %v2873 = vmul.f32 %v2864, 1.442695
      %v2874 = vpow.pop %v2873
      %v2875 = vmul.f32 %v2865, 1.442695
      %v2876 = vpow.pop %v2875
      %v2877 = vmul.f32 %v2866, 1.442695
      %v2878 = vpow.pop %v2877
      %v2879 = vmul.f32 %v2867, 1.442695
      %v2880 = vpow.pop %v2879
      %v2881 = vmul.f32 %v2868, 1.442695
      %v2882 = vpow.pop %v2881
      %v2883 = vmul.f32 %v2869, 1.442695
      %v2884 = vpow.pop %v2883
      %v2885 = vmul.f32 %v2870, 1.442695
      %v2886 = vpow.pop %v2885
      %v2887 = vadd.f32 %v2872, 2.0
      %v2888 = vadd.f32 %v2874, 2.0
      %v2889 = vadd.f32 %v2876, 2.0
      %v2890 = vadd.f32 %v2878, 2.0
      %v2891 = vadd.f32 %v2880, 2.0
      %v2892 = vadd.f32 %v2882, 2.0
      %v2893 = vadd.f32 %v2884, 2.0
      %v2894 = vadd.f32 %v2886, 2.0
      %v2895 = vmul.f32 %v2872, %v2887
      %v2896 = vmul.f32 %v2874, %v2888
      %v2897 = vmul.f32 %v2876, %v2889
      %v2898 = vmul.f32 %v2878, %v2890
      %v2899 = vmul.f32 %v2880, %v2891
      %v2900 = vmul.f32 %v2882, %v2892
      %v2901 = vmul.f32 %v2884, %v2893
      %v2902 = vmul.f32 %v2886, %v2894
      %v2903 = vadd.f32 %v2895, 2.0
      %v2904 = vadd.f32 %v2896, 2.0
      %v2905 = vadd.f32 %v2897, 2.0
      %v2906 = vadd.f32 %v2898, 2.0
      %v2907 = vadd.f32 %v2899, 2.0
      %v2908 = vadd.f32 %v2900, 2.0
      %v2909 = vadd.f32 %v2901, 2.0
      %v2910 = vadd.f32 %v2902, 2.0
      %v2911 = vrcp.pop %v2903
      %v2912 = vrcp.pop %v2904
      %v2913 = vrcp.pop %v2905
      %v2914 = vrcp.pop %v2906
      %v2915 = vrcp.pop %v2907
      %v2916 = vrcp.pop %v2908
      %v2917 = vrcp.pop %v2909
      %v2918 = vrcp.pop %v2910
      %v2919 = vmul.f32 %v2895, %v2911
      %v2920 = vmul.f32 %v2896, %v2912
      %v2921 = vmul.f32 %v2897, %v2913
      %v2922 = vmul.f32 %v2898, %v2914
      %v2923 = vmul.f32 %v2899, %v2915
      %v2924 = vmul.f32 %v2900, %v2916
      %v2925 = vmul.f32 %v2901, %v2917
      %v2926 = vmul.f32 %v2902, %v2918
      %v2927 = vmul.f32 %v2833, %v2919
      %v2928 = vmul.f32 %v2836, %v2920
      %v2929 = vmul.f32 %v2841, %v2921
      %v2930 = vmul.f32 %v2844, %v2922
      %v2931 = vmul.f32 %v2849, %v2923
      %v2932 = vmul.f32 %v2852, %v2924
      %v2933 = vmul.f32 %v2857, %v2925
      %v2934 = vmul.f32 %v2860, %v2926
      %vm2935 = vcmp.gt.f32.partialorder %v2833, 20.0
      %vm2936 = vcmp.gt.f32.partialorder %v2836, 20.0
      %vm2937 = vcmp.gt.f32.partialorder %v2841, 20.0
      %vm2938 = vcmp.gt.f32.partialorder %v2844, 20.0
      %vm2939 = vcmp.gt.f32.partialorder %v2849, 20.0
      %vm2940 = vcmp.gt.f32.partialorder %v2852, 20.0
      %vm2941 = vcmp.gt.f32.partialorder %v2857, 20.0
      %vm2942 = vcmp.gt.f32.partialorder %v2860, 20.0
      %v2943 = vsel %vm2935, %v2833, %v2927
      %v2944 = vsel %vm2936, %v2836, %v2928
      %v2945 = vsel %vm2937, %v2841, %v2929
      %v2946 = vsel %vm2938, %v2844, %v2930
      %v2947 = vsel %vm2939, %v2849, %v2931
      %v2948 = vsel %vm2940, %v2852, %v2932
      %v2949 = vsel %vm2941, %v2857, %v2933
      %v2950 = vsel %vm2942, %v2860, %v2934
      %v2951 = vmax.f32 %v2620, %v2943
      %v2952 = vmax.f32 %v2621, %v2944
      %v2953 = vmax.f32 %v2622, %v2945
      %v2954 = vmax.f32 %v2623, %v2946
      %v2955 = vmax.f32 %v2624, %v2947
      %v2956 = vmax.f32 %v2625, %v2948
      %v2957 = vmax.f32 %v2626, %v2949
      %v2958 = vmax.f32 %v2627, %v2950
      %v2959 = vadd.f32 %v2628, %v2943
      %v2960 = vadd.f32 %v2629, %v2944
      %v2961 = vadd.f32 %v2630, %v2945
      %v2962 = vadd.f32 %v2631, %v2946
      %v2963 = vadd.f32 %v2632, %v2947
      %v2964 = vadd.f32 %v2633, %v2948
      %v2965 = vadd.f32 %v2634, %v2949
      %v2966 = vadd.f32 %v2635, %v2950
      %s2967 = scalar_lea.vmem %s357, 14
      %v2968 = vld [vmem:[%s2967] sm:$0x3]
      %v2970 = vsel %vm485, %v2968, 0
      %2972 = vmatprep.subr.bf16.mxu0 0
      %2973 = vmatpush1.bf16.msra.mxu0 %v2970
      %2974 = vmatprep.subr.bf16.mxu0 0
      %2975 = vmatpush1.bf16.msra.mxu0 0
      %2976 = vmatprep.subr.bf16.mxu0 0
      %2977 = vmatpush1.bf16.msra.mxu0 0
      %2978 = vmatprep.subr.bf16.mxu0 0
      %2979 = vmatpush1.bf16.msra.mxu0 0
      %2980 = vmatprep.subr.bf16.mxu0 0
      %2981 = vmatpush1.bf16.msra.mxu0 0
      %2982 = vmatprep.subr.bf16.mxu0 0
      %2983 = vmatpush1.bf16.msra.mxu0 0
      %2984 = vmatprep.subr.bf16.mxu0 0
      %2985 = vmatpush1.bf16.msra.mxu0 0
      %2986 = vmatprep.subr.bf16.mxu0 0
      %2987 = vmatpush1.bf16.msra.mxu0 0
      %2988 = vmatprep.subr.bf16.mxu0 0
      %2989 = vmatpush1.bf16.msra.mxu0 0
      %2990 = vmatprep.subr.bf16.mxu0 0
      %2991 = vmatpush1.bf16.msra.mxu0 0
      %2992 = vmatprep.subr.bf16.mxu0 0
      %2993 = vmatpush1.bf16.msra.mxu0 0
      %2994 = vmatprep.subr.bf16.mxu0 0
      %2995 = vmatpush1.bf16.msra.mxu0 0
      %2996 = vmatprep.subr.bf16.mxu0 0
      %2997 = vmatpush1.bf16.msra.mxu0 0
      %2998 = vmatprep.subr.bf16.mxu0 0
      %2999 = vmatpush1.bf16.msra.mxu0 0
      %3000 = vmatprep.subr.bf16.mxu0 0
      %3001 = vmatpush1.bf16.msra.mxu0 0
      %3002 = vmatprep.subr.bf16.mxu0 0
      %3003 = vmatpush1.bf16.msra.mxu0 0
      %3004 = vmatprep.mubr.bf16.mxu0 0
      %3005 = vmatmul.mubr.bf16.gmra.mrb[0].mxu0 %v624
      %v3006 = vpop.f32.mrb[0].mxu0
      %v3007 = vadd.f32 %v524, %v3006
      %v3008 = vpop.f32.mrb[0].mxu0
      %v3009 = vpop.f32.mrb[0].mxu0
      %v3010 = vadd.f32 %v527, %v3009
      %v3011 = vpop.f32.mrb[0].mxu0
      %3012 = vmatprep.mubr.bf16.mxu0 0
      %3013 = vmatmul.mubr.bf16.gmra.mrb[0].mxu0 %v627
      %v3014 = vpop.f32.mrb[0].mxu0
      %v3015 = vadd.f32 %v532, %v3014
      %v3016 = vpop.f32.mrb[0].mxu0
      %v3017 = vpop.f32.mrb[0].mxu0
      %v3018 = vadd.f32 %v535, %v3017
      %v3019 = vpop.f32.mrb[0].mxu0
      %3020 = vmatprep.mubr.bf16.mxu0 0
      %3021 = vmatmul.mubr.bf16.gmra.mrb[0].mxu0 %v630
      %v3022 = vpop.f32.mrb[0].mxu0
      %v3023 = vadd.f32 %v540, %v3022
      %v3024 = vpop.f32.mrb[0].mxu0
      %v3025 = vpop.f32.mrb[0].mxu0
      %v3026 = vadd.f32 %v543, %v3025
      %v3027 = vpop.f32.mrb[0].mxu0
      %3028 = vmatprep.mubr.bf16.mxu0 0
      %3029 = vmatmul.mubr.bf16.gmra.mrb[0].mxu0 %v633
      %v3030 = vpop.f32.mrb[0].mxu0
      %v3031 = vadd.f32 %v548, %v3030
      %v3032 = vpop.f32.mrb[0].mxu0
      %v3033 = vpop.f32.mrb[0].mxu0
      %v3034 = vadd.f32 %v551, %v3033
      %v3035 = vpop.f32.mrb[0].mxu0
      %3036 = vdwg.mxu0
      %v3037 = vmin.f32 %v3007, 20.0
      %v3038 = vmin.f32 %v3010, 20.0
      %v3039 = vmin.f32 %v3015, 20.0
      %v3040 = vmin.f32 %v3018, 20.0
      %v3041 = vmin.f32 %v3023, 20.0
      %v3042 = vmin.f32 %v3026, 20.0
      %v3043 = vmin.f32 %v3031, 20.0
      %v3044 = vmin.f32 %v3034, 20.0
      %v3045 = vmul.f32 %v3037, 1.442695
      %v3046 = vpow.pop %v3045
      %v3047 = vmul.f32 %v3038, 1.442695
      %v3048 = vpow.pop %v3047
      %v3049 = vmul.f32 %v3039, 1.442695
      %v3050 = vpow.pop %v3049
      %v3051 = vmul.f32 %v3040, 1.442695
      %v3052 = vpow.pop %v3051
      %v3053 = vmul.f32 %v3041, 1.442695
      %v3054 = vpow.pop %v3053
      %v3055 = vmul.f32 %v3042, 1.442695
      %v3056 = vpow.pop %v3055
      %v3057 = vmul.f32 %v3043, 1.442695
      %v3058 = vpow.pop %v3057
      %v3059 = vmul.f32 %v3044, 1.442695
      %v3060 = vpow.pop %v3059
      %v3061 = vadd.f32 %v3046, 2.0
      %v3062 = vadd.f32 %v3048, 2.0
      %v3063 = vadd.f32 %v3050, 2.0
      %v3064 = vadd.f32 %v3052, 2.0
      %v3065 = vadd.f32 %v3054, 2.0
      %v3066 = vadd.f32 %v3056, 2.0
      %v3067 = vadd.f32 %v3058, 2.0
      %v3068 = vadd.f32 %v3060, 2.0
      %v3069 = vmul.f32 %v3046, %v3061
      %v3070 = vmul.f32 %v3048, %v3062
      %v3071 = vmul.f32 %v3050, %v3063
      %v3072 = vmul.f32 %v3052, %v3064
      %v3073 = vmul.f32 %v3054, %v3065
      %v3074 = vmul.f32 %v3056, %v3066
      %v3075 = vmul.f32 %v3058, %v3067
      %v3076 = vmul.f32 %v3060, %v3068
      %v3077 = vadd.f32 %v3069, 2.0
      %v3078 = vadd.f32 %v3070, 2.0
      %v3079 = vadd.f32 %v3071, 2.0
      %v3080 = vadd.f32 %v3072, 2.0
      %v3081 = vadd.f32 %v3073, 2.0
      %v3082 = vadd.f32 %v3074, 2.0
      %v3083 = vadd.f32 %v3075, 2.0
      %v3084 = vadd.f32 %v3076, 2.0
      %v3085 = vrcp.pop %v3077
      %v3086 = vrcp.pop %v3078
      %v3087 = vrcp.pop %v3079
      %v3088 = vrcp.pop %v3080
      %v3089 = vrcp.pop %v3081
      %v3090 = vrcp.pop %v3082
      %v3091 = vrcp.pop %v3083
      %v3092 = vrcp.pop %v3084
      %v3093 = vmul.f32 %v3069, %v3085
      %v3094 = vmul.f32 %v3070, %v3086
      %v3095 = vmul.f32 %v3071, %v3087
      %v3096 = vmul.f32 %v3072, %v3088
      %v3097 = vmul.f32 %v3073, %v3089
      %v3098 = vmul.f32 %v3074, %v3090
      %v3099 = vmul.f32 %v3075, %v3091
      %v3100 = vmul.f32 %v3076, %v3092
      %v3101 = vmul.f32 %v3007, %v3093
      %v3102 = vmul.f32 %v3010, %v3094
      %v3103 = vmul.f32 %v3015, %v3095
      %v3104 = vmul.f32 %v3018, %v3096
      %v3105 = vmul.f32 %v3023, %v3097
      %v3106 = vmul.f32 %v3026, %v3098
      %v3107 = vmul.f32 %v3031, %v3099
      %v3108 = vmul.f32 %v3034, %v3100
      %vm3109 = vcmp.gt.f32.partialorder %v3007, 20.0
      %vm3110 = vcmp.gt.f32.partialorder %v3010, 20.0
      %vm3111 = vcmp.gt.f32.partialorder %v3015, 20.0
      %vm3112 = vcmp.gt.f32.partialorder %v3018, 20.0
      %vm3113 = vcmp.gt.f32.partialorder %v3023, 20.0
      %vm3114 = vcmp.gt.f32.partialorder %v3026, 20.0
      %vm3115 = vcmp.gt.f32.partialorder %v3031, 20.0
      %vm3116 = vcmp.gt.f32.partialorder %v3034, 20.0
      %v3117 = vsel %vm3109, %v3007, %v3101
      %v3118 = vsel %vm3110, %v3010, %v3102
      %v3119 = vsel %vm3111, %v3015, %v3103
      %v3120 = vsel %vm3112, %v3018, %v3104
      %v3121 = vsel %vm3113, %v3023, %v3105
      %v3122 = vsel %vm3114, %v3026, %v3106
      %v3123 = vsel %vm3115, %v3031, %v3107
      %v3124 = vsel %vm3116, %v3034, %v3108
      %v3125 = vpack.c.bf16 %v3118, %v3117
      %v3126 = vpack.c.bf16 %v3120, %v3119
      %v3127 = vpack.c.bf16 %v3122, %v3121
      %v3128 = vpack.c.bf16 %v3124, %v3123
      %3129 = vmatprep.subr.bf16.mxu0 0
      %3130 = vmatpush1.bf16.msra.mxu0 %v3125
      %3131 = vmatprep.subr.bf16.mxu0 0
      %3132 = vmatpush1.bf16.msra.mxu0 %v3126
      %3133 = vmatprep.subr.bf16.mxu0 0
      %3134 = vmatpush1.bf16.msra.mxu0 %v3127
      %3135 = vmatprep.subr.bf16.mxu0 0
      %3136 = vmatpush1.bf16.msra.mxu0 %v3128
      %3137 = vmatprep.subr.bf16.mxu0 0
      %3138 = vmatpush1.bf16.msra.mxu0 0
      %3139 = vmatprep.subr.bf16.mxu0 0
      %3140 = vmatpush1.bf16.msra.mxu0 0
      %3141 = vmatprep.subr.bf16.mxu0 0
      %3142 = vmatpush1.bf16.msra.mxu0 0
      %3143 = vmatprep.subr.bf16.mxu0 0
      %3144 = vmatpush1.bf16.msra.mxu0 0
      %3145 = vmatprep.subr.bf16.mxu0 0
      %3146 = vmatpush1.bf16.msra.mxu0 0
      %3147 = vmatprep.subr.bf16.mxu0 0
      %3148 = vmatpush1.bf16.msra.mxu0 0
      %3149 = vmatprep.subr.bf16.mxu0 0
      %3150 = vmatpush1.bf16.msra.mxu0 0
      %3151 = vmatprep.subr.bf16.mxu0 0
      %3152 = vmatpush1.bf16.msra.mxu0 0
      %3153 = vmatprep.subr.bf16.mxu0 0
      %3154 = vmatpush1.bf16.msra.mxu0 0
      %3155 = vmatprep.subr.bf16.mxu0 0
      %3156 = vmatpush1.bf16.msra.mxu0 0
      %3157 = vmatprep.subr.bf16.mxu0 0
      %3158 = vmatpush1.bf16.msra.mxu0 0
      %3159 = vmatprep.subr.bf16.mxu0 0
      %3160 = vmatpush1.bf16.msra.mxu0 0
      %3161 = vmatprep.mubr.bf16.mxu0 0
      %3162 = vmatmul.mubr.bf16.gmra.mrb[0].mxu0 %v817
      %v3163 = vpop.f32.mrb[0].mxu0
      %v3164 = vadd.f32 %v565, %v3163
      %v3165 = vpop.f32.mrb[0].mxu0
      %v3166 = vpop.f32.mrb[0].mxu0
      %v3167 = vadd.f32 %v570, %v3166
      %v3168 = vpop.f32.mrb[0].mxu0
      %3169 = vmatprep.mubr.bf16.mxu0 0
      %3170 = vmatmul.mubr.bf16.gmra.mrb[0].mxu0 %v820
      %v3171 = vpop.f32.mrb[0].mxu0
      %v3172 = vadd.f32 %v575, %v3171
      %v3173 = vpop.f32.mrb[0].mxu0
      %v3174 = vpop.f32.mrb[0].mxu0
      %v3175 = vadd.f32 %v580, %v3174
      %v3176 = vpop.f32.mrb[0].mxu0
      %3177 = vmatprep.mubr.bf16.mxu0 0
      %3178 = vmatmul.mubr.bf16.gmra.mrb[0].mxu0 %v823
      %v3179 = vpop.f32.mrb[0].mxu0
      %v3180 = vadd.f32 %v585, %v3179
      %v3181 = vpop.f32.mrb[0].mxu0
      %v3182 = vpop.f32.mrb[0].mxu0
      %v3183 = vadd.f32 %v590, %v3182
      %v3184 = vpop.f32.mrb[0].mxu0
      %3185 = vmatprep.mubr.bf16.mxu0 0
      %3186 = vmatmul.mubr.bf16.gmra.mrb[0].mxu0 %v826
      %v3187 = vpop.f32.mrb[0].mxu0
      %v3188 = vadd.f32 %v595, %v3187
      %v3189 = vpop.f32.mrb[0].mxu0
      %v3190 = vpop.f32.mrb[0].mxu0
      %v3191 = vadd.f32 %v600, %v3190
      %v3192 = vpop.f32.mrb[0].mxu0
      %3193 = vdwg.mxu0
      %v3194 = vmin.f32 %v3164, 20.0
      %v3195 = vmin.f32 %v3167, 20.0
      %v3196 = vmin.f32 %v3172, 20.0
      %v3197 = vmin.f32 %v3175, 20.0
      %v3198 = vmin.f32 %v3180, 20.0
      %v3199 = vmin.f32 %v3183, 20.0
      %v3200 = vmin.f32 %v3188, 20.0
      %v3201 = vmin.f32 %v3191, 20.0
      %v3202 = vmul.f32 %v3194, 1.442695
      %v3203 = vpow.pop %v3202
      %v3204 = vmul.f32 %v3195, 1.442695
      %v3205 = vpow.pop %v3204
      %v3206 = vmul.f32 %v3196, 1.442695
      %v3207 = vpow.pop %v3206
      %v3208 = vmul.f32 %v3197, 1.442695
      %v3209 = vpow.pop %v3208
      %v3210 = vmul.f32 %v3198, 1.442695
      %v3211 = vpow.pop %v3210
      %v3212 = vmul.f32 %v3199, 1.442695
      %v3213 = vpow.pop %v3212
      %v3214 = vmul.f32 %v3200, 1.442695
      %v3215 = vpow.pop %v3214
      %v3216 = vmul.f32 %v3201, 1.442695
      %v3217 = vpow.pop %v3216
      %v3218 = vadd.f32 %v3203, 2.0
      %v3219 = vadd.f32 %v3205, 2.0
      %v3220 = vadd.f32 %v3207, 2.0
      %v3221 = vadd.f32 %v3209, 2.0
      %v3222 = vadd.f32 %v3211, 2.0
      %v3223 = vadd.f32 %v3213, 2.0
      %v3224 = vadd.f32 %v3215, 2.0
      %v3225 = vadd.f32 %v3217, 2.0
      %v3226 = vmul.f32 %v3203, %v3218
      %v3227 = vmul.f32 %v3205, %v3219
      %v3228 = vmul.f32 %v3207, %v3220
      %v3229 = vmul.f32 %v3209, %v3221
      %v3230 = vmul.f32 %v3211, %v3222
      %v3231 = vmul.f32 %v3213, %v3223
      %v3232 = vmul.f32 %v3215, %v3224
      %v3233 = vmul.f32 %v3217, %v3225
      %v3234 = vadd.f32 %v3226, 2.0
      %v3235 = vadd.f32 %v3227, 2.0
      %v3236 = vadd.f32 %v3228, 2.0
      %v3237 = vadd.f32 %v3229, 2.0
      %v3238 = vadd.f32 %v3230, 2.0
      %v3239 = vadd.f32 %v3231, 2.0
      %v3240 = vadd.f32 %v3232, 2.0
      %v3241 = vadd.f32 %v3233, 2.0
      %v3242 = vrcp.pop %v3234
      %v3243 = vrcp.pop %v3235
      %v3244 = vrcp.pop %v3236
      %v3245 = vrcp.pop %v3237
      %v3246 = vrcp.pop %v3238
      %v3247 = vrcp.pop %v3239
      %v3248 = vrcp.pop %v3240
      %v3249 = vrcp.pop %v3241
      %v3250 = vmul.f32 %v3226, %v3242
      %v3251 = vmul.f32 %v3227, %v3243
      %v3252 = vmul.f32 %v3228, %v3244
      %v3253 = vmul.f32 %v3229, %v3245
      %v3254 = vmul.f32 %v3230, %v3246
      %v3255 = vmul.f32 %v3231, %v3247
      %v3256 = vmul.f32 %v3232, %v3248
      %v3257 = vmul.f32 %v3233, %v3249
      %v3258 = vmul.f32 %v3164, %v3250
      %v3259 = vmul.f32 %v3167, %v3251
      %v3260 = vmul.f32 %v3172, %v3252
      %v3261 = vmul.f32 %v3175, %v3253
      %v3262 = vmul.f32 %v3180, %v3254
      %v3263 = vmul.f32 %v3183, %v3255
      %v3264 = vmul.f32 %v3188, %v3256
      %v3265 = vmul.f32 %v3191, %v3257
      %vm3266 = vcmp.gt.f32.partialorder %v3164, 20.0
      %vm3267 = vcmp.gt.f32.partialorder %v3167, 20.0
      %vm3268 = vcmp.gt.f32.partialorder %v3172, 20.0
      %vm3269 = vcmp.gt.f32.partialorder %v3175, 20.0
      %vm3270 = vcmp.gt.f32.partialorder %v3180, 20.0
      %vm3271 = vcmp.gt.f32.partialorder %v3183, 20.0
      %vm3272 = vcmp.gt.f32.partialorder %v3188, 20.0
      %vm3273 = vcmp.gt.f32.partialorder %v3191, 20.0
      %v3274 = vsel %vm3266, %v3164, %v3258
      %v3275 = vsel %vm3267, %v3167, %v3259
      %v3276 = vsel %vm3268, %v3172, %v3260
      %v3277 = vsel %vm3269, %v3175, %v3261
      %v3278 = vsel %vm3270, %v3180, %v3262
      %v3279 = vsel %vm3271, %v3183, %v3263
      %v3280 = vsel %vm3272, %v3188, %v3264
      %v3281 = vsel %vm3273, %v3191, %v3265
      %v3282 = vmax.f32 %v2951, %v3274
      %v3283 = vmax.f32 %v2952, %v3275
      %v3284 = vmax.f32 %v2953, %v3276
      %v3285 = vmax.f32 %v2954, %v3277
      %v3286 = vmax.f32 %v2955, %v3278
      %v3287 = vmax.f32 %v2956, %v3279
      %v3288 = vmax.f32 %v2957, %v3280
      %v3289 = vmax.f32 %v2958, %v3281
      %v3290 = vadd.f32 %v2959, %v3274
      %v3291 = vadd.f32 %v2960, %v3275
      %v3292 = vadd.f32 %v2961, %v3276
      %v3293 = vadd.f32 %v2962, %v3277
      %v3294 = vadd.f32 %v2963, %v3278
      %v3295 = vadd.f32 %v2964, %v3279
      %v3296 = vadd.f32 %v2965, %v3280
      %v3297 = vadd.f32 %v2966, %v3281
      %vm3298 = vcmask 130048
      %3299 = vst.msk [vmem:[%s372] sm:$0xff] %vm3298, %v3282
      %3300 = vst.msk [vmem:[%s372 + $0x8] sm:$0xff] %vm3298, %v3283
      %3301 = vst.msk [vmem:[%s372 + $0x10] sm:$0xff] %vm3298, %v3284
      %3302 = vst.msk [vmem:[%s372 + $0x18] sm:$0xff] %vm3298, %v3285
      %3303 = vst.msk [vmem:[%s372 + $0x20] sm:$0xff] %vm3298, %v3286
      %3304 = vst.msk [vmem:[%s372 + $0x28] sm:$0xff] %vm3298, %v3287
      %3305 = vst.msk [vmem:[%s372 + $0x30] sm:$0xff] %vm3298, %v3288
      %3306 = vst.msk [vmem:[%s372 + $0x38] sm:$0xff] %vm3298, %v3289
      %p3307 = scmp.eq.s32.totalorder %s25, 0
      // Predicated region
      $region49: #{edgeconv_forward.1} parent=47 // pred_check
        %p3308 = pneg %p3307
      $region50: #{edgeconv_forward.1} parent=47 // pred_check_branch
        %3310 = sbr.rel (%p3308) target = $region52
      $region51: #{edgeconv_forward.1} parent=47 // pred_region
        %vm3311 = vcmask 7168
        %3312 = vst.msk [vmem:[%s377] sm:$0xff] %vm3311, 0.0
        %3313 = vst.msk [vmem:[%s377 + $0x8] sm:$0xff] %vm3311, 0.0
        %3314 = vst.msk [vmem:[%s377 + $0x10] sm:$0xff] %vm3311, 0.0
        %3315 = vst.msk [vmem:[%s377 + $0x18] sm:$0xff] %vm3311, 0.0
        %3316 = vst.msk [vmem:[%s377 + $0x20] sm:$0xff] %vm3311, 0.0
        %3317 = vst.msk [vmem:[%s377 + $0x28] sm:$0xff] %vm3311, 0.0
        %3318 = vst.msk [vmem:[%s377 + $0x30] sm:$0xff] %vm3311, 0.0
        %3319 = vst.msk [vmem:[%s377 + $0x38] sm:$0xff] %vm3311, 0.0
      $region52: #{edgeconv_forward.1} parent=47 // pred_fallthru
        _
      %v3320 = vld [vmem:[%s377] sm:$0xff]
      %v3321 = vld [vmem:[%s377 + $0x8] sm:$0xff]
      %v3322 = vld [vmem:[%s377 + $0x10] sm:$0xff]
      %v3323 = vld [vmem:[%s377 + $0x18] sm:$0xff]
      %v3324 = vld [vmem:[%s377 + $0x20] sm:$0xff]
      %v3325 = vld [vmem:[%s377 + $0x28] sm:$0xff]
      %v3326 = vld [vmem:[%s377 + $0x30] sm:$0xff]
      %v3327 = vld [vmem:[%s377 + $0x38] sm:$0xff]
      %v3328 = vsel %vm3298, %v3290, 0.0
      %3329 = vadd.xlane.f32.xlu0 %v3328
      %v3330 = vpop.xlane.xlu0 %3329
      %v3331 = vsel %vm3298, %v3291, 0.0
      %3332 = vadd.xlane.f32.xlu0 %v3331
      %v3333 = vpop.xlane.xlu0 %3332
      %v3334 = vsel %vm3298, %v3292, 0.0
      %3335 = vadd.xlane.f32.xlu0 %v3334
      %v3336 = vpop.xlane.xlu0 %3335
      %v3337 = vsel %vm3298, %v3293, 0.0
      %3338 = vadd.xlane.f32.xlu0 %v3337
      %v3339 = vpop.xlane.xlu0 %3338
      %v3340 = vsel %vm3298, %v3294, 0.0
      %3341 = vadd.xlane.f32.xlu0 %v3340
      %v3342 = vpop.xlane.xlu0 %3341
      %v3343 = vsel %vm3298, %v3295, 0.0
      %3344 = vadd.xlane.f32.xlu0 %v3343
      %v3345 = vpop.xlane.xlu0 %3344
      %v3346 = vsel %vm3298, %v3296, 0.0
      %3347 = vadd.xlane.f32.xlu0 %v3346
      %v3348 = vpop.xlane.xlu0 %3347
      %v3349 = vsel %vm3298, %v3297, 0.0
      %3350 = vadd.xlane.f32.xlu0 %v3349
      %v3351 = vpop.xlane.xlu0 %3350
      %v3352 = vadd.f32 %v3320, %v3330
      %v3353 = vadd.f32 %v3321, %v3333
      %v3354 = vadd.f32 %v3322, %v3336
      %v3355 = vadd.f32 %v3323, %v3339
      %v3356 = vadd.f32 %v3324, %v3342
      %v3357 = vadd.f32 %v3325, %v3345
      %v3358 = vadd.f32 %v3326, %v3348
      %v3359 = vadd.f32 %v3327, %v3351
      %vm3360 = vcmask 7168
      %3361 = vst.msk [vmem:[%s377] sm:$0xff] %vm3360, %v3352
      %3362 = vst.msk [vmem:[%s377 + $0x8] sm:$0xff] %vm3360, %v3353
      %3363 = vst.msk [vmem:[%s377 + $0x10] sm:$0xff] %vm3360, %v3354
      %3364 = vst.msk [vmem:[%s377 + $0x18] sm:$0xff] %vm3360, %v3355
      %3365 = vst.msk [vmem:[%s377 + $0x20] sm:$0xff] %vm3360, %v3356
      %3366 = vst.msk [vmem:[%s377 + $0x28] sm:$0xff] %vm3360, %v3357
      %3367 = vst.msk [vmem:[%s377 + $0x30] sm:$0xff] %vm3360, %v3358
      %3368 = vst.msk [vmem:[%s377 + $0x38] sm:$0xff] %vm3360, %v3359
      %p3369 = scmp.lt.s32.totalorder %s24, 1
      %s3370 = scalar_select %p3369, %s24, 1
      %p3371 = scmp.lt.s32.totalorder %s25, 0
      %s3372 = scalar_select %p3371, %s25, 0
      %s3373 = smul.addr %s3370, 8
      %s3374 = sadd.s32 %s3372, %s3373
      %s3375 = smul.addr %s3374, 8
      %s3376 = scalar_lea.vmem %s7, %s3375
      %p3377 = scmp.lt.s32.totalorder %s24, 1
      %s3378 = scalar_select %p3377, %s24, 1
      %s3379 = smul.addr %s3378, 8
      %s3380 = smul.addr %s3379, 8
      %s3381 = scalar_lea.vmem %s8, %s3380
      // Predicated region
      $region53: #{edgeconv_forward.1} parent=47 // pred_check
        %p3382 = pneg %p213
      $region54: #{edgeconv_forward.1} parent=47 // pred_check_branch
        %3384 = sbr.rel (%p3382) target = $region56
      $region55: #{edgeconv_forward.1} parent=47 // pred_region
        _
      $region56: #{edgeconv_forward.1} parent=47 // pred_fallthru
        _
      // Predicated region
      $region57: #{edgeconv_forward.1} parent=47 // pred_check
        %p3385 = pneg %p239
      $region58: #{edgeconv_forward.1} parent=47 // pred_check_branch
        %3387 = sbr.rel (%p3385) target = $region60
      $region59: #{edgeconv_forward.1} parent=47 // pred_region
        _
      $region60: #{edgeconv_forward.1} parent=47 // pred_fallthru
        _
    $region48: #{edgeconv_forward.1} parent=5 // pred_fallthru
      _
    %p3388 = scmp.le.s32.totalorder 2, %s15
    // Predicated region
    $region61: #{edgeconv_forward.1} parent=5 // pred_check
      %p3389 = pneg %p3388
    $region62: #{edgeconv_forward.1} parent=5 // pred_check_branch
      %3391 = sbr.rel (%p3389) target = $region64
    $region63: #{edgeconv_forward.1} parent=5 // pred_region
      %s3392 = ssub.s32 %s15, 2
      // Predicated region
      $region65: #{edgeconv_forward.1} parent=63 // pred_check
        %p3393 = pneg %p219
      $region66: #{edgeconv_forward.1} parent=63 // pred_check_branch
        %3395 = sbr.rel (%p3393) target = $region68
      $region67: #{edgeconv_forward.1} parent=63 // pred_region
        %p3396 = scmp.lt.s32.totalorder %s26, 1
        %s3397 = scalar_select %p3396, %s26, 1
        %p3398 = scmp.lt.s32.totalorder %s27, 0
        %s3399 = scalar_select %p3398, %s27, 0
        %s3400 = smul.addr %s3397, 8
        %s3401 = sadd.s32 %s3399, %s3400
        %s3402 = smul.addr %s3401, 8
        %s3403 = scalar_lea.vmem %s7, %s3402
      $region68: #{edgeconv_forward.1} parent=63 // pred_fallthru
        _
      // Predicated region
      $region69: #{edgeconv_forward.1} parent=63 // pred_check
        %p3404 = pneg %p245
      $region70: #{edgeconv_forward.1} parent=63 // pred_check_branch
        %3406 = sbr.rel (%p3404) target = $region72
      $region71: #{edgeconv_forward.1} parent=63 // pred_region
        %p3407 = scmp.lt.s32.totalorder %s26, 1
        %s3408 = scalar_select %p3407, %s26, 1
        %s3409 = smul.addr %s3408, 8
        %s3410 = smul.addr %s3409, 8
        %s3411 = scalar_lea.vmem %s8, %s3410
      $region72: #{edgeconv_forward.1} parent=63 // pred_fallthru
        _
    $region64: #{edgeconv_forward.1} parent=5 // pred_fallthru
      _
  $region6: #{edgeconv_forward.1} parent=0 // loop_footer
    %s19 = sadd.s32 1, %s15
  $region7: #{edgeconv_forward.1} parent=0 // loop_footer_branch
    %14 = sbr.rel target = $region3
  $region8: #{edgeconv_forward.1} parent=0 // loop_exit
    _

</llo_original>
